<compile_context>
chip_gen: v7x
topology: tpu7x:2x2x1
jax: 0.10.0
libtpu: 0.0.40
codegen_flags: <defaults>
</compile_context>

<pallas_src>
import functools
import math

import numpy as np

import jax
import jax.numpy as jnp
from jax.experimental import pallas as pl
from jax.experimental.pallas import tpu as pltpu

D_MODEL = 32
N_HEADS = 4
N_LAYERS = 2
LN_EPS = 1e-5      # PyTorch nn.LayerNorm default
ATTN_EPS = 1e-6    # linear-attention denominator epsilon


# ----------------------------- packed slab layout ----------------------------

def _c32_layout(n_layers, d, bt):
    """Row offsets into the (R, d) packed constant slab (pure Python ints)."""
    off = {}
    r = 0
    off["pe"] = r;        r += bt          # positional encoding, (bt, d)
    off["head_mask"] = r; r += d           # block-diagonal head mask, (d, d)
    off["mat"] = r                         # per-layer: wq,wk,wv,wo (d rows each) + w2 (4d rows)
    off["per_layer_mat"] = 8 * d
    r += n_layers * off["per_layer_mat"]
    off["final_ln"] = r;  r += 2           # final LN gamma, beta (1 row each)
    off["vec"] = r                         # per-layer: ln0_g,ln0_b,ln1_g,ln1_b,bq,bk,bv,bo,b2
    off["per_layer_vec"] = 9
    r += n_layers * off["per_layer_vec"]
    off["rows"] = r
    return off


# ----------------------------- in-kernel helpers -----------------------------

def _layernorm(x, g, b):
    mu = jnp.mean(x, axis=-1, keepdims=True)
    xc = x - mu
    var = jnp.mean(xc * xc, axis=-1, keepdims=True)
    return xc * jax.lax.rsqrt(var + LN_EPS) * g + b


def _elu_plus_one(u):
    # elu(u) + 1; clamp the exp argument so the unselected branch never overflows.
    return jnp.where(u > 0, u + 1.0, jnp.exp(jnp.minimum(u, 0.0)))


# -------------------------------- fused kernel --------------------------------

def fused_encoder_kernel(x_ref, c32_ref, c128_ref, o_ref, attn_sc,
                         *, n_layers, n_batch, seq_len, scale):
    """Entire forward pass; activations stay a flat (B*T, D) VMEM-resident matrix."""
    bt, d = x_ref.shape
    off = _c32_layout(n_layers, d, bt)

    pe = c32_ref[off["pe"]:off["pe"] + bt, :]                       # (BT, D)
    head_mask = c32_ref[off["head_mask"]:off["head_mask"] + d, :]   # (D, D)

    # Embedding scale + positional encoding (dropout_embedding: identity in eval).
    x = x_ref[...] * scale + pe

    for l in range(n_layers):                                       # static unroll
        mb = off["mat"] + l * off["per_layer_mat"]
        vb = off["vec"] + l * off["per_layer_vec"]

        wq = c32_ref[mb + 0 * d: mb + 1 * d, :]
        wk = c32_ref[mb + 1 * d: mb + 2 * d, :]
        wv = c32_ref[mb + 2 * d: mb + 3 * d, :]
        wo = c32_ref[mb + 3 * d: mb + 4 * d, :]
        w2 = c32_ref[mb + 4 * d: mb + 8 * d, :]
        ln0_g = c32_ref[vb + 0: vb + 1, :]
        ln0_b = c32_ref[vb + 1: vb + 2, :]
        ln1_g = c32_ref[vb + 2: vb + 3, :]
        ln1_b = c32_ref[vb + 3: vb + 4, :]
        bq = c32_ref[vb + 4: vb + 5, :]
        bk = c32_ref[vb + 5: vb + 6, :]
        bv = c32_ref[vb + 6: vb + 7, :]
        bo = c32_ref[vb + 7: vb + 8, :]
        b2 = c32_ref[vb + 8: vb + 9, :]
        w1 = c128_ref[l * d:(l + 1) * d, :]                         # (D, 4D)
        b1 = c128_ref[n_layers * d + l: n_layers * d + l + 1, :]    # (1, 4D)

        # ---------------- linear self-attention block ----------------
        residual = x
        xn = _layernorm(x, ln0_g, ln0_b)                            # layer_norms[0]
        # Separate (16,32)x(32,32) matmuls: no lane slicing of a fused QKV output.
        q = jnp.dot(xn, wq, preferred_element_type=jnp.float32) + bq
        k = jnp.dot(xn, wk, preferred_element_type=jnp.float32) + bk
        v = jnp.dot(xn, wv, preferred_element_type=jnp.float32) + bv
        qf = _elu_plus_one(q)
        kf = _elu_plus_one(k)

        for b in range(n_batch):                                    # static, B is tiny
            rows = slice(b * seq_len, (b + 1) * seq_len)            # 8-row aligned block
            qb, kb, vbl = qf[rows], kf[rows], v[rows]
            # K^T V contraction over time without materializing a transpose.
            kv = jax.lax.dot_general(kb, vbl, (((0,), (0,)), ((), ())),
                                     preferred_element_type=jnp.float32)   # (D, D)
            kv = kv * head_mask                                     # block-diagonal heads
            num = jnp.dot(qb, kv, preferred_element_type=jnp.float32)      # (T, D)
            ksum = jnp.sum(kb, axis=0, keepdims=True)                       # (1, D)
            den = jnp.dot(qb * ksum, head_mask,
                          preferred_element_type=jnp.float32)       # per-head denominators
            # Sublane-aligned row store into VMEM scratch (no concatenate).
            attn_sc[rows, :] = num / (den + ATTN_EPS)               # exact division

        attn = attn_sc[...]                                         # (BT, D)
        attn = jnp.dot(attn, wo, preferred_element_type=jnp.float32) + bo
        x = residual + attn                                         # dropout_residual: identity

        # ---------------- position-wise feed-forward block ----------------
        residual = x
        xn = _layernorm(x, ln1_g, ln1_b)                            # layer_norms[1]
        h = jnp.dot(xn, w1, preferred_element_type=jnp.float32) + b1
        h = jnp.maximum(h, 0.0)                                     # relu (dropout: identity)
        x = residual + jnp.dot(h, w2, preferred_element_type=jnp.float32) + b2

    # Final LayerNorm.
    fg = c32_ref[off["final_ln"] + 0: off["final_ln"] + 1, :]
    fb = c32_ref[off["final_ln"] + 1: off["final_ln"] + 2, :]
    o_ref[...] = _layernorm(x, fg, fb)


# ---------------------------------- wrapper -----------------------------------

def _positional_encoding(seq_len, d):
    """Sinusoidal PE, shape (seq_len, d). Rebuilt per pack (no device-pinned cache)."""
    pos = np.arange(seq_len, dtype=np.float32)[:, None]
    div = np.exp(np.arange(0, d, 2, dtype=np.float32) * (-math.log(10000.0) / d))
    pe = np.zeros((seq_len, d), np.float32)
    pe[:, 0::2] = np.sin(pos * div)
    pe[:, 1::2] = np.cos(pos * div)
    return jnp.asarray(pe)


def pack_params(params, batch, seq_len):
    """Pack all constants into two contiguous f32 slabs (done once, on host)."""
    n_layers, d, _ = params["wq"].shape
    bt = batch * seq_len
    dh = d // N_HEADS

    rows32 = []
    rows32.append(jnp.tile(_positional_encoding(seq_len, d), (batch, 1)))       # PE (BT, D)
    hm = (np.arange(d)[:, None] // dh == np.arange(d)[None, :] // dh)
    rows32.append(jnp.asarray(hm.astype(np.float32)))                           # head mask
    for l in range(n_layers):
        rows32 += [params["wq"][l], params["wk"][l], params["wv"][l],
                   params["wo"][l], params["w2"][l]]
    rows32 += [params["final_ln_g"], params["final_ln_b"]]
    for l in range(n_layers):
        rows32 += [params["ln0_g"][l], params["ln0_b"][l],
                   params["ln1_g"][l], params["ln1_b"][l],
                   params["bq"][l], params["bk"][l], params["bv"][l],
                   params["bo"][l], params["b2"][l]]
    c32 = jnp.concatenate(rows32, axis=0)

    rows128 = [params["w1"][l] for l in range(n_layers)]
    rows128 += [params["b1"][l] for l in range(n_layers)]
    c128 = jnp.concatenate(rows128, axis=0)

    assert c32.shape == (_c32_layout(n_layers, d, bt)["rows"], d)
    return {"c32": c32, "c128": c128, "n_layers": n_layers,
            "batch": batch, "seq_len": seq_len}


def transformer_encoder(x_q, packed):
    """Self-attention TransformerEncoder forward (inference, no masks)."""
    # TODO(synk): query/key masks and the cross-modal (x_k, x_v) path are not implemented.
    b, t, d = x_q.shape
    assert b == packed["batch"] and t == packed["seq_len"]
    x2d = x_q.reshape(b * t, d).astype(jnp.float32)

    out = pl.pallas_call(
        functools.partial(fused_encoder_kernel,
                          n_layers=packed["n_layers"], n_batch=b, seq_len=t,
                          scale=float(math.sqrt(d))),
        out_shape=jax.ShapeDtypeStruct((b * t, d), jnp.float32),
        in_specs=[pl.BlockSpec(memory_space=pltpu.MemorySpace.VMEM)] * 3,
        out_specs=pl.BlockSpec(memory_space=pltpu.MemorySpace.VMEM),
        scratch_shapes=[pltpu.VMEM((b * t, d), jnp.float32)],
    )(x2d, packed["c32"], packed["c128"])
    return out.reshape(b, t, d)


# ------------------------------- parameter init --------------------------------

def init_params(key):
    def linear(k, fan_in, fan_out):
        k1, k2 = jax.random.split(k)
        bound = 1.0 / math.sqrt(fan_in)
        w = jax.random.uniform(k1, (fan_in, fan_out), jnp.float32, -bound, bound)
        bias = jax.random.uniform(k2, (1, fan_out), jnp.float32, -bound, bound)
        return w, bias

    names = ["ln0_g", "ln0_b", "ln1_g", "ln1_b",
             "wq", "bq", "wk", "bk", "wv", "bv", "wo", "bo",
             "w1", "b1", "w2", "b2"]
    lists = {n: [] for n in names}
    for _ in range(N_LAYERS):
        key, kq, kk, kvk, ko, k1, k2 = jax.random.split(key, 7)
        wq, bq = linear(kq, D_MODEL, D_MODEL)
        wk, bk = linear(kk, D_MODEL, D_MODEL)
        wv, bv = linear(kvk, D_MODEL, D_MODEL)
        wo, bo = linear(ko, D_MODEL, D_MODEL)
        w1, b1 = linear(k1, D_MODEL, 4 * D_MODEL)
        w2, b2 = linear(k2, 4 * D_MODEL, D_MODEL)
        lists["ln0_g"].append(jnp.ones((1, D_MODEL), jnp.float32))
        lists["ln0_b"].append(jnp.zeros((1, D_MODEL), jnp.float32))
        lists["ln1_g"].append(jnp.ones((1, D_MODEL), jnp.float32))
        lists["ln1_b"].append(jnp.zeros((1, D_MODEL), jnp.float32))
        lists["wq"].append(wq); lists["bq"].append(bq)
        lists["wk"].append(wk); lists["bk"].append(bk)
        lists["wv"].append(wv); lists["bv"].append(bv)
        lists["wo"].append(wo); lists["bo"].append(bo)
        lists["w1"].append(w1); lists["b1"].append(b1)
        lists["w2"].append(w2); lists["b2"].append(b2)

    params = {n: jnp.stack(v, axis=0) for n, v in lists.items()}
    params["final_ln_g"] = jnp.ones((1, D_MODEL), jnp.float32)
    params["final_ln_b"] = jnp.zeros((1, D_MODEL), jnp.float32)
    return params


# ----------------------------- pure-JAX reference -------------------------------

def transformer_encoder_ref(x_q, params):
    """Same math as the kernel; used for a numerical sanity check."""
    b, t, d = x_q.shape
    dh = d // N_HEADS
    pe = _positional_encoding(t, d)
    x = math.sqrt(d) * x_q + pe[None, :, :]

    def layernorm(y, g, beta):
        mu = y.mean(-1, keepdims=True)
        var = ((y - mu) ** 2).mean(-1, keepdims=True)
        return (y - mu) / jnp.sqrt(var + LN_EPS) * g + beta

    def feat(u):
        return jnp.where(u > 0, u + 1.0, jnp.exp(jnp.minimum(u, 0.0)))

    for l in range(params["wq"].shape[0]):
        residual = x
        xn = layernorm(x, params["ln0_g"][l], params["ln0_b"][l])
        q = xn @ params["wq"][l] + params["bq"][l]
        k = xn @ params["wk"][l] + params["bk"][l]
        v = xn @ params["wv"][l] + params["bv"][l]
        qh = feat(q).reshape(b, t, N_HEADS, dh)
        kh = feat(k).reshape(b, t, N_HEADS, dh)
        vh = v.reshape(b, t, N_HEADS, dh)
        kv = jnp.einsum("bthk,bthv->bhkv", kh, vh)
        ksum = kh.sum(axis=1)                                    # (b, h, dh)
        den = jnp.einsum("bthk,bhk->bth", qh, ksum) + ATTN_EPS
        num = jnp.einsum("bthk,bhkv->bthv", qh, kv)
        attn = (num / den[..., None]).reshape(b, t, d)
        attn = attn @ params["wo"][l] + params["bo"][l]
        x = residual + attn
        residual = x
        xn = layernorm(x, params["ln1_g"][l], params["ln1_b"][l])
        h = jnp.maximum(xn @ params["w1"][l] + params["b1"][l], 0.0)
        x = residual + h @ params["w2"][l] + params["b2"][l]
    return layernorm(x, params["final_ln_g"], params["final_ln_b"])


# ------------------------------------ main --------------------------------------

if __name__ == "__main__":
    B, T = 2, 8
    key = jax.random.PRNGKey(0)
    k_x, k_p = jax.random.split(key)
    x_q = jax.random.normal(k_x, (B, T, D_MODEL), jnp.float32)
    params = init_params(k_p)
    packed = pack_params(params, B, T)

    out = jax.block_until_ready(transformer_encoder(x_q, packed))
    assert out.shape == (B, T, D_MODEL), out.shape
    assert bool(jnp.all(jnp.isfinite(out)))

    ref = transformer_encoder_ref(x_q, params)
    max_err = float(jnp.max(jnp.abs(out - ref)))
    assert max_err < 1e-3, f"mismatch vs pure-JAX reference: {max_err}"

    print("KERNEL_OK")
</pallas_src>

<mosaic_0001>
module attributes {stable_mosaic.version = 11 : i64} {
  func.func @fused_encoder_kernel(%arg0: memref<16x32xf32, #tpu.memory_space<vmem>>, %arg1: memref<580x32xf32, #tpu.memory_space<vmem>>, %arg2: memref<66x128xf32, #tpu.memory_space<vmem>>, %arg3: memref<16x32xf32, #tpu.memory_space<vmem>>, %arg4: memref<16x32xf32, #tpu.memory_space<vmem>>) attributes {dimension_semantics = [], scalar_prefetch = 0 : i64, scratch_operands = 1 : i64, tpu.core_type = #tpu.core_type<tc>} {
    %c0 = arith.constant 0 : index
    %c0_0 = arith.constant 0 : index
    %0 = vector.load %arg1[%c0, %c0_0] : memref<580x32xf32, #tpu.memory_space<vmem>>, vector<16x32xf32>
    %c16 = arith.constant 16 : index
    %c0_1 = arith.constant 0 : index
    %1 = vector.load %arg1[%c16, %c0_1] : memref<580x32xf32, #tpu.memory_space<vmem>>, vector<32x32xf32>
    %c0_2 = arith.constant 0 : index
    %c0_3 = arith.constant 0 : index
    %2 = vector.load %arg0[%c0_2, %c0_3] : memref<16x32xf32, #tpu.memory_space<vmem>>, vector<16x32xf32>
    %cst = arith.constant 5.65685415 : f32
    %3 = vector.broadcast %cst : f32 to vector<16x32xf32>
    %4 = arith.mulf %2, %3 : vector<16x32xf32>
    %5 = arith.addf %4, %0 : vector<16x32xf32>
    %c48 = arith.constant 48 : index
    %c0_4 = arith.constant 0 : index
    %6 = vector.load %arg1[%c48, %c0_4] : memref<580x32xf32, #tpu.memory_space<vmem>>, vector<32x32xf32>
    %c80 = arith.constant 80 : index
    %c0_5 = arith.constant 0 : index
    %7 = vector.load %arg1[%c80, %c0_5] : memref<580x32xf32, #tpu.memory_space<vmem>>, vector<32x32xf32>
    %c112 = arith.constant 112 : index
    %c0_6 = arith.constant 0 : index
    %8 = vector.load %arg1[%c112, %c0_6] : memref<580x32xf32, #tpu.memory_space<vmem>>, vector<32x32xf32>
    %c144 = arith.constant 144 : index
    %c0_7 = arith.constant 0 : index
    %9 = vector.load %arg1[%c144, %c0_7] : memref<580x32xf32, #tpu.memory_space<vmem>>, vector<32x32xf32>
    %c176 = arith.constant 176 : index
    %c0_8 = arith.constant 0 : index
    %10 = vector.load %arg1[%c176, %c0_8] : memref<580x32xf32, #tpu.memory_space<vmem>>, vector<128x32xf32>
    %c562 = arith.constant 562 : index
    %c0_9 = arith.constant 0 : index
    %11 = vector.load %arg1[%c562, %c0_9] : memref<580x32xf32, #tpu.memory_space<vmem>>, vector<1x32xf32>
    %c563 = arith.constant 563 : index
    %c0_10 = arith.constant 0 : index
    %12 = vector.load %arg1[%c563, %c0_10] : memref<580x32xf32, #tpu.memory_space<vmem>>, vector<1x32xf32>
    %c564 = arith.constant 564 : index
    %c0_11 = arith.constant 0 : index
    %13 = vector.load %arg1[%c564, %c0_11] : memref<580x32xf32, #tpu.memory_space<vmem>>, vector<1x32xf32>
    %c565 = arith.constant 565 : index
    %c0_12 = arith.constant 0 : index
    %14 = vector.load %arg1[%c565, %c0_12] : memref<580x32xf32, #tpu.memory_space<vmem>>, vector<1x32xf32>
    %c566 = arith.constant 566 : index
    %c0_13 = arith.constant 0 : index
    %15 = vector.load %arg1[%c566, %c0_13] : memref<580x32xf32, #tpu.memory_space<vmem>>, vector<1x32xf32>
    %c567 = arith.constant 567 : index
    %c0_14 = arith.constant 0 : index
    %16 = vector.load %arg1[%c567, %c0_14] : memref<580x32xf32, #tpu.memory_space<vmem>>, vector<1x32xf32>
    %c568 = arith.constant 568 : index
    %c0_15 = arith.constant 0 : index
    %17 = vector.load %arg1[%c568, %c0_15] : memref<580x32xf32, #tpu.memory_space<vmem>>, vector<1x32xf32>
    %c569 = arith.constant 569 : index
    %c0_16 = arith.constant 0 : index
    %18 = vector.load %arg1[%c569, %c0_16] : memref<580x32xf32, #tpu.memory_space<vmem>>, vector<1x32xf32>
    %c570 = arith.constant 570 : index
    %c0_17 = arith.constant 0 : index
    %19 = vector.load %arg1[%c570, %c0_17] : memref<580x32xf32, #tpu.memory_space<vmem>>, vector<1x32xf32>
    %c0_18 = arith.constant 0 : index
    %c0_19 = arith.constant 0 : index
    %20 = vector.load %arg2[%c0_18, %c0_19] : memref<66x128xf32, #tpu.memory_space<vmem>>, vector<32x128xf32>
    %c64 = arith.constant 64 : index
    %c0_20 = arith.constant 0 : index
    %21 = vector.load %arg2[%c64, %c0_20] : memref<66x128xf32, #tpu.memory_space<vmem>>, vector<1x128xf32>
    %cst_21 = arith.constant dense<0.000000e+00> : vector<16xf32>
    %22 = vector.multi_reduction <add>, %5, %cst_21 [1] : vector<16x32xf32> to vector<16xf32>
    %23 = vector.shape_cast %22 : vector<16xf32> to vector<16x1xf32>
    %cst_22 = arith.constant 3.200000e+01 : f32
    %24 = vector.broadcast %cst_22 : f32 to vector<16x1xf32>
    %25 = arith.divf %23, %24 : vector<16x1xf32>
    %26 = vector.broadcast %25 : vector<16x1xf32> to vector<16x32xf32>
    %27 = arith.subf %5, %26 : vector<16x32xf32>
    %28 = arith.mulf %27, %27 : vector<16x32xf32>
    %cst_23 = arith.constant dense<0.000000e+00> : vector<16xf32>
    %29 = vector.multi_reduction <add>, %28, %cst_23 [1] : vector<16x32xf32> to vector<16xf32>
    %30 = vector.shape_cast %29 : vector<16xf32> to vector<16x1xf32>
    %cst_24 = arith.constant 3.200000e+01 : f32
    %31 = vector.broadcast %cst_24 : f32 to vector<16x1xf32>
    %32 = arith.divf %30, %31 : vector<16x1xf32>
    %cst_25 = arith.constant 9.99999974E-6 : f32
    %33 = vector.broadcast %cst_25 : f32 to vector<16x1xf32>
    %34 = arith.addf %32, %33 : vector<16x1xf32>
    %35 = math.rsqrt %34 : vector<16x1xf32>
    %36 = vector.broadcast %35 : vector<16x1xf32> to vector<16x32xf32>
    %37 = arith.mulf %27, %36 : vector<16x32xf32>
    %38 = vector.broadcast %11 : vector<1x32xf32> to vector<16x32xf32>
    %39 = arith.mulf %37, %38 : vector<16x32xf32>
    %40 = vector.broadcast %12 : vector<1x32xf32> to vector<16x32xf32>
    %41 = arith.addf %39, %40 : vector<16x32xf32>
    %cst_26 = arith.constant dense<0.000000e+00> : vector<16x32xf32>
    %42 = tpu.matmul %41, %6, %cst_26 {dimension_numbers = #tpu.dot_dimension_numbers<[1], [0], [0], [1], [0, 0, 1, 1], [], []>} : vector<16x32xf32>, vector<32x32xf32>, vector<16x32xf32> -> vector<16x32xf32>
    %43 = vector.broadcast %15 : vector<1x32xf32> to vector<16x32xf32>
    %44 = arith.addf %42, %43 : vector<16x32xf32>
    %cst_27 = arith.constant dense<0.000000e+00> : vector<16x32xf32>
    %45 = tpu.matmul %41, %7, %cst_27 {dimension_numbers = #tpu.dot_dimension_numbers<[1], [0], [0], [1], [0, 0, 1, 1], [], []>} : vector<16x32xf32>, vector<32x32xf32>, vector<16x32xf32> -> vector<16x32xf32>
    %46 = vector.broadcast %16 : vector<1x32xf32> to vector<16x32xf32>
    %47 = arith.addf %45, %46 : vector<16x32xf32>
    %cst_28 = arith.constant dense<0.000000e+00> : vector<16x32xf32>
    %48 = tpu.matmul %41, %8, %cst_28 {dimension_numbers = #tpu.dot_dimension_numbers<[1], [0], [0], [1], [0, 0, 1, 1], [], []>} : vector<16x32xf32>, vector<32x32xf32>, vector<16x32xf32> -> vector<16x32xf32>
    %49 = vector.broadcast %17 : vector<1x32xf32> to vector<16x32xf32>
    %50 = arith.addf %48, %49 : vector<16x32xf32>
    %cst_29 = arith.constant 0.000000e+00 : f32
    %51 = vector.broadcast %cst_29 : f32 to vector<16x32xf32>
    %52 = arith.cmpf ogt, %44, %51 : vector<16x32xf32>
    %cst_30 = arith.constant 1.000000e+00 : f32
    %53 = vector.broadcast %cst_30 : f32 to vector<16x32xf32>
    %54 = arith.addf %44, %53 : vector<16x32xf32>
    %cst_31 = arith.constant 0.000000e+00 : f32
    %55 = vector.broadcast %cst_31 : f32 to vector<16x32xf32>
    %56 = arith.minimumf %44, %55 : vector<16x32xf32>
    %57 = math.exp %56 : vector<16x32xf32>
    %58 = arith.select %52, %54, %57 : vector<16x32xi1>, vector<16x32xf32>
    %cst_32 = arith.constant 0.000000e+00 : f32
    %59 = vector.broadcast %cst_32 : f32 to vector<16x32xf32>
    %60 = arith.cmpf ogt, %47, %59 : vector<16x32xf32>
    %cst_33 = arith.constant 1.000000e+00 : f32
    %61 = vector.broadcast %cst_33 : f32 to vector<16x32xf32>
    %62 = arith.addf %47, %61 : vector<16x32xf32>
    %cst_34 = arith.constant 0.000000e+00 : f32
    %63 = vector.broadcast %cst_34 : f32 to vector<16x32xf32>
    %64 = arith.minimumf %47, %63 : vector<16x32xf32>
    %65 = math.exp %64 : vector<16x32xf32>
    %66 = arith.select %60, %62, %65 : vector<16x32xi1>, vector<16x32xf32>
    %67 = vector.extract_strided_slice %58 {offsets = [0, 0], sizes = [8, 32], strides = [1, 1]} : vector<16x32xf32> to vector<8x32xf32>
    %68 = vector.extract_strided_slice %66 {offsets = [0, 0], sizes = [8, 32], strides = [1, 1]} : vector<16x32xf32> to vector<8x32xf32>
    %69 = vector.extract_strided_slice %50 {offsets = [0, 0], sizes = [8, 32], strides = [1, 1]} : vector<16x32xf32> to vector<8x32xf32>
    %cst_35 = arith.constant dense<0.000000e+00> : vector<32x32xf32>
    %70 = tpu.matmul %68, %69, %cst_35 {dimension_numbers = #tpu.dot_dimension_numbers<[0], [0], [1], [1], [0, 1, 1, 1], [], []>} : vector<8x32xf32>, vector<8x32xf32>, vector<32x32xf32> -> vector<32x32xf32>
    %71 = arith.mulf %70, %1 : vector<32x32xf32>
    %cst_36 = arith.constant dense<0.000000e+00> : vector<8x32xf32>
    %72 = tpu.matmul %67, %71, %cst_36 {dimension_numbers = #tpu.dot_dimension_numbers<[1], [0], [0], [1], [0, 0, 1, 1], [], []>} : vector<8x32xf32>, vector<32x32xf32>, vector<8x32xf32> -> vector<8x32xf32>
    %cst_37 = arith.constant dense<0.000000e+00> : vector<32xf32>
    %73 = vector.multi_reduction <add>, %68, %cst_37 [0] : vector<8x32xf32> to vector<32xf32>
    %74 = vector.shape_cast %73 : vector<32xf32> to vector<1x32xf32>
    %75 = vector.broadcast %74 : vector<1x32xf32> to vector<8x32xf32>
    %76 = arith.mulf %67, %75 : vector<8x32xf32>
    %cst_38 = arith.constant dense<0.000000e+00> : vector<8x32xf32>
    %77 = tpu.matmul %76, %1, %cst_38 {dimension_numbers = #tpu.dot_dimension_numbers<[1], [0], [0], [1], [0, 0, 1, 1], [], []>} : vector<8x32xf32>, vector<32x32xf32>, vector<8x32xf32> -> vector<8x32xf32>
    %cst_39 = arith.constant 9.99999997E-7 : f32
    %78 = vector.broadcast %cst_39 : f32 to vector<8x32xf32>
    %79 = arith.addf %77, %78 : vector<8x32xf32>
    %80 = arith.divf %72, %79 : vector<8x32xf32>
    %c0_40 = arith.constant 0 : index
    %c0_41 = arith.constant 0 : index
    %81 = vector.load %arg4[%c0_40, %c0_41] : memref<16x32xf32, #tpu.memory_space<vmem>>, vector<8x32xf32>
    tpu.vector_store %arg4[%c0_40, %c0_41], %80 {strides = array<i32>} : memref<16x32xf32, #tpu.memory_space<vmem>>, vector<8x32xf32>,
    %82 = vector.extract_strided_slice %58 {offsets = [8, 0], sizes = [8, 32], strides = [1, 1]} : vector<16x32xf32> to vector<8x32xf32>
    %83 = vector.extract_strided_slice %66 {offsets = [8, 0], sizes = [8, 32], strides = [1, 1]} : vector<16x32xf32> to vector<8x32xf32>
    %84 = vector.extract_strided_slice %50 {offsets = [8, 0], sizes = [8, 32], strides = [1, 1]} : vector<16x32xf32> to vector<8x32xf32>
    %cst_42 = arith.constant dense<0.000000e+00> : vector<32x32xf32>
    %85 = tpu.matmul %83, %84, %cst_42 {dimension_numbers = #tpu.dot_dimension_numbers<[0], [0], [1], [1], [0, 1, 1, 1], [], []>} : vector<8x32xf32>, vector<8x32xf32>, vector<32x32xf32> -> vector<32x32xf32>
    %86 = arith.mulf %85, %1 : vector<32x32xf32>
    %cst_43 = arith.constant dense<0.000000e+00> : vector<8x32xf32>
    %87 = tpu.matmul %82, %86, %cst_43 {dimension_numbers = #tpu.dot_dimension_numbers<[1], [0], [0], [1], [0, 0, 1, 1], [], []>} : vector<8x32xf32>, vector<32x32xf32>, vector<8x32xf32> -> vector<8x32xf32>
    %cst_44 = arith.constant dense<0.000000e+00> : vector<32xf32>
    %88 = vector.multi_reduction <add>, %83, %cst_44 [0] : vector<8x32xf32> to vector<32xf32>
    %89 = vector.shape_cast %88 : vector<32xf32> to vector<1x32xf32>
    %90 = vector.broadcast %89 : vector<1x32xf32> to vector<8x32xf32>
    %91 = arith.mulf %82, %90 : vector<8x32xf32>
    %cst_45 = arith.constant dense<0.000000e+00> : vector<8x32xf32>
    %92 = tpu.matmul %91, %1, %cst_45 {dimension_numbers = #tpu.dot_dimension_numbers<[1], [0], [0], [1], [0, 0, 1, 1], [], []>} : vector<8x32xf32>, vector<32x32xf32>, vector<8x32xf32> -> vector<8x32xf32>
    %cst_46 = arith.constant 9.99999997E-7 : f32
    %93 = vector.broadcast %cst_46 : f32 to vector<8x32xf32>
    %94 = arith.addf %92, %93 : vector<8x32xf32>
    %95 = arith.divf %87, %94 : vector<8x32xf32>
    %c8 = arith.constant 8 : index
    %c0_47 = arith.constant 0 : index
    %96 = vector.load %arg4[%c8, %c0_47] : memref<16x32xf32, #tpu.memory_space<vmem>>, vector<8x32xf32>
    tpu.vector_store %arg4[%c8, %c0_47], %95 {strides = array<i32>} : memref<16x32xf32, #tpu.memory_space<vmem>>, vector<8x32xf32>,
    %c0_48 = arith.constant 0 : index
    %c0_49 = arith.constant 0 : index
    %97 = vector.load %arg4[%c0_48, %c0_49] : memref<16x32xf32, #tpu.memory_space<vmem>>, vector<16x32xf32>
    %cst_50 = arith.constant dense<0.000000e+00> : vector<16x32xf32>
    %98 = tpu.matmul %97, %9, %cst_50 {dimension_numbers = #tpu.dot_dimension_numbers<[1], [0], [0], [1], [0, 0, 1, 1], [], []>} : vector<16x32xf32>, vector<32x32xf32>, vector<16x32xf32> -> vector<16x32xf32>
    %99 = vector.broadcast %18 : vector<1x32xf32> to vector<16x32xf32>
    %100 = arith.addf %98, %99 : vector<16x32xf32>
    %101 = arith.addf %5, %100 : vector<16x32xf32>
    %cst_51 = arith.constant dense<0.000000e+00> : vector<16xf32>
    %102 = vector.multi_reduction <add>, %101, %cst_51 [1] : vector<16x32xf32> to vector<16xf32>
    %103 = vector.shape_cast %102 : vector<16xf32> to vector<16x1xf32>
    %cst_52 = arith.constant 3.200000e+01 : f32
    %104 = vector.broadcast %cst_52 : f32 to vector<16x1xf32>
    %105 = arith.divf %103, %104 : vector<16x1xf32>
    %106 = vector.broadcast %105 : vector<16x1xf32> to vector<16x32xf32>
    %107 = arith.subf %101, %106 : vector<16x32xf32>
    %108 = arith.mulf %107, %107 : vector<16x32xf32>
    %cst_53 = arith.constant dense<0.000000e+00> : vector<16xf32>
    %109 = vector.multi_reduction <add>, %108, %cst_53 [1] : vector<16x32xf32> to vector<16xf32>
    %110 = vector.shape_cast %109 : vector<16xf32> to vector<16x1xf32>
    %cst_54 = arith.constant 3.200000e+01 : f32
    %111 = vector.broadcast %cst_54 : f32 to vector<16x1xf32>
    %112 = arith.divf %110, %111 : vector<16x1xf32>
    %cst_55 = arith.constant 9.99999974E-6 : f32
    %113 = vector.broadcast %cst_55 : f32 to vector<16x1xf32>
    %114 = arith.addf %112, %113 : vector<16x1xf32>
    %115 = math.rsqrt %114 : vector<16x1xf32>
    %116 = vector.broadcast %115 : vector<16x1xf32> to vector<16x32xf32>
    %117 = arith.mulf %107, %116 : vector<16x32xf32>
    %118 = vector.broadcast %13 : vector<1x32xf32> to vector<16x32xf32>
    %119 = arith.mulf %117, %118 : vector<16x32xf32>
    %120 = vector.broadcast %14 : vector<1x32xf32> to vector<16x32xf32>
    %121 = arith.addf %119, %120 : vector<16x32xf32>
    %cst_56 = arith.constant dense<0.000000e+00> : vector<16x128xf32>
    %122 = tpu.matmul %121, %20, %cst_56 {dimension_numbers = #tpu.dot_dimension_numbers<[1], [0], [0], [1], [0, 0, 1, 1], [], []>} : vector<16x32xf32>, vector<32x128xf32>, vector<16x128xf32> -> vector<16x128xf32>
    %123 = vector.broadcast %21 : vector<1x128xf32> to vector<16x128xf32>
    %124 = arith.addf %122, %123 : vector<16x128xf32>
    %cst_57 = arith.constant 0.000000e+00 : f32
    %125 = vector.broadcast %cst_57 : f32 to vector<16x128xf32>
    %126 = arith.maximumf %124, %125 : vector<16x128xf32>
    %cst_58 = arith.constant dense<0.000000e+00> : vector<16x32xf32>
    %127 = tpu.matmul %126, %10, %cst_58 {dimension_numbers = #tpu.dot_dimension_numbers<[1], [0], [0], [1], [0, 0, 1, 1], [], []>} : vector<16x128xf32>, vector<128x32xf32>, vector<16x32xf32> -> vector<16x32xf32>
    %128 = arith.addf %101, %127 : vector<16x32xf32>
    %129 = vector.broadcast %19 : vector<1x32xf32> to vector<16x32xf32>
    %130 = arith.addf %128, %129 : vector<16x32xf32>
    %c304 = arith.constant 304 : index
    %c0_59 = arith.constant 0 : index
    %131 = vector.load %arg1[%c304, %c0_59] : memref<580x32xf32, #tpu.memory_space<vmem>>, vector<32x32xf32>
    %c336 = arith.constant 336 : index
    %c0_60 = arith.constant 0 : index
    %132 = vector.load %arg1[%c336, %c0_60] : memref<580x32xf32, #tpu.memory_space<vmem>>, vector<32x32xf32>
    %c368 = arith.constant 368 : index
    %c0_61 = arith.constant 0 : index
    %133 = vector.load %arg1[%c368, %c0_61] : memref<580x32xf32, #tpu.memory_space<vmem>>, vector<32x32xf32>
    %c400 = arith.constant 400 : index
    %c0_62 = arith.constant 0 : index
    %134 = vector.load %arg1[%c400, %c0_62] : memref<580x32xf32, #tpu.memory_space<vmem>>, vector<32x32xf32>
    %c432 = arith.constant 432 : index
    %c0_63 = arith.constant 0 : index
    %135 = vector.load %arg1[%c432, %c0_63] : memref<580x32xf32, #tpu.memory_space<vmem>>, vector<128x32xf32>
    %c571 = arith.constant 571 : index
    %c0_64 = arith.constant 0 : index
    %136 = vector.load %arg1[%c571, %c0_64] : memref<580x32xf32, #tpu.memory_space<vmem>>, vector<1x32xf32>
    %c572 = arith.constant 572 : index
    %c0_65 = arith.constant 0 : index
    %137 = vector.load %arg1[%c572, %c0_65] : memref<580x32xf32, #tpu.memory_space<vmem>>, vector<1x32xf32>
    %c573 = arith.constant 573 : index
    %c0_66 = arith.constant 0 : index
    %138 = vector.load %arg1[%c573, %c0_66] : memref<580x32xf32, #tpu.memory_space<vmem>>, vector<1x32xf32>
    %c574 = arith.constant 574 : index
    %c0_67 = arith.constant 0 : index
    %139 = vector.load %arg1[%c574, %c0_67] : memref<580x32xf32, #tpu.memory_space<vmem>>, vector<1x32xf32>
    %c575 = arith.constant 575 : index
    %c0_68 = arith.constant 0 : index
    %140 = vector.load %arg1[%c575, %c0_68] : memref<580x32xf32, #tpu.memory_space<vmem>>, vector<1x32xf32>
    %c576 = arith.constant 576 : index
    %c0_69 = arith.constant 0 : index
    %141 = vector.load %arg1[%c576, %c0_69] : memref<580x32xf32, #tpu.memory_space<vmem>>, vector<1x32xf32>
    %c577 = arith.constant 577 : index
    %c0_70 = arith.constant 0 : index
    %142 = vector.load %arg1[%c577, %c0_70] : memref<580x32xf32, #tpu.memory_space<vmem>>, vector<1x32xf32>
    %c578 = arith.constant 578 : index
    %c0_71 = arith.constant 0 : index
    %143 = vector.load %arg1[%c578, %c0_71] : memref<580x32xf32, #tpu.memory_space<vmem>>, vector<1x32xf32>
    %c579 = arith.constant 579 : index
    %c0_72 = arith.constant 0 : index
    %144 = vector.load %arg1[%c579, %c0_72] : memref<580x32xf32, #tpu.memory_space<vmem>>, vector<1x32xf32>
    %c32 = arith.constant 32 : index
    %c0_73 = arith.constant 0 : index
    %145 = vector.load %arg2[%c32, %c0_73] : memref<66x128xf32, #tpu.memory_space<vmem>>, vector<32x128xf32>
    %c65 = arith.constant 65 : index
    %c0_74 = arith.constant 0 : index
    %146 = vector.load %arg2[%c65, %c0_74] : memref<66x128xf32, #tpu.memory_space<vmem>>, vector<1x128xf32>
    %cst_75 = arith.constant dense<0.000000e+00> : vector<16xf32>
    %147 = vector.multi_reduction <add>, %130, %cst_75 [1] : vector<16x32xf32> to vector<16xf32>
    %148 = vector.shape_cast %147 : vector<16xf32> to vector<16x1xf32>
    %cst_76 = arith.constant 3.200000e+01 : f32
    %149 = vector.broadcast %cst_76 : f32 to vector<16x1xf32>
    %150 = arith.divf %148, %149 : vector<16x1xf32>
    %151 = vector.broadcast %150 : vector<16x1xf32> to vector<16x32xf32>
    %152 = arith.subf %130, %151 : vector<16x32xf32>
    %153 = arith.mulf %152, %152 : vector<16x32xf32>
    %cst_77 = arith.constant dense<0.000000e+00> : vector<16xf32>
    %154 = vector.multi_reduction <add>, %153, %cst_77 [1] : vector<16x32xf32> to vector<16xf32>
    %155 = vector.shape_cast %154 : vector<16xf32> to vector<16x1xf32>
    %cst_78 = arith.constant 3.200000e+01 : f32
    %156 = vector.broadcast %cst_78 : f32 to vector<16x1xf32>
    %157 = arith.divf %155, %156 : vector<16x1xf32>
    %cst_79 = arith.constant 9.99999974E-6 : f32
    %158 = vector.broadcast %cst_79 : f32 to vector<16x1xf32>
    %159 = arith.addf %157, %158 : vector<16x1xf32>
    %160 = math.rsqrt %159 : vector<16x1xf32>
    %161 = vector.broadcast %160 : vector<16x1xf32> to vector<16x32xf32>
    %162 = arith.mulf %152, %161 : vector<16x32xf32>
    %163 = vector.broadcast %136 : vector<1x32xf32> to vector<16x32xf32>
    %164 = arith.mulf %162, %163 : vector<16x32xf32>
    %165 = vector.broadcast %137 : vector<1x32xf32> to vector<16x32xf32>
    %166 = arith.addf %164, %165 : vector<16x32xf32>
    %cst_80 = arith.constant dense<0.000000e+00> : vector<16x32xf32>
    %167 = tpu.matmul %166, %131, %cst_80 {dimension_numbers = #tpu.dot_dimension_numbers<[1], [0], [0], [1], [0, 0, 1, 1], [], []>} : vector<16x32xf32>, vector<32x32xf32>, vector<16x32xf32> -> vector<16x32xf32>
    %168 = vector.broadcast %140 : vector<1x32xf32> to vector<16x32xf32>
    %169 = arith.addf %167, %168 : vector<16x32xf32>
    %cst_81 = arith.constant dense<0.000000e+00> : vector<16x32xf32>
    %170 = tpu.matmul %166, %132, %cst_81 {dimension_numbers = #tpu.dot_dimension_numbers<[1], [0], [0], [1], [0, 0, 1, 1], [], []>} : vector<16x32xf32>, vector<32x32xf32>, vector<16x32xf32> -> vector<16x32xf32>
    %171 = vector.broadcast %141 : vector<1x32xf32> to vector<16x32xf32>
    %172 = arith.addf %170, %171 : vector<16x32xf32>
    %cst_82 = arith.constant dense<0.000000e+00> : vector<16x32xf32>
    %173 = tpu.matmul %166, %133, %cst_82 {dimension_numbers = #tpu.dot_dimension_numbers<[1], [0], [0], [1], [0, 0, 1, 1], [], []>} : vector<16x32xf32>, vector<32x32xf32>, vector<16x32xf32> -> vector<16x32xf32>
    %174 = vector.broadcast %142 : vector<1x32xf32> to vector<16x32xf32>
    %175 = arith.addf %173, %174 : vector<16x32xf32>
    %cst_83 = arith.constant 0.000000e+00 : f32
    %176 = vector.broadcast %cst_83 : f32 to vector<16x32xf32>
    %177 = arith.cmpf ogt, %169, %176 : vector<16x32xf32>
    %cst_84 = arith.constant 1.000000e+00 : f32
    %178 = vector.broadcast %cst_84 : f32 to vector<16x32xf32>
    %179 = arith.addf %169, %178 : vector<16x32xf32>
    %cst_85 = arith.constant 0.000000e+00 : f32
    %180 = vector.broadcast %cst_85 : f32 to vector<16x32xf32>
    %181 = arith.minimumf %169, %180 : vector<16x32xf32>
    %182 = math.exp %181 : vector<16x32xf32>
    %183 = arith.select %177, %179, %182 : vector<16x32xi1>, vector<16x32xf32>
    %cst_86 = arith.constant 0.000000e+00 : f32
    %184 = vector.broadcast %cst_86 : f32 to vector<16x32xf32>
    %185 = arith.cmpf ogt, %172, %184 : vector<16x32xf32>
    %cst_87 = arith.constant 1.000000e+00 : f32
    %186 = vector.broadcast %cst_87 : f32 to vector<16x32xf32>
    %187 = arith.addf %172, %186 : vector<16x32xf32>
    %cst_88 = arith.constant 0.000000e+00 : f32
    %188 = vector.broadcast %cst_88 : f32 to vector<16x32xf32>
    %189 = arith.minimumf %172, %188 : vector<16x32xf32>
    %190 = math.exp %189 : vector<16x32xf32>
    %191 = arith.select %185, %187, %190 : vector<16x32xi1>, vector<16x32xf32>
    %192 = vector.extract_strided_slice %183 {offsets = [0, 0], sizes = [8, 32], strides = [1, 1]} : vector<16x32xf32> to vector<8x32xf32>
    %193 = vector.extract_strided_slice %191 {offsets = [0, 0], sizes = [8, 32], strides = [1, 1]} : vector<16x32xf32> to vector<8x32xf32>
    %194 = vector.extract_strided_slice %175 {offsets = [0, 0], sizes = [8, 32], strides = [1, 1]} : vector<16x32xf32> to vector<8x32xf32>
    %cst_89 = arith.constant dense<0.000000e+00> : vector<32x32xf32>
    %195 = tpu.matmul %193, %194, %cst_89 {dimension_numbers = #tpu.dot_dimension_numbers<[0], [0], [1], [1], [0, 1, 1, 1], [], []>} : vector<8x32xf32>, vector<8x32xf32>, vector<32x32xf32> -> vector<32x32xf32>
    %196 = arith.mulf %195, %1 : vector<32x32xf32>
    %cst_90 = arith.constant dense<0.000000e+00> : vector<8x32xf32>
    %197 = tpu.matmul %192, %196, %cst_90 {dimension_numbers = #tpu.dot_dimension_numbers<[1], [0], [0], [1], [0, 0, 1, 1], [], []>} : vector<8x32xf32>, vector<32x32xf32>, vector<8x32xf32> -> vector<8x32xf32>
    %cst_91 = arith.constant dense<0.000000e+00> : vector<32xf32>
    %198 = vector.multi_reduction <add>, %193, %cst_91 [0] : vector<8x32xf32> to vector<32xf32>
    %199 = vector.shape_cast %198 : vector<32xf32> to vector<1x32xf32>
    %200 = vector.broadcast %199 : vector<1x32xf32> to vector<8x32xf32>
    %201 = arith.mulf %192, %200 : vector<8x32xf32>
    %cst_92 = arith.constant dense<0.000000e+00> : vector<8x32xf32>
    %202 = tpu.matmul %201, %1, %cst_92 {dimension_numbers = #tpu.dot_dimension_numbers<[1], [0], [0], [1], [0, 0, 1, 1], [], []>} : vector<8x32xf32>, vector<32x32xf32>, vector<8x32xf32> -> vector<8x32xf32>
    %cst_93 = arith.constant 9.99999997E-7 : f32
    %203 = vector.broadcast %cst_93 : f32 to vector<8x32xf32>
    %204 = arith.addf %202, %203 : vector<8x32xf32>
    %205 = arith.divf %197, %204 : vector<8x32xf32>
    %c0_94 = arith.constant 0 : index
    %c0_95 = arith.constant 0 : index
    %206 = vector.load %arg4[%c0_94, %c0_95] : memref<16x32xf32, #tpu.memory_space<vmem>>, vector<8x32xf32>
    tpu.vector_store %arg4[%c0_94, %c0_95], %205 {strides = array<i32>} : memref<16x32xf32, #tpu.memory_space<vmem>>, vector<8x32xf32>,
    %207 = vector.extract_strided_slice %183 {offsets = [8, 0], sizes = [8, 32], strides = [1, 1]} : vector<16x32xf32> to vector<8x32xf32>
    %208 = vector.extract_strided_slice %191 {offsets = [8, 0], sizes = [8, 32], strides = [1, 1]} : vector<16x32xf32> to vector<8x32xf32>
    %209 = vector.extract_strided_slice %175 {offsets = [8, 0], sizes = [8, 32], strides = [1, 1]} : vector<16x32xf32> to vector<8x32xf32>
    %cst_96 = arith.constant dense<0.000000e+00> : vector<32x32xf32>
    %210 = tpu.matmul %208, %209, %cst_96 {dimension_numbers = #tpu.dot_dimension_numbers<[0], [0], [1], [1], [0, 1, 1, 1], [], []>} : vector<8x32xf32>, vector<8x32xf32>, vector<32x32xf32> -> vector<32x32xf32>
    %211 = arith.mulf %210, %1 : vector<32x32xf32>
    %cst_97 = arith.constant dense<0.000000e+00> : vector<8x32xf32>
    %212 = tpu.matmul %207, %211, %cst_97 {dimension_numbers = #tpu.dot_dimension_numbers<[1], [0], [0], [1], [0, 0, 1, 1], [], []>} : vector<8x32xf32>, vector<32x32xf32>, vector<8x32xf32> -> vector<8x32xf32>
    %cst_98 = arith.constant dense<0.000000e+00> : vector<32xf32>
    %213 = vector.multi_reduction <add>, %208, %cst_98 [0] : vector<8x32xf32> to vector<32xf32>
    %214 = vector.shape_cast %213 : vector<32xf32> to vector<1x32xf32>
    %215 = vector.broadcast %214 : vector<1x32xf32> to vector<8x32xf32>
    %216 = arith.mulf %207, %215 : vector<8x32xf32>
    %cst_99 = arith.constant dense<0.000000e+00> : vector<8x32xf32>
    %217 = tpu.matmul %216, %1, %cst_99 {dimension_numbers = #tpu.dot_dimension_numbers<[1], [0], [0], [1], [0, 0, 1, 1], [], []>} : vector<8x32xf32>, vector<32x32xf32>, vector<8x32xf32> -> vector<8x32xf32>
    %cst_100 = arith.constant 9.99999997E-7 : f32
    %218 = vector.broadcast %cst_100 : f32 to vector<8x32xf32>
    %219 = arith.addf %217, %218 : vector<8x32xf32>
    %220 = arith.divf %212, %219 : vector<8x32xf32>
    %c8_101 = arith.constant 8 : index
    %c0_102 = arith.constant 0 : index
    %221 = vector.load %arg4[%c8_101, %c0_102] : memref<16x32xf32, #tpu.memory_space<vmem>>, vector<8x32xf32>
    tpu.vector_store %arg4[%c8_101, %c0_102], %220 {strides = array<i32>} : memref<16x32xf32, #tpu.memory_space<vmem>>, vector<8x32xf32>,
    %c0_103 = arith.constant 0 : index
    %c0_104 = arith.constant 0 : index
    %222 = vector.load %arg4[%c0_103, %c0_104] : memref<16x32xf32, #tpu.memory_space<vmem>>, vector<16x32xf32>
    %cst_105 = arith.constant dense<0.000000e+00> : vector<16x32xf32>
    %223 = tpu.matmul %222, %134, %cst_105 {dimension_numbers = #tpu.dot_dimension_numbers<[1], [0], [0], [1], [0, 0, 1, 1], [], []>} : vector<16x32xf32>, vector<32x32xf32>, vector<16x32xf32> -> vector<16x32xf32>
    %224 = vector.broadcast %143 : vector<1x32xf32> to vector<16x32xf32>
    %225 = arith.addf %223, %224 : vector<16x32xf32>
    %226 = arith.addf %130, %225 : vector<16x32xf32>
    %cst_106 = arith.constant dense<0.000000e+00> : vector<16xf32>
    %227 = vector.multi_reduction <add>, %226, %cst_106 [1] : vector<16x32xf32> to vector<16xf32>
    %228 = vector.shape_cast %227 : vector<16xf32> to vector<16x1xf32>
    %cst_107 = arith.constant 3.200000e+01 : f32
    %229 = vector.broadcast %cst_107 : f32 to vector<16x1xf32>
    %230 = arith.divf %228, %229 : vector<16x1xf32>
    %231 = vector.broadcast %230 : vector<16x1xf32> to vector<16x32xf32>
    %232 = arith.subf %226, %231 : vector<16x32xf32>
    %233 = arith.mulf %232, %232 : vector<16x32xf32>
    %cst_108 = arith.constant dense<0.000000e+00> : vector<16xf32>
    %234 = vector.multi_reduction <add>, %233, %cst_108 [1] : vector<16x32xf32> to vector<16xf32>
    %235 = vector.shape_cast %234 : vector<16xf32> to vector<16x1xf32>
    %cst_109 = arith.constant 3.200000e+01 : f32
    %236 = vector.broadcast %cst_109 : f32 to vector<16x1xf32>
    %237 = arith.divf %235, %236 : vector<16x1xf32>
    %cst_110 = arith.constant 9.99999974E-6 : f32
    %238 = vector.broadcast %cst_110 : f32 to vector<16x1xf32>
    %239 = arith.addf %237, %238 : vector<16x1xf32>
    %240 = math.rsqrt %239 : vector<16x1xf32>
    %241 = vector.broadcast %240 : vector<16x1xf32> to vector<16x32xf32>
    %242 = arith.mulf %232, %241 : vector<16x32xf32>
    %243 = vector.broadcast %138 : vector<1x32xf32> to vector<16x32xf32>
    %244 = arith.mulf %242, %243 : vector<16x32xf32>
    %245 = vector.broadcast %139 : vector<1x32xf32> to vector<16x32xf32>
    %246 = arith.addf %244, %245 : vector<16x32xf32>
    %cst_111 = arith.constant dense<0.000000e+00> : vector<16x128xf32>
    %247 = tpu.matmul %246, %145, %cst_111 {dimension_numbers = #tpu.dot_dimension_numbers<[1], [0], [0], [1], [0, 0, 1, 1], [], []>} : vector<16x32xf32>, vector<32x128xf32>, vector<16x128xf32> -> vector<16x128xf32>
    %248 = vector.broadcast %146 : vector<1x128xf32> to vector<16x128xf32>
    %249 = arith.addf %247, %248 : vector<16x128xf32>
    %cst_112 = arith.constant 0.000000e+00 : f32
    %250 = vector.broadcast %cst_112 : f32 to vector<16x128xf32>
    %251 = arith.maximumf %249, %250 : vector<16x128xf32>
    %cst_113 = arith.constant dense<0.000000e+00> : vector<16x32xf32>
    %252 = tpu.matmul %251, %135, %cst_113 {dimension_numbers = #tpu.dot_dimension_numbers<[1], [0], [0], [1], [0, 0, 1, 1], [], []>} : vector<16x128xf32>, vector<128x32xf32>, vector<16x32xf32> -> vector<16x32xf32>
    %253 = arith.addf %226, %252 : vector<16x32xf32>
    %254 = vector.broadcast %144 : vector<1x32xf32> to vector<16x32xf32>
    %255 = arith.addf %253, %254 : vector<16x32xf32>
    %c560 = arith.constant 560 : index
    %c0_114 = arith.constant 0 : index
    %256 = vector.load %arg1[%c560, %c0_114] : memref<580x32xf32, #tpu.memory_space<vmem>>, vector<1x32xf32>
    %c561 = arith.constant 561 : index
    %c0_115 = arith.constant 0 : index
    %257 = vector.load %arg1[%c561, %c0_115] : memref<580x32xf32, #tpu.memory_space<vmem>>, vector<1x32xf32>
    %cst_116 = arith.constant dense<0.000000e+00> : vector<16xf32>
    %258 = vector.multi_reduction <add>, %255, %cst_116 [1] : vector<16x32xf32> to vector<16xf32>
    %259 = vector.shape_cast %258 : vector<16xf32> to vector<16x1xf32>
    %cst_117 = arith.constant 3.200000e+01 : f32
    %260 = vector.broadcast %cst_117 : f32 to vector<16x1xf32>
    %261 = arith.divf %259, %260 : vector<16x1xf32>
    %262 = vector.broadcast %261 : vector<16x1xf32> to vector<16x32xf32>
    %263 = arith.subf %255, %262 : vector<16x32xf32>
    %264 = arith.mulf %263, %263 : vector<16x32xf32>
    %cst_118 = arith.constant dense<0.000000e+00> : vector<16xf32>
    %265 = vector.multi_reduction <add>, %264, %cst_118 [1] : vector<16x32xf32> to vector<16xf32>
    %266 = vector.shape_cast %265 : vector<16xf32> to vector<16x1xf32>
    %cst_119 = arith.constant 3.200000e+01 : f32
    %267 = vector.broadcast %cst_119 : f32 to vector<16x1xf32>
    %268 = arith.divf %266, %267 : vector<16x1xf32>
    %cst_120 = arith.constant 9.99999974E-6 : f32
    %269 = vector.broadcast %cst_120 : f32 to vector<16x1xf32>
    %270 = arith.addf %268, %269 : vector<16x1xf32>
    %271 = math.rsqrt %270 : vector<16x1xf32>
    %272 = vector.broadcast %271 : vector<16x1xf32> to vector<16x32xf32>
    %273 = arith.mulf %263, %272 : vector<16x32xf32>
    %274 = vector.broadcast %256 : vector<1x32xf32> to vector<16x32xf32>
    %275 = arith.mulf %273, %274 : vector<16x32xf32>
    %276 = vector.broadcast %257 : vector<1x32xf32> to vector<16x32xf32>
    %277 = arith.addf %275, %276 : vector<16x32xf32>
    %c0_121 = arith.constant 0 : index
    %c0_122 = arith.constant 0 : index
    %278 = vector.load %arg3[%c0_121, %c0_122] : memref<16x32xf32, #tpu.memory_space<vmem>>, vector<16x32xf32>
    tpu.vector_store %arg3[%c0_121, %c0_122], %277 {strides = array<i32>} : memref<16x32xf32, #tpu.memory_space<vmem>>, vector<16x32xf32>,
    return
  }
}

</mosaic_0001>

<llo_original>
// kernel: tpu_custom_call.1
$region0: #{tpu_custom_call.1}
  #allocation0 [shape = 'u32[]', space=smem, size = 0x4, offset = 0x4, fixed_abs, tag = 'smem constant byte address 0x4 - core index']
  #allocation1 [shape = 'u32[144,128]{1,0:T(1,128)}', space=vmem, size = 0x12000, scoped, tag = 'internal scratch']
  #allocation2 [shape = 'f32[16,32]{1,0:T(8,128)}', space=vmem, size = 0x2000, scoped, tag = 'scratch operand']
  %s0 = inlined_call_operand.vmem [shape: f32[16,32], index: 0, kind: input, shape index: {}]
  %s1 = inlined_call_operand.vmem [shape: f32[580,32], index: 1, kind: input, shape index: {}]
  %s2 = inlined_call_operand.vmem [shape: f32[66,128], index: 2, kind: input, shape index: {}]
  %s3 = inlined_call_operand.hbm [shape: f32[16,32], index: 3, kind: output, shape index: {}]
  %s4 = sld [smem:[#allocation0]]
  $region22: #{tpu_custom_call.1} parent=0
    _
  %s6 = ssub.s32 1, %s4
  %s7 = scalar_select 0, %s6, %s4
  $region1: #{tpu_custom_call.1} parent=0
    #allocation3 [shape = 'u8[8192]{0}', space=vmem, size = 0x2000, scoped, tag = 'output window, operand 0, single buffered']
    #allocation4 [shape = 's32[1]{0}', space=sflag, size = 0x4, scoped, tag = 'scoped memory for tpu_custom_call.1']
    %8 = vsyncpa [#allocation4], 0
    // Predicated region
    $region2: #{tpu_custom_call.1} parent=1 // pred_check
      _
    $region3: #{tpu_custom_call.1} parent=1 // pred_check_branch
      %10 = sbr.rel (0) target = $region5
    $region4: #{tpu_custom_call.1} parent=1 // pred_region
      _
    $region5: #{tpu_custom_call.1} parent=1 // pred_fallthru
      _
    // Predicated region
    $region6: #{tpu_custom_call.1} parent=1 // pred_check
      _
    $region7: #{tpu_custom_call.1} parent=1 // pred_check_branch
      %12 = sbr.rel (0) target = $region9
    $region8: #{tpu_custom_call.1} parent=1 // pred_region
      _
    $region9: #{tpu_custom_call.1} parent=1 // pred_fallthru
      _
    // Predicated region
    $region10: #{tpu_custom_call.1} parent=1 // pred_check
      _
    $region11: #{tpu_custom_call.1} parent=1 // pred_check_branch
      %14 = sbr.rel (0) target = $region13
    $region12: #{tpu_custom_call.1} parent=1 // pred_region
      _
    $region13: #{tpu_custom_call.1} parent=1 // pred_fallthru
      _
    %v15 = vld [vmem:[%s1] sm:$0xff]
    %v16 = vld [vmem:[%s1 + $0x8] sm:$0xff]
    %v17 = vld [vmem:[%s1 + $0x10] sm:$0xff]
    %v18 = vld [vmem:[%s1 + $0x18] sm:$0xff]
    %v19 = vld [vmem:[%s1 + $0x20] sm:$0xff]
    %v20 = vld [vmem:[%s1 + $0x28] sm:$0xff]
    %v21 = vld [vmem:[%s0] sm:$0xff]
    %v22 = vld [vmem:[%s0 + $0x8] sm:$0xff]
    %v23 = vmul.f32 %v21, 5.656854
    %v24 = vmul.f32 %v22, 5.656854
    %v25 = vadd.f32 %v23, %v15
    %v26 = vadd.f32 %v24, %v16
    %v27 = vld [vmem:[%s1 + $0x30] sm:$0xff]
    %v28 = vld [vmem:[%s1 + $0x38] sm:$0xff]
    %v29 = vld [vmem:[%s1 + $0x40] sm:$0xff]
    %v30 = vld [vmem:[%s1 + $0x48] sm:$0xff]
    %v31 = vld [vmem:[%s1 + $0x50] sm:$0xff]
    %v32 = vld [vmem:[%s1 + $0x58] sm:$0xff]
    %v33 = vld [vmem:[%s1 + $0x60] sm:$0xff]
    %v34 = vld [vmem:[%s1 + $0x68] sm:$0xff]
    %v35 = vld [vmem:[%s1 + $0x70] sm:$0xff]
    %v36 = vld [vmem:[%s1 + $0x78] sm:$0xff]
    %v37 = vld [vmem:[%s1 + $0x80] sm:$0xff]
    %v38 = vld [vmem:[%s1 + $0x88] sm:$0xff]
    %v39 = vld [vmem:[%s1 + $0x90] sm:$0xff]
    %v40 = vld [vmem:[%s1 + $0x98] sm:$0xff]
    %v41 = vld [vmem:[%s1 + $0xa0] sm:$0xff]
    %v42 = vld [vmem:[%s1 + $0xa8] sm:$0xff]
    %v43 = vld [vmem:[%s1 + $0xb0] sm:$0xff]
    %v44 = vld [vmem:[%s1 + $0xb8] sm:$0xff]
    %v45 = vld [vmem:[%s1 + $0xc0] sm:$0xff]
    %v46 = vld [vmem:[%s1 + $0xc8] sm:$0xff]
    %v47 = vld [vmem:[%s1 + $0xd0] sm:$0xff]
    %v48 = vld [vmem:[%s1 + $0xd8] sm:$0xff]
    %v49 = vld [vmem:[%s1 + $0xe0] sm:$0xff]
    %v50 = vld [vmem:[%s1 + $0xe8] sm:$0xff]
    %v51 = vld [vmem:[%s1 + $0xf0] sm:$0xff]
    %v52 = vld [vmem:[%s1 + $0xf8] sm:$0xff]
    %v53 = vld [vmem:[%s1 + $0x100] sm:$0xff]
    %v54 = vld [vmem:[%s1 + $0x108] sm:$0xff]
    %v55 = vld [vmem:[%s1 + $0x110] sm:$0xff]
    %v56 = vld [vmem:[%s1 + $0x118] sm:$0xff]
    %v57 = vld [vmem:[%s1 + $0x120] sm:$0xff]
    %v58 = vld [vmem:[%s1 + $0x128] sm:$0xff]
    %v59 = vld [vmem:[%s1 + $0x232] sm:$0x1]
    %v60 = vld [vmem:[%s1 + $0x233] sm:$0x1]
    %v61 = vld [vmem:[%s1 + $0x234] sm:$0x1]
    %v62 = vld [vmem:[%s1 + $0x235] sm:$0x1]
    %v63 = vld [vmem:[%s1 + $0x236] sm:$0x1]
    %v64 = vld [vmem:[%s1 + $0x237] sm:$0x1]
    %v65 = vld [vmem:[%s1 + $0x238] sm:$0x1]
    %v66 = vld [vmem:[%s1 + $0x239] sm:$0x1]
    %v67 = vld [vmem:[%s1 + $0x23a] sm:$0x1]
    %v68 = vld [vmem:[%s2] sm:$0xff]
    %v69 = vld [vmem:[%s2 + $0x8] sm:$0xff]
    %v70 = vld [vmem:[%s2 + $0x10] sm:$0xff]
    %v71 = vld [vmem:[%s2 + $0x18] sm:$0xff]
    %v72 = vld [vmem:[%s2 + $0x40] sm:$0x1]
    %vm73 = vcmask 261120
    %v74 = vsel %vm73, %v25, 0.0
    %75 = vadd.xlane.f32.xlu0 %v74
    %v76 = vpop.xlane.xlu0 %75
    %v77 = vsel %vm73, %v26, 0.0
    %78 = vadd.xlane.f32.xlu0 %v77
    %v79 = vpop.xlane.xlu0 %78
    %v80 = vrcp.pop 32.0
    %v81 = vmul.f32 %v76, %v80
    %v82 = vmul.f32 %v79, %v80
    %v83 = vsub.f32 %v25, %v81
    %v84 = vsub.f32 %v26, %v82
    %v85 = vmul.f32 %v83, %v83
    %v86 = vmul.f32 %v84, %v84
    %v87 = vsel %vm73, %v85, 0.0
    %88 = vadd.xlane.f32.xlu0 %v87
    %v89 = vpop.xlane.xlu0 %88
    %v90 = vsel %vm73, %v86, 0.0
    %91 = vadd.xlane.f32.xlu0 %v90
    %v92 = vpop.xlane.xlu0 %91
    %v93 = vmul.f32 %v89, %v80
    %v94 = vmul.f32 %v92, %v80
    %v95 = vadd.f32 %v93, 1e-05
    %v96 = vadd.f32 %v94, 1e-05
    %v97 = vrsqrt.pop %v95
    %v98 = vrsqrt.pop %v96
    %v99 = vmul.f32 %v83, %v97
    %v100 = vmul.f32 %v84, %v98
    %v101 = vlaneseq
    %v102 = vshrl.u32 %v101, 7
    %v103 = vsub.s32 0, %v102
    %v104 = vrot.slane %v59, %v103
    %v105 = vmul.f32 %v99, %v104
    %v106 = vmul.f32 %v100, %v104
    %v107 = vlaneseq
    %v108 = vshrl.u32 %v107, 7
    %v109 = vsub.s32 0, %v108
    %v110 = vrot.slane %v60, %v109
    %v111 = vadd.f32 %v105, %v110
    %v112 = vadd.f32 %v106, %v110
    %v113 = vlaneseq
    %v114 = vshrl.u32 %v113, 7
    %v115 = vsub.s32 0, %v114
    %v116 = vrot.slane %v63, %v115
    %v118 = vsel %vm73, %v111, 0
    %v121 = vsel %vm73, %v112, 0
    %123 = vmatprep.subr.mxu0 0.0
    %124 = vmatpush1.msra.mxu0 %v27
    %125 = vmatprep.subr.mxu0 0.0
    %126 = vmatpush1.msra.mxu0 %v28
    %127 = vmatprep.subr.mxu0 0.0
    %128 = vmatpush1.msra.mxu0 %v29
    %129 = vmatprep.subr.mxu0 0.0
    %130 = vmatpush1.msra.mxu0 %v30
    %131 = vmatprep.subr.mxu0 0.0
    %132 = vmatpush1.msra.mxu0 0.0
    %133 = vmatprep.subr.mxu0 0.0
    %134 = vmatpush1.msra.mxu0 0.0
    %135 = vmatprep.subr.mxu0 0.0
    %136 = vmatpush1.msra.mxu0 0.0
    %137 = vmatprep.subr.mxu0 0.0
    %138 = vmatpush1.msra.mxu0 0.0
    %139 = vmatprep.subr.mxu0 0.0
    %140 = vmatpush1.msra.mxu0 0.0
    %141 = vmatprep.subr.mxu0 0.0
    %142 = vmatpush1.msra.mxu0 0.0
    %143 = vmatprep.subr.mxu0 0.0
    %144 = vmatpush1.msra.mxu0 0.0
    %145 = vmatprep.subr.mxu0 0.0
    %146 = vmatpush1.msra.mxu0 0.0
    %147 = vmatprep.subr.mxu0 0.0
    %148 = vmatpush1.msra.mxu0 0.0
    %149 = vmatprep.subr.mxu0 0.0
    %150 = vmatpush1.msra.mxu0 0.0
    %151 = vmatprep.subr.mxu0 0.0
    %152 = vmatpush1.msra.mxu0 0.0
    %153 = vmatprep.subr.mxu0 0.0
    %154 = vmatpush1.msra.mxu0 0.0
    %155 = vmatprep.subr.mxu0 0.0
    %156 = vmatpush1.msra.mxu0 0.0
    %157 = vmatprep.subr.mxu0 0.0
    %158 = vmatpush1.msra.mxu0 0.0
    %159 = vmatprep.subr.mxu0 0.0
    %160 = vmatpush1.msra.mxu0 0.0
    %161 = vmatprep.subr.mxu0 0.0
    %162 = vmatpush1.msra.mxu0 0.0
    %163 = vmatprep.subr.mxu0 0.0
    %164 = vmatpush1.msra.mxu0 0.0
    %165 = vmatprep.subr.mxu0 0.0
    %166 = vmatpush1.msra.mxu0 0.0
    %167 = vmatprep.subr.mxu0 0.0
    %168 = vmatpush1.msra.mxu0 0.0
    %169 = vmatprep.subr.mxu0 0.0
    %170 = vmatpush1.msra.mxu0 0.0
    %171 = vmatprep.subr.mxu0 0.0
    %172 = vmatpush1.msra.mxu0 0.0
    %173 = vmatprep.subr.mxu0 0.0
    %174 = vmatpush1.msra.mxu0 0.0
    %175 = vmatprep.subr.mxu0 0.0
    %176 = vmatpush1.msra.mxu0 0.0
    %177 = vmatprep.subr.mxu0 0.0
    %178 = vmatpush1.msra.mxu0 0.0
    %179 = vmatprep.subr.mxu0 0.0
    %180 = vmatpush1.msra.mxu0 0.0
    %181 = vmatprep.subr.mxu0 0.0
    %182 = vmatpush1.msra.mxu0 0.0
    %183 = vmatprep.subr.mxu0 0.0
    %184 = vmatpush1.msra.mxu0 0.0
    %185 = vmatprep.subr.mxu0 0.0
    %186 = vmatpush1.msra.mxu0 0.0
    %187 = vmatprep.mubr.f32.mxu0 0.0
    %188 = vmatmul.mubr.f32.gmra.mrb[0].mxu0 %v118
    %v189 = vpop.f32.mrb[0].mxu0
    %v190 = vadd.f32 %v116, %v189
    %v191 = vpop.f32.mrb[0].mxu0
    %192 = vmatprep.mubr.f32.mxu0 0.0
    %193 = vmatmul.mubr.f32.gmra.mrb[0].mxu0 %v121
    %v194 = vpop.f32.mrb[0].mxu0
    %v195 = vadd.f32 %v116, %v194
    %v196 = vpop.f32.mrb[0].mxu0
    %197 = vdwg.mxu0
    %v198 = vlaneseq
    %v199 = vshrl.u32 %v198, 7
    %v200 = vsub.s32 0, %v199
    %v201 = vrot.slane %v64, %v200
    %202 = vmatprep.subr.mxu0 0.0
    %203 = vmatpush1.msra.mxu0 %v31
    %204 = vmatprep.subr.mxu0 0.0
    %205 = vmatpush1.msra.mxu0 %v32
    %206 = vmatprep.subr.mxu0 0.0
    %207 = vmatpush1.msra.mxu0 %v33
    %208 = vmatprep.subr.mxu0 0.0
    %209 = vmatpush1.msra.mxu0 %v34
    %210 = vmatprep.subr.mxu0 0.0
    %211 = vmatpush1.msra.mxu0 0.0
    %212 = vmatprep.subr.mxu0 0.0
    %213 = vmatpush1.msra.mxu0 0.0
    %214 = vmatprep.subr.mxu0 0.0
    %215 = vmatpush1.msra.mxu0 0.0
    %216 = vmatprep.subr.mxu0 0.0
    %217 = vmatpush1.msra.mxu0 0.0
    %218 = vmatprep.subr.mxu0 0.0
    %219 = vmatpush1.msra.mxu0 0.0
    %220 = vmatprep.subr.mxu0 0.0
    %221 = vmatpush1.msra.mxu0 0.0
    %222 = vmatprep.subr.mxu0 0.0
    %223 = vmatpush1.msra.mxu0 0.0
    %224 = vmatprep.subr.mxu0 0.0
    %225 = vmatpush1.msra.mxu0 0.0
    %226 = vmatprep.subr.mxu0 0.0
    %227 = vmatpush1.msra.mxu0 0.0
    %228 = vmatprep.subr.mxu0 0.0
    %229 = vmatpush1.msra.mxu0 0.0
    %230 = vmatprep.subr.mxu0 0.0
    %231 = vmatpush1.msra.mxu0 0.0
    %232 = vmatprep.subr.mxu0 0.0
    %233 = vmatpush1.msra.mxu0 0.0
    %234 = vmatprep.subr.mxu0 0.0
    %235 = vmatpush1.msra.mxu0 0.0
    %236 = vmatprep.subr.mxu0 0.0
    %237 = vmatpush1.msra.mxu0 0.0
    %238 = vmatprep.subr.mxu0 0.0
    %239 = vmatpush1.msra.mxu0 0.0
    %240 = vmatprep.subr.mxu0 0.0
    %241 = vmatpush1.msra.mxu0 0.0
    %242 = vmatprep.subr.mxu0 0.0
    %243 = vmatpush1.msra.mxu0 0.0
    %244 = vmatprep.subr.mxu0 0.0
    %245 = vmatpush1.msra.mxu0 0.0
    %246 = vmatprep.subr.mxu0 0.0
    %247 = vmatpush1.msra.mxu0 0.0
    %248 = vmatprep.subr.mxu0 0.0
    %249 = vmatpush1.msra.mxu0 0.0
    %250 = vmatprep.subr.mxu0 0.0
    %251 = vmatpush1.msra.mxu0 0.0
    %252 = vmatprep.subr.mxu0 0.0
    %253 = vmatpush1.msra.mxu0 0.0
    %254 = vmatprep.subr.mxu0 0.0
    %255 = vmatpush1.msra.mxu0 0.0
    %256 = vmatprep.subr.mxu0 0.0
    %257 = vmatpush1.msra.mxu0 0.0
    %258 = vmatprep.subr.mxu0 0.0
    %259 = vmatpush1.msra.mxu0 0.0
    %260 = vmatprep.subr.mxu0 0.0
    %261 = vmatpush1.msra.mxu0 0.0
    %262 = vmatprep.subr.mxu0 0.0
    %263 = vmatpush1.msra.mxu0 0.0
    %264 = vmatprep.subr.mxu0 0.0
    %265 = vmatpush1.msra.mxu0 0.0
    %266 = vmatprep.mubr.f32.mxu0 0.0
    %267 = vmatmul.mubr.f32.gmra.mrb[0].mxu0 %v118
    %v268 = vpop.f32.mrb[0].mxu0
    %v269 = vadd.f32 %v201, %v268
    %v270 = vpop.f32.mrb[0].mxu0
    %271 = vmatprep.mubr.f32.mxu0 0.0
    %272 = vmatmul.mubr.f32.gmra.mrb[0].mxu0 %v121
    %v273 = vpop.f32.mrb[0].mxu0
    %v274 = vadd.f32 %v201, %v273
    %v275 = vpop.f32.mrb[0].mxu0
    %276 = vdwg.mxu0
    %v277 = vlaneseq
    %v278 = vshrl.u32 %v277, 7
    %v279 = vsub.s32 0, %v278
    %v280 = vrot.slane %v65, %v279
    %281 = vmatprep.subr.mxu0 0.0
    %282 = vmatpush1.msra.mxu0 %v35
    %283 = vmatprep.subr.mxu0 0.0
    %284 = vmatpush1.msra.mxu0 %v36
    %285 = vmatprep.subr.mxu0 0.0
    %286 = vmatpush1.msra.mxu0 %v37
    %287 = vmatprep.subr.mxu0 0.0
    %288 = vmatpush1.msra.mxu0 %v38
    %289 = vmatprep.subr.mxu0 0.0
    %290 = vmatpush1.msra.mxu0 0.0
    %291 = vmatprep.subr.mxu0 0.0
    %292 = vmatpush1.msra.mxu0 0.0
    %293 = vmatprep.subr.mxu0 0.0
    %294 = vmatpush1.msra.mxu0 0.0
    %295 = vmatprep.subr.mxu0 0.0
    %296 = vmatpush1.msra.mxu0 0.0
    %297 = vmatprep.subr.mxu0 0.0
    %298 = vmatpush1.msra.mxu0 0.0
    %299 = vmatprep.subr.mxu0 0.0
    %300 = vmatpush1.msra.mxu0 0.0
    %301 = vmatprep.subr.mxu0 0.0
    %302 = vmatpush1.msra.mxu0 0.0
    %303 = vmatprep.subr.mxu0 0.0
    %304 = vmatpush1.msra.mxu0 0.0
    %305 = vmatprep.subr.mxu0 0.0
    %306 = vmatpush1.msra.mxu0 0.0
    %307 = vmatprep.subr.mxu0 0.0
    %308 = vmatpush1.msra.mxu0 0.0
    %309 = vmatprep.subr.mxu0 0.0
    %310 = vmatpush1.msra.mxu0 0.0
    %311 = vmatprep.subr.mxu0 0.0
    %312 = vmatpush1.msra.mxu0 0.0
    %313 = vmatprep.subr.mxu0 0.0
    %314 = vmatpush1.msra.mxu0 0.0
    %315 = vmatprep.subr.mxu0 0.0
    %316 = vmatpush1.msra.mxu0 0.0
    %317 = vmatprep.subr.mxu0 0.0
    %318 = vmatpush1.msra.mxu0 0.0
    %319 = vmatprep.subr.mxu0 0.0
    %320 = vmatpush1.msra.mxu0 0.0
    %321 = vmatprep.subr.mxu0 0.0
    %322 = vmatpush1.msra.mxu0 0.0
    %323 = vmatprep.subr.mxu0 0.0
    %324 = vmatpush1.msra.mxu0 0.0
    %325 = vmatprep.subr.mxu0 0.0
    %326 = vmatpush1.msra.mxu0 0.0
    %327 = vmatprep.subr.mxu0 0.0
    %328 = vmatpush1.msra.mxu0 0.0
    %329 = vmatprep.subr.mxu0 0.0
    %330 = vmatpush1.msra.mxu0 0.0
    %331 = vmatprep.subr.mxu0 0.0
    %332 = vmatpush1.msra.mxu0 0.0
    %333 = vmatprep.subr.mxu0 0.0
    %334 = vmatpush1.msra.mxu0 0.0
    %335 = vmatprep.subr.mxu0 0.0
    %336 = vmatpush1.msra.mxu0 0.0
    %337 = vmatprep.subr.mxu0 0.0
    %338 = vmatpush1.msra.mxu0 0.0
    %339 = vmatprep.subr.mxu0 0.0
    %340 = vmatpush1.msra.mxu0 0.0
    %341 = vmatprep.subr.mxu0 0.0
    %342 = vmatpush1.msra.mxu0 0.0
    %343 = vmatprep.subr.mxu0 0.0
    %344 = vmatpush1.msra.mxu0 0.0
    %345 = vmatprep.mubr.f32.mxu0 0.0
    %346 = vmatmul.mubr.f32.gmra.mrb[0].mxu0 %v118
    %v347 = vpop.f32.mrb[0].mxu0
    %v348 = vadd.f32 %v280, %v347
    %v349 = vpop.f32.mrb[0].mxu0
    %350 = vmatprep.mubr.f32.mxu0 0.0
    %351 = vmatmul.mubr.f32.gmra.mrb[0].mxu0 %v121
    %v352 = vpop.f32.mrb[0].mxu0
    %v353 = vadd.f32 %v280, %v352
    %v354 = vpop.f32.mrb[0].mxu0
    %355 = vdwg.mxu0
    %vm356 = vcmp.gt.f32.partialorder %v190, 0.0
    %vm357 = vcmp.gt.f32.partialorder %v195, 0.0
    %v358 = vadd.f32 %v190, 1.0
    %v359 = vadd.f32 %v195, 1.0
    %v360 = vmin.f32 %v190, 0.0
    %v361 = vmin.f32 %v195, 0.0
    %v362 = vmul.f32 %v360, 1.442695
    %v363 = vpow.pop %v362
    %v364 = vmul.f32 %v361, 1.442695
    %v365 = vpow.pop %v364
    %v366 = vsel %vm356, %v358, %v363
    %v367 = vsel %vm357, %v359, %v365
    %vm368 = vcmp.gt.f32.partialorder %v269, 0.0
    %vm369 = vcmp.gt.f32.partialorder %v274, 0.0
    %v370 = vadd.f32 %v269, 1.0
    %v371 = vadd.f32 %v274, 1.0
    %v372 = vmin.f32 %v269, 0.0
    %v373 = vmin.f32 %v274, 0.0
    %v374 = vmul.f32 %v372, 1.442695
    %v375 = vpow.pop %v374
    %v376 = vmul.f32 %v373, 1.442695
    %v377 = vpow.pop %v376
    %v378 = vsel %vm368, %v370, %v375
    %v379 = vsel %vm369, %v371, %v377
    %380 = vxpose.xlu0.b32.start [1/16] %v378, 128
    %381 = vxpose.xlu0.b32.cont [2/16] 0.0, 128
    %382 = vxpose.xlu0.b32.cont [3/16] 0.0, 128
    %383 = vxpose.xlu0.b32.cont [4/16] 0.0, 128
    %384 = vxpose.xlu0.b32.cont [5/16] 0.0, 128
    %385 = vxpose.xlu0.b32.cont [6/16] 0.0, 128
    %386 = vxpose.xlu0.b32.cont [7/16] 0.0, 128
    %387 = vxpose.xlu0.b32.cont [8/16] 0.0, 128
    %388 = vxpose.xlu0.b32.cont [9/16] 0.0, 128
    %389 = vxpose.xlu0.b32.cont [10/16] 0.0, 128
    %390 = vxpose.xlu0.b32.cont [11/16] 0.0, 128
    %391 = vxpose.xlu0.b32.cont [12/16] 0.0, 128
    %392 = vxpose.xlu0.b32.cont [13/16] 0.0, 128
    %393 = vxpose.xlu0.b32.cont [14/16] 0.0, 128
    %394 = vxpose.xlu0.b32.cont [15/16] 0.0, 128
    %395 = vxpose.xlu0.b32.end [16/16] 0.0, 128
    %v396 = vpop.trf.xlu0
    %v397 = vpop.trf.xlu0
    %v398 = vpop.trf.xlu0
    %v399 = vpop.trf.xlu0
    %v400 = vpop.trf.xlu0
    %v401 = vpop.trf.xlu0
    %v402 = vpop.trf.xlu0
    %v403 = vpop.trf.xlu0
    %v404 = vpop.trf.xlu0
    %v405 = vpop.trf.xlu0
    %v406 = vpop.trf.xlu0
    %v407 = vpop.trf.xlu0
    %v408 = vpop.trf.xlu0
    %v409 = vpop.trf.xlu0
    %v410 = vpop.trf.xlu0
    %v411 = vpop.trf.xlu0
    %vm412 = vcmask 64512
    %v414 = vsel %vm412, %v396, 0
    %v417 = vsel %vm412, %v397, 0
    %v420 = vsel %vm412, %v398, 0
    %v423 = vsel %vm412, %v399, 0
    %425 = vmatprep.subr.mxu0 0.0
    %426 = vmatpush1.msra.mxu0 %v348
    %427 = vmatprep.subr.mxu0 0.0
    %428 = vmatpush1.msra.mxu0 0.0
    %429 = vmatprep.subr.mxu0 0.0
    %430 = vmatpush1.msra.mxu0 0.0
    %431 = vmatprep.subr.mxu0 0.0
    %432 = vmatpush1.msra.mxu0 0.0
    %433 = vmatprep.subr.mxu0 0.0
    %434 = vmatpush1.msra.mxu0 0.0
    %435 = vmatprep.subr.mxu0 0.0
    %436 = vmatpush1.msra.mxu0 0.0
    %437 = vmatprep.subr.mxu0 0.0
    %438 = vmatpush1.msra.mxu0 0.0
    %439 = vmatprep.subr.mxu0 0.0
    %440 = vmatpush1.msra.mxu0 0.0
    %441 = vmatprep.subr.mxu0 0.0
    %442 = vmatpush1.msra.mxu0 0.0
    %443 = vmatprep.subr.mxu0 0.0
    %444 = vmatpush1.msra.mxu0 0.0
    %445 = vmatprep.subr.mxu0 0.0
    %446 = vmatpush1.msra.mxu0 0.0
    %447 = vmatprep.subr.mxu0 0.0
    %448 = vmatpush1.msra.mxu0 0.0
    %449 = vmatprep.subr.mxu0 0.0
    %450 = vmatpush1.msra.mxu0 0.0
    %451 = vmatprep.subr.mxu0 0.0
    %452 = vmatpush1.msra.mxu0 0.0
    %453 = vmatprep.subr.mxu0 0.0
    %454 = vmatpush1.msra.mxu0 0.0
    %455 = vmatprep.subr.mxu0 0.0
    %456 = vmatpush1.msra.mxu0 0.0
    %457 = vmatprep.subr.mxu0 0.0
    %458 = vmatpush1.msra.mxu0 0.0
    %459 = vmatprep.subr.mxu0 0.0
    %460 = vmatpush1.msra.mxu0 0.0
    %461 = vmatprep.subr.mxu0 0.0
    %462 = vmatpush1.msra.mxu0 0.0
    %463 = vmatprep.subr.mxu0 0.0
    %464 = vmatpush1.msra.mxu0 0.0
    %465 = vmatprep.subr.mxu0 0.0
    %466 = vmatpush1.msra.mxu0 0.0
    %467 = vmatprep.subr.mxu0 0.0
    %468 = vmatpush1.msra.mxu0 0.0
    %469 = vmatprep.subr.mxu0 0.0
    %470 = vmatpush1.msra.mxu0 0.0
    %471 = vmatprep.subr.mxu0 0.0
    %472 = vmatpush1.msra.mxu0 0.0
    %473 = vmatprep.subr.mxu0 0.0
    %474 = vmatpush1.msra.mxu0 0.0
    %475 = vmatprep.subr.mxu0 0.0
    %476 = vmatpush1.msra.mxu0 0.0
    %477 = vmatprep.subr.mxu0 0.0
    %478 = vmatpush1.msra.mxu0 0.0
    %479 = vmatprep.subr.mxu0 0.0
    %480 = vmatpush1.msra.mxu0 0.0
    %481 = vmatprep.subr.mxu0 0.0
    %482 = vmatpush1.msra.mxu0 0.0
    %483 = vmatprep.subr.mxu0 0.0
    %484 = vmatpush1.msra.mxu0 0.0
    %485 = vmatprep.subr.mxu0 0.0
    %486 = vmatpush1.msra.mxu0 0.0
    %487 = vmatprep.subr.mxu0 0.0
    %488 = vmatpush1.msra.mxu0 0.0
    %489 = vmatprep.mubr.f32.mxu0 0.0
    %490 = vmatmul.mubr.f32.gmra.mrb[0].mxu0 %v414
    %v491 = vpop.f32.mrb[0].mxu0
    %v492 = vadd.f32 0.0, %v491
    %v493 = vpop.f32.mrb[0].mxu0
    %494 = vmatprep.mubr.f32.mxu0 0.0
    %495 = vmatmul.mubr.f32.gmra.mrb[0].mxu0 %v417
    %v496 = vpop.f32.mrb[0].mxu0
    %v497 = vadd.f32 0.0, %v496
    %v498 = vpop.f32.mrb[0].mxu0
    %499 = vmatprep.mubr.f32.mxu0 0.0
    %500 = vmatmul.mubr.f32.gmra.mrb[0].mxu0 %v420
    %v501 = vpop.f32.mrb[0].mxu0
    %v502 = vadd.f32 0.0, %v501
    %v503 = vpop.f32.mrb[0].mxu0
    %504 = vmatprep.mubr.f32.mxu0 0.0
    %505 = vmatmul.mubr.f32.gmra.mrb[0].mxu0 %v423
    %v506 = vpop.f32.mrb[0].mxu0
    %v507 = vadd.f32 0.0, %v506
    %v508 = vpop.f32.mrb[0].mxu0
    %509 = vdwg.mxu0
    %v510 = vmul.f32 %v492, %v17
    %v511 = vmul.f32 %v497, %v18
    %v512 = vmul.f32 %v502, %v19
    %v513 = vmul.f32 %v507, %v20
    %v515 = vsel %vm73, %v366, 0
    %517 = vmatprep.subr.mxu0 0.0
    %518 = vmatpush1.msra.mxu0 %v510
    %519 = vmatprep.subr.mxu0 0.0
    %520 = vmatpush1.msra.mxu0 %v511
    %521 = vmatprep.subr.mxu0 0.0
    %522 = vmatpush1.msra.mxu0 %v512
    %523 = vmatprep.subr.mxu0 0.0
    %524 = vmatpush1.msra.mxu0 %v513
    %525 = vmatprep.subr.mxu0 0.0
    %526 = vmatpush1.msra.mxu0 0.0
    %527 = vmatprep.subr.mxu0 0.0
    %528 = vmatpush1.msra.mxu0 0.0
    %529 = vmatprep.subr.mxu0 0.0
    %530 = vmatpush1.msra.mxu0 0.0
    %531 = vmatprep.subr.mxu0 0.0
    %532 = vmatpush1.msra.mxu0 0.0
    %533 = vmatprep.subr.mxu0 0.0
    %534 = vmatpush1.msra.mxu0 0.0
    %535 = vmatprep.subr.mxu0 0.0
    %536 = vmatpush1.msra.mxu0 0.0
    %537 = vmatprep.subr.mxu0 0.0
    %538 = vmatpush1.msra.mxu0 0.0
    %539 = vmatprep.subr.mxu0 0.0
    %540 = vmatpush1.msra.mxu0 0.0
    %541 = vmatprep.subr.mxu0 0.0
    %542 = vmatpush1.msra.mxu0 0.0
    %543 = vmatprep.subr.mxu0 0.0
    %544 = vmatpush1.msra.mxu0 0.0
    %545 = vmatprep.subr.mxu0 0.0
    %546 = vmatpush1.msra.mxu0 0.0
    %547 = vmatprep.subr.mxu0 0.0
    %548 = vmatpush1.msra.mxu0 0.0
    %549 = vmatprep.subr.mxu0 0.0
    %550 = vmatpush1.msra.mxu0 0.0
    %551 = vmatprep.subr.mxu0 0.0
    %552 = vmatpush1.msra.mxu0 0.0
    %553 = vmatprep.subr.mxu0 0.0
    %554 = vmatpush1.msra.mxu0 0.0
    %555 = vmatprep.subr.mxu0 0.0
    %556 = vmatpush1.msra.mxu0 0.0
    %557 = vmatprep.subr.mxu0 0.0
    %558 = vmatpush1.msra.mxu0 0.0
    %559 = vmatprep.subr.mxu0 0.0
    %560 = vmatpush1.msra.mxu0 0.0
    %561 = vmatprep.subr.mxu0 0.0
    %562 = vmatpush1.msra.mxu0 0.0
    %563 = vmatprep.subr.mxu0 0.0
    %564 = vmatpush1.msra.mxu0 0.0
    %565 = vmatprep.subr.mxu0 0.0
    %566 = vmatpush1.msra.mxu0 0.0
    %567 = vmatprep.subr.mxu0 0.0
    %568 = vmatpush1.msra.mxu0 0.0
    %569 = vmatprep.subr.mxu0 0.0
    %570 = vmatpush1.msra.mxu0 0.0
    %571 = vmatprep.subr.mxu0 0.0
    %572 = vmatpush1.msra.mxu0 0.0
    %573 = vmatprep.subr.mxu0 0.0
    %574 = vmatpush1.msra.mxu0 0.0
    %575 = vmatprep.subr.mxu0 0.0
    %576 = vmatpush1.msra.mxu0 0.0
    %577 = vmatprep.subr.mxu0 0.0
    %578 = vmatpush1.msra.mxu0 0.0
    %579 = vmatprep.subr.mxu0 0.0
    %580 = vmatpush1.msra.mxu0 0.0
    %581 = vmatprep.mubr.f32.mxu0 0.0
    %582 = vmatmul.mubr.f32.gmra.mrb[0].mxu0 %v515
    %v583 = vpop.f32.mrb[0].mxu0
    %v584 = vadd.f32 0.0, %v583
    %v585 = vpop.f32.mrb[0].mxu0
    %586 = vdwg.mxu0
    %v587 = vsel %vm73, %v378, 0.0
    %v588 = vrot.slane %v587, 4
    %v589 = vadd.f32 %v587, %v588
    %v590 = vrot.slane %v589, 2
    %v591 = vadd.f32 %v589, %v590
    %v592 = vrot.slane %v591, 1
    %v593 = vadd.f32 %v591, %v592
    %v594 = vmul.f32 %v366, %v593
    %v596 = vsel %vm73, %v594, 0
    %598 = vmatprep.subr.mxu0 0.0
    %599 = vmatpush1.msra.mxu0 %v17
    %600 = vmatprep.subr.mxu0 0.0
    %601 = vmatpush1.msra.mxu0 %v18
    %602 = vmatprep.subr.mxu0 0.0
    %603 = vmatpush1.msra.mxu0 %v19
    %604 = vmatprep.subr.mxu0 0.0
    %605 = vmatpush1.msra.mxu0 %v20
    %606 = vmatprep.subr.mxu0 0.0
    %607 = vmatpush1.msra.mxu0 0.0
    %608 = vmatprep.subr.mxu0 0.0
    %609 = vmatpush1.msra.mxu0 0.0
    %610 = vmatprep.subr.mxu0 0.0
    %611 = vmatpush1.msra.mxu0 0.0
    %612 = vmatprep.subr.mxu0 0.0
    %613 = vmatpush1.msra.mxu0 0.0
    %614 = vmatprep.subr.mxu0 0.0
    %615 = vmatpush1.msra.mxu0 0.0
    %616 = vmatprep.subr.mxu0 0.0
    %617 = vmatpush1.msra.mxu0 0.0
    %618 = vmatprep.subr.mxu0 0.0
    %619 = vmatpush1.msra.mxu0 0.0
    %620 = vmatprep.subr.mxu0 0.0
    %621 = vmatpush1.msra.mxu0 0.0
    %622 = vmatprep.subr.mxu0 0.0
    %623 = vmatpush1.msra.mxu0 0.0
    %624 = vmatprep.subr.mxu0 0.0
    %625 = vmatpush1.msra.mxu0 0.0
    %626 = vmatprep.subr.mxu0 0.0
    %627 = vmatpush1.msra.mxu0 0.0
    %628 = vmatprep.subr.mxu0 0.0
    %629 = vmatpush1.msra.mxu0 0.0
    %630 = vmatprep.subr.mxu0 0.0
    %631 = vmatpush1.msra.mxu0 0.0
    %632 = vmatprep.subr.mxu0 0.0
    %633 = vmatpush1.msra.mxu0 0.0
    %634 = vmatprep.subr.mxu0 0.0
    %635 = vmatpush1.msra.mxu0 0.0
    %636 = vmatprep.subr.mxu0 0.0
    %637 = vmatpush1.msra.mxu0 0.0
    %638 = vmatprep.subr.mxu0 0.0
    %639 = vmatpush1.msra.mxu0 0.0
    %640 = vmatprep.subr.mxu0 0.0
    %641 = vmatpush1.msra.mxu0 0.0
    %642 = vmatprep.subr.mxu0 0.0
    %643 = vmatpush1.msra.mxu0 0.0
    %644 = vmatprep.subr.mxu0 0.0
    %645 = vmatpush1.msra.mxu0 0.0
    %646 = vmatprep.subr.mxu0 0.0
    %647 = vmatpush1.msra.mxu0 0.0
    %648 = vmatprep.subr.mxu0 0.0
    %649 = vmatpush1.msra.mxu0 0.0
    %650 = vmatprep.subr.mxu0 0.0
    %651 = vmatpush1.msra.mxu0 0.0
    %652 = vmatprep.subr.mxu0 0.0
    %653 = vmatpush1.msra.mxu0 0.0
    %654 = vmatprep.subr.mxu0 0.0
    %655 = vmatpush1.msra.mxu0 0.0
    %656 = vmatprep.subr.mxu0 0.0
    %657 = vmatpush1.msra.mxu0 0.0
    %658 = vmatprep.subr.mxu0 0.0
    %659 = vmatpush1.msra.mxu0 0.0
    %660 = vmatprep.subr.mxu0 0.0
    %661 = vmatpush1.msra.mxu0 0.0
    %662 = vmatprep.mubr.f32.mxu0 0.0
    %663 = vmatmul.mubr.f32.gmra.mrb[0].mxu0 %v596
    %v664 = vpop.f32.mrb[0].mxu0
    %v665 = vadd.f32 1e-06, %v664
    %v666 = vpop.f32.mrb[0].mxu0
    %667 = vdwg.mxu0
    %v668 = vrcp.pop %v665
    %v669 = vmul.f32 %v584, %v668
    %670 = vst.msk [vmem:[#allocation2] sm:$0xff] %vm73, %v669
    %671 = vxpose.xlu0.b32.start [1/16] %v379, 128
    %672 = vxpose.xlu0.b32.cont [2/16] 0.0, 128
    %673 = vxpose.xlu0.b32.cont [3/16] 0.0, 128
    %674 = vxpose.xlu0.b32.cont [4/16] 0.0, 128
    %675 = vxpose.xlu0.b32.cont [5/16] 0.0, 128
    %676 = vxpose.xlu0.b32.cont [6/16] 0.0, 128
    %677 = vxpose.xlu0.b32.cont [7/16] 0.0, 128
    %678 = vxpose.xlu0.b32.cont [8/16] 0.0, 128
    %679 = vxpose.xlu0.b32.cont [9/16] 0.0, 128
    %680 = vxpose.xlu0.b32.cont [10/16] 0.0, 128
    %681 = vxpose.xlu0.b32.cont [11/16] 0.0, 128
    %682 = vxpose.xlu0.b32.cont [12/16] 0.0, 128
    %683 = vxpose.xlu0.b32.cont [13/16] 0.0, 128
    %684 = vxpose.xlu0.b32.cont [14/16] 0.0, 128
    %685 = vxpose.xlu0.b32.cont [15/16] 0.0, 128
    %686 = vxpose.xlu0.b32.end [16/16] 0.0, 128
    %v687 = vpop.trf.xlu0
    %v688 = vpop.trf.xlu0
    %v689 = vpop.trf.xlu0
    %v690 = vpop.trf.xlu0
    %v691 = vpop.trf.xlu0
    %v692 = vpop.trf.xlu0
    %v693 = vpop.trf.xlu0
    %v694 = vpop.trf.xlu0
    %v695 = vpop.trf.xlu0
    %v696 = vpop.trf.xlu0
    %v697 = vpop.trf.xlu0
    %v698 = vpop.trf.xlu0
    %v699 = vpop.trf.xlu0
    %v700 = vpop.trf.xlu0
    %v701 = vpop.trf.xlu0
    %v702 = vpop.trf.xlu0
    %v704 = vsel %vm412, %v687, 0
    %v707 = vsel %vm412, %v688, 0
    %v710 = vsel %vm412, %v689, 0
    %v713 = vsel %vm412, %v690, 0
    %715 = vmatprep.subr.mxu0 0.0
    %716 = vmatpush1.msra.mxu0 %v353
    %717 = vmatprep.subr.mxu0 0.0
    %718 = vmatpush1.msra.mxu0 0.0
    %719 = vmatprep.subr.mxu0 0.0
    %720 = vmatpush1.msra.mxu0 0.0
    %721 = vmatprep.subr.mxu0 0.0
    %722 = vmatpush1.msra.mxu0 0.0
    %723 = vmatprep.subr.mxu0 0.0
    %724 = vmatpush1.msra.mxu0 0.0
    %725 = vmatprep.subr.mxu0 0.0
    %726 = vmatpush1.msra.mxu0 0.0
    %727 = vmatprep.subr.mxu0 0.0
    %728 = vmatpush1.msra.mxu0 0.0
    %729 = vmatprep.subr.mxu0 0.0
    %730 = vmatpush1.msra.mxu0 0.0
    %731 = vmatprep.subr.mxu0 0.0
    %732 = vmatpush1.msra.mxu0 0.0
    %733 = vmatprep.subr.mxu0 0.0
    %734 = vmatpush1.msra.mxu0 0.0
    %735 = vmatprep.subr.mxu0 0.0
    %736 = vmatpush1.msra.mxu0 0.0
    %737 = vmatprep.subr.mxu0 0.0
    %738 = vmatpush1.msra.mxu0 0.0
    %739 = vmatprep.subr.mxu0 0.0
    %740 = vmatpush1.msra.mxu0 0.0
    %741 = vmatprep.subr.mxu0 0.0
    %742 = vmatpush1.msra.mxu0 0.0
    %743 = vmatprep.subr.mxu0 0.0
    %744 = vmatpush1.msra.mxu0 0.0
    %745 = vmatprep.subr.mxu0 0.0
    %746 = vmatpush1.msra.mxu0 0.0
    %747 = vmatprep.subr.mxu0 0.0
    %748 = vmatpush1.msra.mxu0 0.0
    %749 = vmatprep.subr.mxu0 0.0
    %750 = vmatpush1.msra.mxu0 0.0
    %751 = vmatprep.subr.mxu0 0.0
    %752 = vmatpush1.msra.mxu0 0.0
    %753 = vmatprep.subr.mxu0 0.0
    %754 = vmatpush1.msra.mxu0 0.0
    %755 = vmatprep.subr.mxu0 0.0
    %756 = vmatpush1.msra.mxu0 0.0
    %757 = vmatprep.subr.mxu0 0.0
    %758 = vmatpush1.msra.mxu0 0.0
    %759 = vmatprep.subr.mxu0 0.0
    %760 = vmatpush1.msra.mxu0 0.0
    %761 = vmatprep.subr.mxu0 0.0
    %762 = vmatpush1.msra.mxu0 0.0
    %763 = vmatprep.subr.mxu0 0.0
    %764 = vmatpush1.msra.mxu0 0.0
    %765 = vmatprep.subr.mxu0 0.0
    %766 = vmatpush1.msra.mxu0 0.0
    %767 = vmatprep.subr.mxu0 0.0
    %768 = vmatpush1.msra.mxu0 0.0
    %769 = vmatprep.subr.mxu0 0.0
    %770 = vmatpush1.msra.mxu0 0.0
    %771 = vmatprep.subr.mxu0 0.0
    %772 = vmatpush1.msra.mxu0 0.0
    %773 = vmatprep.subr.mxu0 0.0
    %774 = vmatpush1.msra.mxu0 0.0
    %775 = vmatprep.subr.mxu0 0.0
    %776 = vmatpush1.msra.mxu0 0.0
    %777 = vmatprep.subr.mxu0 0.0
    %778 = vmatpush1.msra.mxu0 0.0
    %779 = vmatprep.mubr.f32.mxu0 0.0
    %780 = vmatmul.mubr.f32.gmra.mrb[0].mxu0 %v704
    %v781 = vpop.f32.mrb[0].mxu0
    %v782 = vadd.f32 0.0, %v781
    %v783 = vpop.f32.mrb[0].mxu0
    %784 = vmatprep.mubr.f32.mxu0 0.0
    %785 = vmatmul.mubr.f32.gmra.mrb[0].mxu0 %v707
    %v786 = vpop.f32.mrb[0].mxu0
    %v787 = vadd.f32 0.0, %v786
    %v788 = vpop.f32.mrb[0].mxu0
    %789 = vmatprep.mubr.f32.mxu0 0.0
    %790 = vmatmul.mubr.f32.gmra.mrb[0].mxu0 %v710
    %v791 = vpop.f32.mrb[0].mxu0
    %v792 = vadd.f32 0.0, %v791
    %v793 = vpop.f32.mrb[0].mxu0
    %794 = vmatprep.mubr.f32.mxu0 0.0
    %795 = vmatmul.mubr.f32.gmra.mrb[0].mxu0 %v713
    %v796 = vpop.f32.mrb[0].mxu0
    %v797 = vadd.f32 0.0, %v796
    %v798 = vpop.f32.mrb[0].mxu0
    %799 = vdwg.mxu0
    %v800 = vmul.f32 %v782, %v17
    %v801 = vmul.f32 %v787, %v18
    %v802 = vmul.f32 %v792, %v19
    %v803 = vmul.f32 %v797, %v20
    %v805 = vsel %vm73, %v367, 0
    %807 = vmatprep.subr.mxu0 0.0
    %808 = vmatpush1.msra.mxu0 %v800
    %809 = vmatprep.subr.mxu0 0.0
    %810 = vmatpush1.msra.mxu0 %v801
    %811 = vmatprep.subr.mxu0 0.0
    %812 = vmatpush1.msra.mxu0 %v802
    %813 = vmatprep.subr.mxu0 0.0
    %814 = vmatpush1.msra.mxu0 %v803
    %815 = vmatprep.subr.mxu0 0.0
    %816 = vmatpush1.msra.mxu0 0.0
    %817 = vmatprep.subr.mxu0 0.0
    %818 = vmatpush1.msra.mxu0 0.0
    %819 = vmatprep.subr.mxu0 0.0
    %820 = vmatpush1.msra.mxu0 0.0
    %821 = vmatprep.subr.mxu0 0.0
    %822 = vmatpush1.msra.mxu0 0.0
    %823 = vmatprep.subr.mxu0 0.0
    %824 = vmatpush1.msra.mxu0 0.0
    %825 = vmatprep.subr.mxu0 0.0
    %826 = vmatpush1.msra.mxu0 0.0
    %827 = vmatprep.subr.mxu0 0.0
    %828 = vmatpush1.msra.mxu0 0.0
    %829 = vmatprep.subr.mxu0 0.0
    %830 = vmatpush1.msra.mxu0 0.0
    %831 = vmatprep.subr.mxu0 0.0
    %832 = vmatpush1.msra.mxu0 0.0
    %833 = vmatprep.subr.mxu0 0.0
    %834 = vmatpush1.msra.mxu0 0.0
    %835 = vmatprep.subr.mxu0 0.0
    %836 = vmatpush1.msra.mxu0 0.0
    %837 = vmatprep.subr.mxu0 0.0
    %838 = vmatpush1.msra.mxu0 0.0
    %839 = vmatprep.subr.mxu0 0.0
    %840 = vmatpush1.msra.mxu0 0.0
    %841 = vmatprep.subr.mxu0 0.0
    %842 = vmatpush1.msra.mxu0 0.0
    %843 = vmatprep.subr.mxu0 0.0
    %844 = vmatpush1.msra.mxu0 0.0
    %845 = vmatprep.subr.mxu0 0.0
    %846 = vmatpush1.msra.mxu0 0.0
    %847 = vmatprep.subr.mxu0 0.0
    %848 = vmatpush1.msra.mxu0 0.0
    %849 = vmatprep.subr.mxu0 0.0
    %850 = vmatpush1.msra.mxu0 0.0
    %851 = vmatprep.subr.mxu0 0.0
    %852 = vmatpush1.msra.mxu0 0.0
    %853 = vmatprep.subr.mxu0 0.0
    %854 = vmatpush1.msra.mxu0 0.0
    %855 = vmatprep.subr.mxu0 0.0
    %856 = vmatpush1.msra.mxu0 0.0
    %857 = vmatprep.subr.mxu0 0.0
    %858 = vmatpush1.msra.mxu0 0.0
    %859 = vmatprep.subr.mxu0 0.0
    %860 = vmatpush1.msra.mxu0 0.0
    %861 = vmatprep.subr.mxu0 0.0
    %862 = vmatpush1.msra.mxu0 0.0
    %863 = vmatprep.subr.mxu0 0.0
    %864 = vmatpush1.msra.mxu0 0.0
    %865 = vmatprep.subr.mxu0 0.0
    %866 = vmatpush1.msra.mxu0 0.0
    %867 = vmatprep.subr.mxu0 0.0
    %868 = vmatpush1.msra.mxu0 0.0
    %869 = vmatprep.subr.mxu0 0.0
    %870 = vmatpush1.msra.mxu0 0.0
    %871 = vmatprep.mubr.f32.mxu0 0.0
    %872 = vmatmul.mubr.f32.gmra.mrb[0].mxu0 %v805
    %v873 = vpop.f32.mrb[0].mxu0
    %v874 = vadd.f32 0.0, %v873
    %v875 = vpop.f32.mrb[0].mxu0
    %876 = vdwg.mxu0
    %v877 = vsel %vm73, %v379, 0.0
    %v878 = vrot.slane %v877, 4
    %v879 = vadd.f32 %v877, %v878
    %v880 = vrot.slane %v879, 2
    %v881 = vadd.f32 %v879, %v880
    %v882 = vrot.slane %v881, 1
    %v883 = vadd.f32 %v881, %v882
    %v884 = vmul.f32 %v367, %v883
    %v886 = vsel %vm73, %v884, 0
    %888 = vmatprep.subr.mxu0 0.0
    %889 = vmatpush1.msra.mxu0 %v17
    %890 = vmatprep.subr.mxu0 0.0
    %891 = vmatpush1.msra.mxu0 %v18
    %892 = vmatprep.subr.mxu0 0.0
    %893 = vmatpush1.msra.mxu0 %v19
    %894 = vmatprep.subr.mxu0 0.0
    %895 = vmatpush1.msra.mxu0 %v20
    %896 = vmatprep.subr.mxu0 0.0
    %897 = vmatpush1.msra.mxu0 0.0
    %898 = vmatprep.subr.mxu0 0.0
    %899 = vmatpush1.msra.mxu0 0.0
    %900 = vmatprep.subr.mxu0 0.0
    %901 = vmatpush1.msra.mxu0 0.0
    %902 = vmatprep.subr.mxu0 0.0
    %903 = vmatpush1.msra.mxu0 0.0
    %904 = vmatprep.subr.mxu0 0.0
    %905 = vmatpush1.msra.mxu0 0.0
    %906 = vmatprep.subr.mxu0 0.0
    %907 = vmatpush1.msra.mxu0 0.0
    %908 = vmatprep.subr.mxu0 0.0
    %909 = vmatpush1.msra.mxu0 0.0
    %910 = vmatprep.subr.mxu0 0.0
    %911 = vmatpush1.msra.mxu0 0.0
    %912 = vmatprep.subr.mxu0 0.0
    %913 = vmatpush1.msra.mxu0 0.0
    %914 = vmatprep.subr.mxu0 0.0
    %915 = vmatpush1.msra.mxu0 0.0
    %916 = vmatprep.subr.mxu0 0.0
    %917 = vmatpush1.msra.mxu0 0.0
    %918 = vmatprep.subr.mxu0 0.0
    %919 = vmatpush1.msra.mxu0 0.0
    %920 = vmatprep.subr.mxu0 0.0
    %921 = vmatpush1.msra.mxu0 0.0
    %922 = vmatprep.subr.mxu0 0.0
    %923 = vmatpush1.msra.mxu0 0.0
    %924 = vmatprep.subr.mxu0 0.0
    %925 = vmatpush1.msra.mxu0 0.0
    %926 = vmatprep.subr.mxu0 0.0
    %927 = vmatpush1.msra.mxu0 0.0
    %928 = vmatprep.subr.mxu0 0.0
    %929 = vmatpush1.msra.mxu0 0.0
    %930 = vmatprep.subr.mxu0 0.0
    %931 = vmatpush1.msra.mxu0 0.0
    %932 = vmatprep.subr.mxu0 0.0
    %933 = vmatpush1.msra.mxu0 0.0
    %934 = vmatprep.subr.mxu0 0.0
    %935 = vmatpush1.msra.mxu0 0.0
    %936 = vmatprep.subr.mxu0 0.0
    %937 = vmatpush1.msra.mxu0 0.0
    %938 = vmatprep.subr.mxu0 0.0
    %939 = vmatpush1.msra.mxu0 0.0
    %940 = vmatprep.subr.mxu0 0.0
    %941 = vmatpush1.msra.mxu0 0.0
    %942 = vmatprep.subr.mxu0 0.0
    %943 = vmatpush1.msra.mxu0 0.0
    %944 = vmatprep.subr.mxu0 0.0
    %945 = vmatpush1.msra.mxu0 0.0
    %946 = vmatprep.subr.mxu0 0.0
    %947 = vmatpush1.msra.mxu0 0.0
    %948 = vmatprep.subr.mxu0 0.0
    %949 = vmatpush1.msra.mxu0 0.0
    %950 = vmatprep.subr.mxu0 0.0
    %951 = vmatpush1.msra.mxu0 0.0
    %952 = vmatprep.mubr.f32.mxu0 0.0
    %953 = vmatmul.mubr.f32.gmra.mrb[0].mxu0 %v886
    %v954 = vpop.f32.mrb[0].mxu0
    %v955 = vadd.f32 1e-06, %v954
    %v956 = vpop.f32.mrb[0].mxu0
    %957 = vdwg.mxu0
    %v958 = vrcp.pop %v955
    %v959 = vmul.f32 %v874, %v958
    %960 = vst.msk [vmem:[#allocation2 + $0x8] sm:$0xff] %vm73, %v959
    %v961 = vld [vmem:[#allocation2] sm:$0xff]
    %v962 = vld [vmem:[#allocation2 + $0x8] sm:$0xff]
    %v963 = vlaneseq
    %v964 = vshrl.u32 %v963, 7
    %v965 = vsub.s32 0, %v964
    %v966 = vrot.slane %v66, %v965
    %v968 = vsel %vm73, %v961, 0
    %v971 = vsel %vm73, %v962, 0
    %973 = vmatprep.subr.mxu0 0.0
    %974 = vmatpush1.msra.mxu0 %v39
    %975 = vmatprep.subr.mxu0 0.0
    %976 = vmatpush1.msra.mxu0 %v40
    %977 = vmatprep.subr.mxu0 0.0
    %978 = vmatpush1.msra.mxu0 %v41
    %979 = vmatprep.subr.mxu0 0.0
    %980 = vmatpush1.msra.mxu0 %v42
    %981 = vmatprep.subr.mxu0 0.0
    %982 = vmatpush1.msra.mxu0 0.0
    %983 = vmatprep.subr.mxu0 0.0
    %984 = vmatpush1.msra.mxu0 0.0
    %985 = vmatprep.subr.mxu0 0.0
    %986 = vmatpush1.msra.mxu0 0.0
    %987 = vmatprep.subr.mxu0 0.0
    %988 = vmatpush1.msra.mxu0 0.0
    %989 = vmatprep.subr.mxu0 0.0
    %990 = vmatpush1.msra.mxu0 0.0
    %991 = vmatprep.subr.mxu0 0.0
    %992 = vmatpush1.msra.mxu0 0.0
    %993 = vmatprep.subr.mxu0 0.0
    %994 = vmatpush1.msra.mxu0 0.0
    %995 = vmatprep.subr.mxu0 0.0
    %996 = vmatpush1.msra.mxu0 0.0
    %997 = vmatprep.subr.mxu0 0.0
    %998 = vmatpush1.msra.mxu0 0.0
    %999 = vmatprep.subr.mxu0 0.0
    %1000 = vmatpush1.msra.mxu0 0.0
    %1001 = vmatprep.subr.mxu0 0.0
    %1002 = vmatpush1.msra.mxu0 0.0
    %1003 = vmatprep.subr.mxu0 0.0
    %1004 = vmatpush1.msra.mxu0 0.0
    %1005 = vmatprep.subr.mxu0 0.0
    %1006 = vmatpush1.msra.mxu0 0.0
    %1007 = vmatprep.subr.mxu0 0.0
    %1008 = vmatpush1.msra.mxu0 0.0
    %1009 = vmatprep.subr.mxu0 0.0
    %1010 = vmatpush1.msra.mxu0 0.0
    %1011 = vmatprep.subr.mxu0 0.0
    %1012 = vmatpush1.msra.mxu0 0.0
    %1013 = vmatprep.subr.mxu0 0.0
    %1014 = vmatpush1.msra.mxu0 0.0
    %1015 = vmatprep.subr.mxu0 0.0
    %1016 = vmatpush1.msra.mxu0 0.0
    %1017 = vmatprep.subr.mxu0 0.0
    %1018 = vmatpush1.msra.mxu0 0.0
    %1019 = vmatprep.subr.mxu0 0.0
    %1020 = vmatpush1.msra.mxu0 0.0
    %1021 = vmatprep.subr.mxu0 0.0
    %1022 = vmatpush1.msra.mxu0 0.0
    %1023 = vmatprep.subr.mxu0 0.0
    %1024 = vmatpush1.msra.mxu0 0.0
    %1025 = vmatprep.subr.mxu0 0.0
    %1026 = vmatpush1.msra.mxu0 0.0
    %1027 = vmatprep.subr.mxu0 0.0
    %1028 = vmatpush1.msra.mxu0 0.0
    %1029 = vmatprep.subr.mxu0 0.0
    %1030 = vmatpush1.msra.mxu0 0.0
    %1031 = vmatprep.subr.mxu0 0.0
    %1032 = vmatpush1.msra.mxu0 0.0
    %1033 = vmatprep.subr.mxu0 0.0
    %1034 = vmatpush1.msra.mxu0 0.0
    %1035 = vmatprep.subr.mxu0 0.0
    %1036 = vmatpush1.msra.mxu0 0.0
    %1037 = vmatprep.mubr.f32.mxu0 0.0
    %1038 = vmatmul.mubr.f32.gmra.mrb[0].mxu0 %v968
    %v1039 = vpop.f32.mrb[0].mxu0
    %v1040 = vadd.f32 %v966, %v1039
    %v1041 = vpop.f32.mrb[0].mxu0
    %1042 = vmatprep.mubr.f32.mxu0 0.0
    %1043 = vmatmul.mubr.f32.gmra.mrb[0].mxu0 %v971
    %v1044 = vpop.f32.mrb[0].mxu0
    %v1045 = vadd.f32 %v966, %v1044
    %v1046 = vpop.f32.mrb[0].mxu0
    %1047 = vdwg.mxu0
    %v1048 = vadd.f32 %v25, %v1040
    %v1049 = vadd.f32 %v26, %v1045
    %v1050 = vsel %vm73, %v1048, 0.0
    %1051 = vadd.xlane.f32.xlu0 %v1050
    %v1052 = vpop.xlane.xlu0 %1051
    %v1053 = vsel %vm73, %v1049, 0.0
    %1054 = vadd.xlane.f32.xlu0 %v1053
    %v1055 = vpop.xlane.xlu0 %1054
    %v1056 = vmul.f32 %v1052, %v80
    %v1057 = vmul.f32 %v1055, %v80
    %v1058 = vsub.f32 %v1048, %v1056
    %v1059 = vsub.f32 %v1049, %v1057
    %v1060 = vmul.f32 %v1058, %v1058
    %v1061 = vmul.f32 %v1059, %v1059
    %v1062 = vsel %vm73, %v1060, 0.0
    %1063 = vadd.xlane.f32.xlu0 %v1062
    %v1064 = vpop.xlane.xlu0 %1063
    %v1065 = vsel %vm73, %v1061, 0.0
    %1066 = vadd.xlane.f32.xlu0 %v1065
    %v1067 = vpop.xlane.xlu0 %1066
    %v1068 = vmul.f32 %v1064, %v80
    %v1069 = vmul.f32 %v1067, %v80
    %v1070 = vadd.f32 %v1068, 1e-05
    %v1071 = vadd.f32 %v1069, 1e-05
    %v1072 = vrsqrt.pop %v1070
    %v1073 = vrsqrt.pop %v1071
    %v1074 = vmul.f32 %v1058, %v1072
    %v1075 = vmul.f32 %v1059, %v1073
    %v1076 = vlaneseq
    %v1077 = vshrl.u32 %v1076, 7
    %v1078 = vsub.s32 0, %v1077
    %v1079 = vrot.slane %v61, %v1078
    %v1080 = vmul.f32 %v1074, %v1079
    %v1081 = vmul.f32 %v1075, %v1079
    %v1082 = vlaneseq
    %v1083 = vshrl.u32 %v1082, 7
    %v1084 = vsub.s32 0, %v1083
    %v1085 = vrot.slane %v62, %v1084
    %v1086 = vadd.f32 %v1080, %v1085
    %v1087 = vadd.f32 %v1081, %v1085
    %v1088 = vlaneseq
    %v1089 = vshrl.u32 %v1088, 7
    %v1090 = vsub.s32 0, %v1089
    %v1091 = vrot.slane %v72, %v1090
    %v1093 = vsel %vm73, %v1086, 0
    %v1096 = vsel %vm73, %v1087, 0
    %1098 = vmatprep.subr.mxu0 0.0
    %1099 = vmatpush1.msra.mxu0 %v68
    %1100 = vmatprep.subr.mxu0 0.0
    %1101 = vmatpush1.msra.mxu0 %v69
    %1102 = vmatprep.subr.mxu0 0.0
    %1103 = vmatpush1.msra.mxu0 %v70
    %1104 = vmatprep.subr.mxu0 0.0
    %1105 = vmatpush1.msra.mxu0 %v71
    %1106 = vmatprep.subr.mxu0 0.0
    %1107 = vmatpush1.msra.mxu0 0.0
    %1108 = vmatprep.subr.mxu0 0.0
    %1109 = vmatpush1.msra.mxu0 0.0
    %1110 = vmatprep.subr.mxu0 0.0
    %1111 = vmatpush1.msra.mxu0 0.0
    %1112 = vmatprep.subr.mxu0 0.0
    %1113 = vmatpush1.msra.mxu0 0.0
    %1114 = vmatprep.subr.mxu0 0.0
    %1115 = vmatpush1.msra.mxu0 0.0
    %1116 = vmatprep.subr.mxu0 0.0
    %1117 = vmatpush1.msra.mxu0 0.0
    %1118 = vmatprep.subr.mxu0 0.0
    %1119 = vmatpush1.msra.mxu0 0.0
    %1120 = vmatprep.subr.mxu0 0.0
    %1121 = vmatpush1.msra.mxu0 0.0
    %1122 = vmatprep.subr.mxu0 0.0
    %1123 = vmatpush1.msra.mxu0 0.0
    %1124 = vmatprep.subr.mxu0 0.0
    %1125 = vmatpush1.msra.mxu0 0.0
    %1126 = vmatprep.subr.mxu0 0.0
    %1127 = vmatpush1.msra.mxu0 0.0
    %1128 = vmatprep.subr.mxu0 0.0
    %1129 = vmatpush1.msra.mxu0 0.0
    %1130 = vmatprep.subr.mxu0 0.0
    %1131 = vmatpush1.msra.mxu0 0.0
    %1132 = vmatprep.subr.mxu0 0.0
    %1133 = vmatpush1.msra.mxu0 0.0
    %1134 = vmatprep.subr.mxu0 0.0
    %1135 = vmatpush1.msra.mxu0 0.0
    %1136 = vmatprep.subr.mxu0 0.0
    %1137 = vmatpush1.msra.mxu0 0.0
    %1138 = vmatprep.subr.mxu0 0.0
    %1139 = vmatpush1.msra.mxu0 0.0
    %1140 = vmatprep.subr.mxu0 0.0
    %1141 = vmatpush1.msra.mxu0 0.0
    %1142 = vmatprep.subr.mxu0 0.0
    %1143 = vmatpush1.msra.mxu0 0.0
    %1144 = vmatprep.subr.mxu0 0.0
    %1145 = vmatpush1.msra.mxu0 0.0
    %1146 = vmatprep.subr.mxu0 0.0
    %1147 = vmatpush1.msra.mxu0 0.0
    %1148 = vmatprep.subr.mxu0 0.0
    %1149 = vmatpush1.msra.mxu0 0.0
    %1150 = vmatprep.subr.mxu0 0.0
    %1151 = vmatpush1.msra.mxu0 0.0
    %1152 = vmatprep.subr.mxu0 0.0
    %1153 = vmatpush1.msra.mxu0 0.0
    %1154 = vmatprep.subr.mxu0 0.0
    %1155 = vmatpush1.msra.mxu0 0.0
    %1156 = vmatprep.subr.mxu0 0.0
    %1157 = vmatpush1.msra.mxu0 0.0
    %1158 = vmatprep.subr.mxu0 0.0
    %1159 = vmatpush1.msra.mxu0 0.0
    %1160 = vmatprep.subr.mxu0 0.0
    %1161 = vmatpush1.msra.mxu0 0.0
    %1162 = vmatprep.mubr.f32.mxu0 0.0
    %1163 = vmatmul.mubr.f32.gmra.mrb[0].mxu0 %v1093
    %v1164 = vpop.f32.mrb[0].mxu0
    %v1165 = vadd.f32 %v1091, %v1164
    %v1166 = vpop.f32.mrb[0].mxu0
    %1167 = vmatprep.mubr.f32.mxu0 0.0
    %1168 = vmatmul.mubr.f32.gmra.mrb[0].mxu0 %v1096
    %v1169 = vpop.f32.mrb[0].mxu0
    %v1170 = vadd.f32 %v1091, %v1169
    %v1171 = vpop.f32.mrb[0].mxu0
    %1172 = vdwg.mxu0
    %v1173 = vmax.f32 %v1165, 0.0
    %v1174 = vmax.f32 %v1170, 0.0
    %1175 = vmatprep.subr.mxu0 0.0
    %1176 = vmatpush1.msra.mxu0 %v43
    %1177 = vmatprep.subr.mxu0 0.0
    %1178 = vmatpush1.msra.mxu0 %v44
    %1179 = vmatprep.subr.mxu0 0.0
    %1180 = vmatpush1.msra.mxu0 %v45
    %1181 = vmatprep.subr.mxu0 0.0
    %1182 = vmatpush1.msra.mxu0 %v46
    %1183 = vmatprep.subr.mxu0 0.0
    %1184 = vmatpush1.msra.mxu0 %v47
    %1185 = vmatprep.subr.mxu0 0.0
    %1186 = vmatpush1.msra.mxu0 %v48
    %1187 = vmatprep.subr.mxu0 0.0
    %1188 = vmatpush1.msra.mxu0 %v49
    %1189 = vmatprep.subr.mxu0 0.0
    %1190 = vmatpush1.msra.mxu0 %v50
    %1191 = vmatprep.subr.mxu0 0.0
    %1192 = vmatpush1.msra.mxu0 %v51
    %1193 = vmatprep.subr.mxu0 0.0
    %1194 = vmatpush1.msra.mxu0 %v52
    %1195 = vmatprep.subr.mxu0 0.0
    %1196 = vmatpush1.msra.mxu0 %v53
    %1197 = vmatprep.subr.mxu0 0.0
    %1198 = vmatpush1.msra.mxu0 %v54
    %1199 = vmatprep.subr.mxu0 0.0
    %1200 = vmatpush1.msra.mxu0 %v55
    %1201 = vmatprep.subr.mxu0 0.0
    %1202 = vmatpush1.msra.mxu0 %v56
    %1203 = vmatprep.subr.mxu0 0.0
    %1204 = vmatpush1.msra.mxu0 %v57
    %1205 = vmatprep.subr.mxu0 0.0
    %1206 = vmatpush1.msra.mxu0 %v58
    %1207 = vmatprep.subr.mxu0 0.0
    %1208 = vmatpush1.msra.mxu0 0.0
    %1209 = vmatprep.subr.mxu0 0.0
    %1210 = vmatpush1.msra.mxu0 0.0
    %1211 = vmatprep.subr.mxu0 0.0
    %1212 = vmatpush1.msra.mxu0 0.0
    %1213 = vmatprep.subr.mxu0 0.0
    %1214 = vmatpush1.msra.mxu0 0.0
    %1215 = vmatprep.subr.mxu0 0.0
    %1216 = vmatpush1.msra.mxu0 0.0
    %1217 = vmatprep.subr.mxu0 0.0
    %1218 = vmatpush1.msra.mxu0 0.0
    %1219 = vmatprep.subr.mxu0 0.0
    %1220 = vmatpush1.msra.mxu0 0.0
    %1221 = vmatprep.subr.mxu0 0.0
    %1222 = vmatpush1.msra.mxu0 0.0
    %1223 = vmatprep.subr.mxu0 0.0
    %1224 = vmatpush1.msra.mxu0 0.0
    %1225 = vmatprep.subr.mxu0 0.0
    %1226 = vmatpush1.msra.mxu0 0.0
    %1227 = vmatprep.subr.mxu0 0.0
    %1228 = vmatpush1.msra.mxu0 0.0
    %1229 = vmatprep.subr.mxu0 0.0
    %1230 = vmatpush1.msra.mxu0 0.0
    %1231 = vmatprep.subr.mxu0 0.0
    %1232 = vmatpush1.msra.mxu0 0.0
    %1233 = vmatprep.subr.mxu0 0.0
    %1234 = vmatpush1.msra.mxu0 0.0
    %1235 = vmatprep.subr.mxu0 0.0
    %1236 = vmatpush1.msra.mxu0 0.0
    %1237 = vmatprep.subr.mxu0 0.0
    %1238 = vmatpush1.msra.mxu0 0.0
    %1239 = vmatprep.mubr.f32.mxu0 0.0
    %1240 = vmatmul.mubr.f32.gmra.mrb[0].mxu0 %v1173
    %v1241 = vpop.f32.mrb[0].mxu0
    %v1242 = vadd.f32 0.0, %v1241
    %v1243 = vpop.f32.mrb[0].mxu0
    %1244 = vmatprep.mubr.f32.mxu0 0.0
    %1245 = vmatmul.mubr.f32.gmra.mrb[0].mxu0 %v1174
    %v1246 = vpop.f32.mrb[0].mxu0
    %v1247 = vadd.f32 0.0, %v1246
    %v1248 = vpop.f32.mrb[0].mxu0
    %1249 = vdwg.mxu0
    %v1250 = vadd.f32 %v1048, %v1242
    %v1251 = vadd.f32 %v1049, %v1247
    %v1252 = vlaneseq
    %v1253 = vshrl.u32 %v1252, 7
    %v1254 = vsub.s32 0, %v1253
    %v1255 = vrot.slane %v67, %v1254
    %v1256 = vadd.f32 %v1250, %v1255
    %v1257 = vadd.f32 %v1251, %v1255
    %v1258 = vld [vmem:[%s1 + $0x130] sm:$0xff]
    %v1259 = vld [vmem:[%s1 + $0x138] sm:$0xff]
    %v1260 = vld [vmem:[%s1 + $0x140] sm:$0xff]
    %v1261 = vld [vmem:[%s1 + $0x148] sm:$0xff]
    %v1262 = vld [vmem:[%s1 + $0x150] sm:$0xff]
    %v1263 = vld [vmem:[%s1 + $0x158] sm:$0xff]
    %v1264 = vld [vmem:[%s1 + $0x160] sm:$0xff]
    %v1265 = vld [vmem:[%s1 + $0x168] sm:$0xff]
    %v1266 = vld [vmem:[%s1 + $0x170] sm:$0xff]
    %v1267 = vld [vmem:[%s1 + $0x178] sm:$0xff]
    %v1268 = vld [vmem:[%s1 + $0x180] sm:$0xff]
    %v1269 = vld [vmem:[%s1 + $0x188] sm:$0xff]
    %v1270 = vld [vmem:[%s1 + $0x190] sm:$0xff]
    %v1271 = vld [vmem:[%s1 + $0x198] sm:$0xff]
    %v1272 = vld [vmem:[%s1 + $0x1a0] sm:$0xff]
    %v1273 = vld [vmem:[%s1 + $0x1a8] sm:$0xff]
    %v1274 = vld [vmem:[%s1 + $0x1b0] sm:$0xff]
    %v1275 = vld [vmem:[%s1 + $0x1b8] sm:$0xff]
    %v1276 = vld [vmem:[%s1 + $0x1c0] sm:$0xff]
    %v1277 = vld [vmem:[%s1 + $0x1c8] sm:$0xff]
    %v1278 = vld [vmem:[%s1 + $0x1d0] sm:$0xff]
    %v1279 = vld [vmem:[%s1 + $0x1d8] sm:$0xff]
    %v1280 = vld [vmem:[%s1 + $0x1e0] sm:$0xff]
    %v1281 = vld [vmem:[%s1 + $0x1e8] sm:$0xff]
    %v1282 = vld [vmem:[%s1 + $0x1f0] sm:$0xff]
    %v1283 = vld [vmem:[%s1 + $0x1f8] sm:$0xff]
    %v1284 = vld [vmem:[%s1 + $0x200] sm:$0xff]
    %v1285 = vld [vmem:[%s1 + $0x208] sm:$0xff]
    %v1286 = vld [vmem:[%s1 + $0x210] sm:$0xff]
    %v1287 = vld [vmem:[%s1 + $0x218] sm:$0xff]
    %v1288 = vld [vmem:[%s1 + $0x220] sm:$0xff]
    %v1289 = vld [vmem:[%s1 + $0x228] sm:$0xff]
    %v1290 = vld [vmem:[%s1 + $0x23b] sm:$0x1]
    %v1291 = vld [vmem:[%s1 + $0x23c] sm:$0x1]
    %v1292 = vld [vmem:[%s1 + $0x23d] sm:$0x1]
    %v1293 = vld [vmem:[%s1 + $0x23e] sm:$0x1]
    %v1294 = vld [vmem:[%s1 + $0x23f] sm:$0x1]
    %v1295 = vld [vmem:[%s1 + $0x240] sm:$0x1]
    %v1296 = vld [vmem:[%s1 + $0x241] sm:$0x1]
    %v1297 = vld [vmem:[%s1 + $0x242] sm:$0x1]
    %v1298 = vld [vmem:[%s1 + $0x243] sm:$0x1]
    %v1299 = vld [vmem:[%s2 + $0x20] sm:$0xff]
    %v1300 = vld [vmem:[%s2 + $0x28] sm:$0xff]
    %v1301 = vld [vmem:[%s2 + $0x30] sm:$0xff]
    %v1302 = vld [vmem:[%s2 + $0x38] sm:$0xff]
    %v1303 = vld [vmem:[%s2 + $0x41] sm:$0x1]
    %v1304 = vsel %vm73, %v1256, 0.0
    %1305 = vadd.xlane.f32.xlu0 %v1304
    %v1306 = vpop.xlane.xlu0 %1305
    %v1307 = vsel %vm73, %v1257, 0.0
    %1308 = vadd.xlane.f32.xlu0 %v1307
    %v1309 = vpop.xlane.xlu0 %1308
    %v1310 = vmul.f32 %v1306, %v80
    %v1311 = vmul.f32 %v1309, %v80
    %v1312 = vsub.f32 %v1256, %v1310
    %v1313 = vsub.f32 %v1257, %v1311
    %v1314 = vmul.f32 %v1312, %v1312
    %v1315 = vmul.f32 %v1313, %v1313
    %v1316 = vsel %vm73, %v1314, 0.0
    %1317 = vadd.xlane.f32.xlu0 %v1316
    %v1318 = vpop.xlane.xlu0 %1317
    %v1319 = vsel %vm73, %v1315, 0.0
    %1320 = vadd.xlane.f32.xlu0 %v1319
    %v1321 = vpop.xlane.xlu0 %1320
    %v1322 = vmul.f32 %v1318, %v80
    %v1323 = vmul.f32 %v1321, %v80
    %v1324 = vadd.f32 %v1322, 1e-05
    %v1325 = vadd.f32 %v1323, 1e-05
    %v1326 = vrsqrt.pop %v1324
    %v1327 = vrsqrt.pop %v1325
    %v1328 = vmul.f32 %v1312, %v1326
    %v1329 = vmul.f32 %v1313, %v1327
    %v1330 = vlaneseq
    %v1331 = vshrl.u32 %v1330, 7
    %v1332 = vsub.s32 0, %v1331
    %v1333 = vrot.slane %v1290, %v1332
    %v1334 = vmul.f32 %v1328, %v1333
    %v1335 = vmul.f32 %v1329, %v1333
    %v1336 = vlaneseq
    %v1337 = vshrl.u32 %v1336, 7
    %v1338 = vsub.s32 0, %v1337
    %v1339 = vrot.slane %v1291, %v1338
    %v1340 = vadd.f32 %v1334, %v1339
    %v1341 = vadd.f32 %v1335, %v1339
    %v1342 = vlaneseq
    %v1343 = vshrl.u32 %v1342, 7
    %v1344 = vsub.s32 0, %v1343
    %v1345 = vrot.slane %v1294, %v1344
    %v1347 = vsel %vm73, %v1340, 0
    %v1350 = vsel %vm73, %v1341, 0
    %1352 = vmatprep.subr.mxu0 0.0
    %1353 = vmatpush1.msra.mxu0 %v1258
    %1354 = vmatprep.subr.mxu0 0.0
    %1355 = vmatpush1.msra.mxu0 %v1259
    %1356 = vmatprep.subr.mxu0 0.0
    %1357 = vmatpush1.msra.mxu0 %v1260
    %1358 = vmatprep.subr.mxu0 0.0
    %1359 = vmatpush1.msra.mxu0 %v1261
    %1360 = vmatprep.subr.mxu0 0.0
    %1361 = vmatpush1.msra.mxu0 0.0
    %1362 = vmatprep.subr.mxu0 0.0
    %1363 = vmatpush1.msra.mxu0 0.0
    %1364 = vmatprep.subr.mxu0 0.0
    %1365 = vmatpush1.msra.mxu0 0.0
    %1366 = vmatprep.subr.mxu0 0.0
    %1367 = vmatpush1.msra.mxu0 0.0
    %1368 = vmatprep.subr.mxu0 0.0
    %1369 = vmatpush1.msra.mxu0 0.0
    %1370 = vmatprep.subr.mxu0 0.0
    %1371 = vmatpush1.msra.mxu0 0.0
    %1372 = vmatprep.subr.mxu0 0.0
    %1373 = vmatpush1.msra.mxu0 0.0
    %1374 = vmatprep.subr.mxu0 0.0
    %1375 = vmatpush1.msra.mxu0 0.0
    %1376 = vmatprep.subr.mxu0 0.0
    %1377 = vmatpush1.msra.mxu0 0.0
    %1378 = vmatprep.subr.mxu0 0.0
    %1379 = vmatpush1.msra.mxu0 0.0
    %1380 = vmatprep.subr.mxu0 0.0
    %1381 = vmatpush1.msra.mxu0 0.0
    %1382 = vmatprep.subr.mxu0 0.0
    %1383 = vmatpush1.msra.mxu0 0.0
    %1384 = vmatprep.subr.mxu0 0.0
    %1385 = vmatpush1.msra.mxu0 0.0
    %1386 = vmatprep.subr.mxu0 0.0
    %1387 = vmatpush1.msra.mxu0 0.0
    %1388 = vmatprep.subr.mxu0 0.0
    %1389 = vmatpush1.msra.mxu0 0.0
    %1390 = vmatprep.subr.mxu0 0.0
    %1391 = vmatpush1.msra.mxu0 0.0
    %1392 = vmatprep.subr.mxu0 0.0
    %1393 = vmatpush1.msra.mxu0 0.0
    %1394 = vmatprep.subr.mxu0 0.0
    %1395 = vmatpush1.msra.mxu0 0.0
    %1396 = vmatprep.subr.mxu0 0.0
    %1397 = vmatpush1.msra.mxu0 0.0
    %1398 = vmatprep.subr.mxu0 0.0
    %1399 = vmatpush1.msra.mxu0 0.0
    %1400 = vmatprep.subr.mxu0 0.0
    %1401 = vmatpush1.msra.mxu0 0.0
    %1402 = vmatprep.subr.mxu0 0.0
    %1403 = vmatpush1.msra.mxu0 0.0
    %1404 = vmatprep.subr.mxu0 0.0
    %1405 = vmatpush1.msra.mxu0 0.0
    %1406 = vmatprep.subr.mxu0 0.0
    %1407 = vmatpush1.msra.mxu0 0.0
    %1408 = vmatprep.subr.mxu0 0.0
    %1409 = vmatpush1.msra.mxu0 0.0
    %1410 = vmatprep.subr.mxu0 0.0
    %1411 = vmatpush1.msra.mxu0 0.0
    %1412 = vmatprep.subr.mxu0 0.0
    %1413 = vmatpush1.msra.mxu0 0.0
    %1414 = vmatprep.subr.mxu0 0.0
    %1415 = vmatpush1.msra.mxu0 0.0
    %1416 = vmatprep.mubr.f32.mxu0 0.0
    %1417 = vmatmul.mubr.f32.gmra.mrb[0].mxu0 %v1347
    %v1418 = vpop.f32.mrb[0].mxu0
    %v1419 = vadd.f32 %v1345, %v1418
    %v1420 = vpop.f32.mrb[0].mxu0
    %1421 = vmatprep.mubr.f32.mxu0 0.0
    %1422 = vmatmul.mubr.f32.gmra.mrb[0].mxu0 %v1350
    %v1423 = vpop.f32.mrb[0].mxu0
    %v1424 = vadd.f32 %v1345, %v1423
    %v1425 = vpop.f32.mrb[0].mxu0
    %1426 = vdwg.mxu0
    %v1427 = vlaneseq
    %v1428 = vshrl.u32 %v1427, 7
    %v1429 = vsub.s32 0, %v1428
    %v1430 = vrot.slane %v1295, %v1429
    %1431 = vmatprep.subr.mxu0 0.0
    %1432 = vmatpush1.msra.mxu0 %v1262
    %1433 = vmatprep.subr.mxu0 0.0
    %1434 = vmatpush1.msra.mxu0 %v1263
    %1435 = vmatprep.subr.mxu0 0.0
    %1436 = vmatpush1.msra.mxu0 %v1264
    %1437 = vmatprep.subr.mxu0 0.0
    %1438 = vmatpush1.msra.mxu0 %v1265
    %1439 = vmatprep.subr.mxu0 0.0
    %1440 = vmatpush1.msra.mxu0 0.0
    %1441 = vmatprep.subr.mxu0 0.0
    %1442 = vmatpush1.msra.mxu0 0.0
    %1443 = vmatprep.subr.mxu0 0.0
    %1444 = vmatpush1.msra.mxu0 0.0
    %1445 = vmatprep.subr.mxu0 0.0
    %1446 = vmatpush1.msra.mxu0 0.0
    %1447 = vmatprep.subr.mxu0 0.0
    %1448 = vmatpush1.msra.mxu0 0.0
    %1449 = vmatprep.subr.mxu0 0.0
    %1450 = vmatpush1.msra.mxu0 0.0
    %1451 = vmatprep.subr.mxu0 0.0
    %1452 = vmatpush1.msra.mxu0 0.0
    %1453 = vmatprep.subr.mxu0 0.0
    %1454 = vmatpush1.msra.mxu0 0.0
    %1455 = vmatprep.subr.mxu0 0.0
    %1456 = vmatpush1.msra.mxu0 0.0
    %1457 = vmatprep.subr.mxu0 0.0
    %1458 = vmatpush1.msra.mxu0 0.0
    %1459 = vmatprep.subr.mxu0 0.0
    %1460 = vmatpush1.msra.mxu0 0.0
    %1461 = vmatprep.subr.mxu0 0.0
    %1462 = vmatpush1.msra.mxu0 0.0
    %1463 = vmatprep.subr.mxu0 0.0
    %1464 = vmatpush1.msra.mxu0 0.0
    %1465 = vmatprep.subr.mxu0 0.0
    %1466 = vmatpush1.msra.mxu0 0.0
    %1467 = vmatprep.subr.mxu0 0.0
    %1468 = vmatpush1.msra.mxu0 0.0
    %1469 = vmatprep.subr.mxu0 0.0
    %1470 = vmatpush1.msra.mxu0 0.0
    %1471 = vmatprep.subr.mxu0 0.0
    %1472 = vmatpush1.msra.mxu0 0.0
    %1473 = vmatprep.subr.mxu0 0.0
    %1474 = vmatpush1.msra.mxu0 0.0
    %1475 = vmatprep.subr.mxu0 0.0
    %1476 = vmatpush1.msra.mxu0 0.0
    %1477 = vmatprep.subr.mxu0 0.0
    %1478 = vmatpush1.msra.mxu0 0.0
    %1479 = vmatprep.subr.mxu0 0.0
    %1480 = vmatpush1.msra.mxu0 0.0
    %1481 = vmatprep.subr.mxu0 0.0
    %1482 = vmatpush1.msra.mxu0 0.0
    %1483 = vmatprep.subr.mxu0 0.0
    %1484 = vmatpush1.msra.mxu0 0.0
    %1485 = vmatprep.subr.mxu0 0.0
    %1486 = vmatpush1.msra.mxu0 0.0
    %1487 = vmatprep.subr.mxu0 0.0
    %1488 = vmatpush1.msra.mxu0 0.0
    %1489 = vmatprep.subr.mxu0 0.0
    %1490 = vmatpush1.msra.mxu0 0.0
    %1491 = vmatprep.subr.mxu0 0.0
    %1492 = vmatpush1.msra.mxu0 0.0
    %1493 = vmatprep.subr.mxu0 0.0
    %1494 = vmatpush1.msra.mxu0 0.0
    %1495 = vmatprep.mubr.f32.mxu0 0.0
    %1496 = vmatmul.mubr.f32.gmra.mrb[0].mxu0 %v1347
    %v1497 = vpop.f32.mrb[0].mxu0
    %v1498 = vadd.f32 %v1430, %v1497
    %v1499 = vpop.f32.mrb[0].mxu0
    %1500 = vmatprep.mubr.f32.mxu0 0.0
    %1501 = vmatmul.mubr.f32.gmra.mrb[0].mxu0 %v1350
    %v1502 = vpop.f32.mrb[0].mxu0
    %v1503 = vadd.f32 %v1430, %v1502
    %v1504 = vpop.f32.mrb[0].mxu0
    %1505 = vdwg.mxu0
    %v1506 = vlaneseq
    %v1507 = vshrl.u32 %v1506, 7
    %v1508 = vsub.s32 0, %v1507
    %v1509 = vrot.slane %v1296, %v1508
    %1510 = vmatprep.subr.mxu0 0.0
    %1511 = vmatpush1.msra.mxu0 %v1266
    %1512 = vmatprep.subr.mxu0 0.0
    %1513 = vmatpush1.msra.mxu0 %v1267
    %1514 = vmatprep.subr.mxu0 0.0
    %1515 = vmatpush1.msra.mxu0 %v1268
    %1516 = vmatprep.subr.mxu0 0.0
    %1517 = vmatpush1.msra.mxu0 %v1269
    %1518 = vmatprep.subr.mxu0 0.0
    %1519 = vmatpush1.msra.mxu0 0.0
    %1520 = vmatprep.subr.mxu0 0.0
    %1521 = vmatpush1.msra.mxu0 0.0
    %1522 = vmatprep.subr.mxu0 0.0
    %1523 = vmatpush1.msra.mxu0 0.0
    %1524 = vmatprep.subr.mxu0 0.0
    %1525 = vmatpush1.msra.mxu0 0.0
    %1526 = vmatprep.subr.mxu0 0.0
    %1527 = vmatpush1.msra.mxu0 0.0
    %1528 = vmatprep.subr.mxu0 0.0
    %1529 = vmatpush1.msra.mxu0 0.0
    %1530 = vmatprep.subr.mxu0 0.0
    %1531 = vmatpush1.msra.mxu0 0.0
    %1532 = vmatprep.subr.mxu0 0.0
    %1533 = vmatpush1.msra.mxu0 0.0
    %1534 = vmatprep.subr.mxu0 0.0
    %1535 = vmatpush1.msra.mxu0 0.0
    %1536 = vmatprep.subr.mxu0 0.0
    %1537 = vmatpush1.msra.mxu0 0.0
    %1538 = vmatprep.subr.mxu0 0.0
    %1539 = vmatpush1.msra.mxu0 0.0
    %1540 = vmatprep.subr.mxu0 0.0
    %1541 = vmatpush1.msra.mxu0 0.0
    %1542 = vmatprep.subr.mxu0 0.0
    %1543 = vmatpush1.msra.mxu0 0.0
    %1544 = vmatprep.subr.mxu0 0.0
    %1545 = vmatpush1.msra.mxu0 0.0
    %1546 = vmatprep.subr.mxu0 0.0
    %1547 = vmatpush1.msra.mxu0 0.0
    %1548 = vmatprep.subr.mxu0 0.0
    %1549 = vmatpush1.msra.mxu0 0.0
    %1550 = vmatprep.subr.mxu0 0.0
    %1551 = vmatpush1.msra.mxu0 0.0
    %1552 = vmatprep.subr.mxu0 0.0
    %1553 = vmatpush1.msra.mxu0 0.0
    %1554 = vmatprep.subr.mxu0 0.0
    %1555 = vmatpush1.msra.mxu0 0.0
    %1556 = vmatprep.subr.mxu0 0.0
    %1557 = vmatpush1.msra.mxu0 0.0
    %1558 = vmatprep.subr.mxu0 0.0
    %1559 = vmatpush1.msra.mxu0 0.0
    %1560 = vmatprep.subr.mxu0 0.0
    %1561 = vmatpush1.msra.mxu0 0.0
    %1562 = vmatprep.subr.mxu0 0.0
    %1563 = vmatpush1.msra.mxu0 0.0
    %1564 = vmatprep.subr.mxu0 0.0
    %1565 = vmatpush1.msra.mxu0 0.0
    %1566 = vmatprep.subr.mxu0 0.0
    %1567 = vmatpush1.msra.mxu0 0.0
    %1568 = vmatprep.subr.mxu0 0.0
    %1569 = vmatpush1.msra.mxu0 0.0
    %1570 = vmatprep.subr.mxu0 0.0
    %1571 = vmatpush1.msra.mxu0 0.0
    %1572 = vmatprep.subr.mxu0 0.0
    %1573 = vmatpush1.msra.mxu0 0.0
    %1574 = vmatprep.mubr.f32.mxu0 0.0
    %1575 = vmatmul.mubr.f32.gmra.mrb[0].mxu0 %v1347
    %v1576 = vpop.f32.mrb[0].mxu0
    %v1577 = vadd.f32 %v1509, %v1576
    %v1578 = vpop.f32.mrb[0].mxu0
    %1579 = vmatprep.mubr.f32.mxu0 0.0
    %1580 = vmatmul.mubr.f32.gmra.mrb[0].mxu0 %v1350
    %v1581 = vpop.f32.mrb[0].mxu0
    %v1582 = vadd.f32 %v1509, %v1581
    %v1583 = vpop.f32.mrb[0].mxu0
    %1584 = vdwg.mxu0
    %vm1585 = vcmp.gt.f32.partialorder %v1419, 0.0
    %vm1586 = vcmp.gt.f32.partialorder %v1424, 0.0
    %v1587 = vadd.f32 %v1419, 1.0
    %v1588 = vadd.f32 %v1424, 1.0
    %v1589 = vmin.f32 %v1419, 0.0
    %v1590 = vmin.f32 %v1424, 0.0
    %v1591 = vmul.f32 %v1589, 1.442695
    %v1592 = vpow.pop %v1591
    %v1593 = vmul.f32 %v1590, 1.442695
    %v1594 = vpow.pop %v1593
    %v1595 = vsel %vm1585, %v1587, %v1592
    %v1596 = vsel %vm1586, %v1588, %v1594
    %vm1597 = vcmp.gt.f32.partialorder %v1498, 0.0
    %vm1598 = vcmp.gt.f32.partialorder %v1503, 0.0
    %v1599 = vadd.f32 %v1498, 1.0
    %v1600 = vadd.f32 %v1503, 1.0
    %v1601 = vmin.f32 %v1498, 0.0
    %v1602 = vmin.f32 %v1503, 0.0
    %v1603 = vmul.f32 %v1601, 1.442695
    %v1604 = vpow.pop %v1603
    %v1605 = vmul.f32 %v1602, 1.442695
    %v1606 = vpow.pop %v1605
    %v1607 = vsel %vm1597, %v1599, %v1604
    %v1608 = vsel %vm1598, %v1600, %v1606
    %1609 = vxpose.xlu0.b32.start [1/16] %v1607, 128
    %1610 = vxpose.xlu0.b32.cont [2/16] 0.0, 128
    %1611 = vxpose.xlu0.b32.cont [3/16] 0.0, 128
    %1612 = vxpose.xlu0.b32.cont [4/16] 0.0, 128
    %1613 = vxpose.xlu0.b32.cont [5/16] 0.0, 128
    %1614 = vxpose.xlu0.b32.cont [6/16] 0.0, 128
    %1615 = vxpose.xlu0.b32.cont [7/16] 0.0, 128
    %1616 = vxpose.xlu0.b32.cont [8/16] 0.0, 128
    %1617 = vxpose.xlu0.b32.cont [9/16] 0.0, 128
    %1618 = vxpose.xlu0.b32.cont [10/16] 0.0, 128
    %1619 = vxpose.xlu0.b32.cont [11/16] 0.0, 128
    %1620 = vxpose.xlu0.b32.cont [12/16] 0.0, 128
    %1621 = vxpose.xlu0.b32.cont [13/16] 0.0, 128
    %1622 = vxpose.xlu0.b32.cont [14/16] 0.0, 128
    %1623 = vxpose.xlu0.b32.cont [15/16] 0.0, 128
    %1624 = vxpose.xlu0.b32.end [16/16] 0.0, 128
    %v1625 = vpop.trf.xlu0
    %v1626 = vpop.trf.xlu0
    %v1627 = vpop.trf.xlu0
    %v1628 = vpop.trf.xlu0
    %v1629 = vpop.trf.xlu0
    %v1630 = vpop.trf.xlu0
    %v1631 = vpop.trf.xlu0
    %v1632 = vpop.trf.xlu0
    %v1633 = vpop.trf.xlu0
    %v1634 = vpop.trf.xlu0
    %v1635 = vpop.trf.xlu0
    %v1636 = vpop.trf.xlu0
    %v1637 = vpop.trf.xlu0
    %v1638 = vpop.trf.xlu0
    %v1639 = vpop.trf.xlu0
    %v1640 = vpop.trf.xlu0
    %v1642 = vsel %vm412, %v1625, 0
    %v1645 = vsel %vm412, %v1626, 0
    %v1648 = vsel %vm412, %v1627, 0
    %v1651 = vsel %vm412, %v1628, 0
    %1653 = vmatprep.subr.mxu0 0.0
    %1654 = vmatpush1.msra.mxu0 %v1577
    %1655 = vmatprep.subr.mxu0 0.0
    %1656 = vmatpush1.msra.mxu0 0.0
    %1657 = vmatprep.subr.mxu0 0.0
    %1658 = vmatpush1.msra.mxu0 0.0
    %1659 = vmatprep.subr.mxu0 0.0
    %1660 = vmatpush1.msra.mxu0 0.0
    %1661 = vmatprep.subr.mxu0 0.0
    %1662 = vmatpush1.msra.mxu0 0.0
    %1663 = vmatprep.subr.mxu0 0.0
    %1664 = vmatpush1.msra.mxu0 0.0
    %1665 = vmatprep.subr.mxu0 0.0
    %1666 = vmatpush1.msra.mxu0 0.0
    %1667 = vmatprep.subr.mxu0 0.0
    %1668 = vmatpush1.msra.mxu0 0.0
    %1669 = vmatprep.subr.mxu0 0.0
    %1670 = vmatpush1.msra.mxu0 0.0
    %1671 = vmatprep.subr.mxu0 0.0
    %1672 = vmatpush1.msra.mxu0 0.0
    %1673 = vmatprep.subr.mxu0 0.0
    %1674 = vmatpush1.msra.mxu0 0.0
    %1675 = vmatprep.subr.mxu0 0.0
    %1676 = vmatpush1.msra.mxu0 0.0
    %1677 = vmatprep.subr.mxu0 0.0
    %1678 = vmatpush1.msra.mxu0 0.0
    %1679 = vmatprep.subr.mxu0 0.0
    %1680 = vmatpush1.msra.mxu0 0.0
    %1681 = vmatprep.subr.mxu0 0.0
    %1682 = vmatpush1.msra.mxu0 0.0
    %1683 = vmatprep.subr.mxu0 0.0
    %1684 = vmatpush1.msra.mxu0 0.0
    %1685 = vmatprep.subr.mxu0 0.0
    %1686 = vmatpush1.msra.mxu0 0.0
    %1687 = vmatprep.subr.mxu0 0.0
    %1688 = vmatpush1.msra.mxu0 0.0
    %1689 = vmatprep.subr.mxu0 0.0
    %1690 = vmatpush1.msra.mxu0 0.0
    %1691 = vmatprep.subr.mxu0 0.0
    %1692 = vmatpush1.msra.mxu0 0.0
    %1693 = vmatprep.subr.mxu0 0.0
    %1694 = vmatpush1.msra.mxu0 0.0
    %1695 = vmatprep.subr.mxu0 0.0
    %1696 = vmatpush1.msra.mxu0 0.0
    %1697 = vmatprep.subr.mxu0 0.0
    %1698 = vmatpush1.msra.mxu0 0.0
    %1699 = vmatprep.subr.mxu0 0.0
    %1700 = vmatpush1.msra.mxu0 0.0
    %1701 = vmatprep.subr.mxu0 0.0
    %1702 = vmatpush1.msra.mxu0 0.0
    %1703 = vmatprep.subr.mxu0 0.0
    %1704 = vmatpush1.msra.mxu0 0.0
    %1705 = vmatprep.subr.mxu0 0.0
    %1706 = vmatpush1.msra.mxu0 0.0
    %1707 = vmatprep.subr.mxu0 0.0
    %1708 = vmatpush1.msra.mxu0 0.0
    %1709 = vmatprep.subr.mxu0 0.0
    %1710 = vmatpush1.msra.mxu0 0.0
    %1711 = vmatprep.subr.mxu0 0.0
    %1712 = vmatpush1.msra.mxu0 0.0
    %1713 = vmatprep.subr.mxu0 0.0
    %1714 = vmatpush1.msra.mxu0 0.0
    %1715 = vmatprep.subr.mxu0 0.0
    %1716 = vmatpush1.msra.mxu0 0.0
    %1717 = vmatprep.mubr.f32.mxu0 0.0
    %1718 = vmatmul.mubr.f32.gmra.mrb[0].mxu0 %v1642
    %v1719 = vpop.f32.mrb[0].mxu0
    %v1720 = vadd.f32 0.0, %v1719
    %v1721 = vpop.f32.mrb[0].mxu0
    %1722 = vmatprep.mubr.f32.mxu0 0.0
    %1723 = vmatmul.mubr.f32.gmra.mrb[0].mxu0 %v1645
    %v1724 = vpop.f32.mrb[0].mxu0
    %v1725 = vadd.f32 0.0, %v1724
    %v1726 = vpop.f32.mrb[0].mxu0
    %1727 = vmatprep.mubr.f32.mxu0 0.0
    %1728 = vmatmul.mubr.f32.gmra.mrb[0].mxu0 %v1648
    %v1729 = vpop.f32.mrb[0].mxu0
    %v1730 = vadd.f32 0.0, %v1729
    %v1731 = vpop.f32.mrb[0].mxu0
    %1732 = vmatprep.mubr.f32.mxu0 0.0
    %1733 = vmatmul.mubr.f32.gmra.mrb[0].mxu0 %v1651
    %v1734 = vpop.f32.mrb[0].mxu0
    %v1735 = vadd.f32 0.0, %v1734
    %v1736 = vpop.f32.mrb[0].mxu0
    %1737 = vdwg.mxu0
    %v1738 = vmul.f32 %v1720, %v17
    %v1739 = vmul.f32 %v1725, %v18
    %v1740 = vmul.f32 %v1730, %v19
    %v1741 = vmul.f32 %v1735, %v20
    %v1743 = vsel %vm73, %v1595, 0
    %1745 = vmatprep.subr.mxu0 0.0
    %1746 = vmatpush1.msra.mxu0 %v1738
    %1747 = vmatprep.subr.mxu0 0.0
    %1748 = vmatpush1.msra.mxu0 %v1739
    %1749 = vmatprep.subr.mxu0 0.0
    %1750 = vmatpush1.msra.mxu0 %v1740
    %1751 = vmatprep.subr.mxu0 0.0
    %1752 = vmatpush1.msra.mxu0 %v1741
    %1753 = vmatprep.subr.mxu0 0.0
    %1754 = vmatpush1.msra.mxu0 0.0
    %1755 = vmatprep.subr.mxu0 0.0
    %1756 = vmatpush1.msra.mxu0 0.0
    %1757 = vmatprep.subr.mxu0 0.0
    %1758 = vmatpush1.msra.mxu0 0.0
    %1759 = vmatprep.subr.mxu0 0.0
    %1760 = vmatpush1.msra.mxu0 0.0
    %1761 = vmatprep.subr.mxu0 0.0
    %1762 = vmatpush1.msra.mxu0 0.0
    %1763 = vmatprep.subr.mxu0 0.0
    %1764 = vmatpush1.msra.mxu0 0.0
    %1765 = vmatprep.subr.mxu0 0.0
    %1766 = vmatpush1.msra.mxu0 0.0
    %1767 = vmatprep.subr.mxu0 0.0
    %1768 = vmatpush1.msra.mxu0 0.0
    %1769 = vmatprep.subr.mxu0 0.0
    %1770 = vmatpush1.msra.mxu0 0.0
    %1771 = vmatprep.subr.mxu0 0.0
    %1772 = vmatpush1.msra.mxu0 0.0
    %1773 = vmatprep.subr.mxu0 0.0
    %1774 = vmatpush1.msra.mxu0 0.0
    %1775 = vmatprep.subr.mxu0 0.0
    %1776 = vmatpush1.msra.mxu0 0.0
    %1777 = vmatprep.subr.mxu0 0.0
    %1778 = vmatpush1.msra.mxu0 0.0
    %1779 = vmatprep.subr.mxu0 0.0
    %1780 = vmatpush1.msra.mxu0 0.0
    %1781 = vmatprep.subr.mxu0 0.0
    %1782 = vmatpush1.msra.mxu0 0.0
    %1783 = vmatprep.subr.mxu0 0.0
    %1784 = vmatpush1.msra.mxu0 0.0
    %1785 = vmatprep.subr.mxu0 0.0
    %1786 = vmatpush1.msra.mxu0 0.0
    %1787 = vmatprep.subr.mxu0 0.0
    %1788 = vmatpush1.msra.mxu0 0.0
    %1789 = vmatprep.subr.mxu0 0.0
    %1790 = vmatpush1.msra.mxu0 0.0
    %1791 = vmatprep.subr.mxu0 0.0
    %1792 = vmatpush1.msra.mxu0 0.0
    %1793 = vmatprep.subr.mxu0 0.0
    %1794 = vmatpush1.msra.mxu0 0.0
    %1795 = vmatprep.subr.mxu0 0.0
    %1796 = vmatpush1.msra.mxu0 0.0
    %1797 = vmatprep.subr.mxu0 0.0
    %1798 = vmatpush1.msra.mxu0 0.0
    %1799 = vmatprep.subr.mxu0 0.0
    %1800 = vmatpush1.msra.mxu0 0.0
    %1801 = vmatprep.subr.mxu0 0.0
    %1802 = vmatpush1.msra.mxu0 0.0
    %1803 = vmatprep.subr.mxu0 0.0
    %1804 = vmatpush1.msra.mxu0 0.0
    %1805 = vmatprep.subr.mxu0 0.0
    %1806 = vmatpush1.msra.mxu0 0.0
    %1807 = vmatprep.subr.mxu0 0.0
    %1808 = vmatpush1.msra.mxu0 0.0
    %1809 = vmatprep.mubr.f32.mxu0 0.0
    %1810 = vmatmul.mubr.f32.gmra.mrb[0].mxu0 %v1743
    %v1811 = vpop.f32.mrb[0].mxu0
    %v1812 = vadd.f32 0.0, %v1811
    %v1813 = vpop.f32.mrb[0].mxu0
    %1814 = vdwg.mxu0
    %v1815 = vsel %vm73, %v1607, 0.0
    %v1816 = vrot.slane %v1815, 4
    %v1817 = vadd.f32 %v1815, %v1816
    %v1818 = vrot.slane %v1817, 2
    %v1819 = vadd.f32 %v1817, %v1818
    %v1820 = vrot.slane %v1819, 1
    %v1821 = vadd.f32 %v1819, %v1820
    %v1822 = vmul.f32 %v1595, %v1821
    %v1824 = vsel %vm73, %v1822, 0
    %1826 = vmatprep.subr.mxu0 0.0
    %1827 = vmatpush1.msra.mxu0 %v17
    %1828 = vmatprep.subr.mxu0 0.0
    %1829 = vmatpush1.msra.mxu0 %v18
    %1830 = vmatprep.subr.mxu0 0.0
    %1831 = vmatpush1.msra.mxu0 %v19
    %1832 = vmatprep.subr.mxu0 0.0
    %1833 = vmatpush1.msra.mxu0 %v20
    %1834 = vmatprep.subr.mxu0 0.0
    %1835 = vmatpush1.msra.mxu0 0.0
    %1836 = vmatprep.subr.mxu0 0.0
    %1837 = vmatpush1.msra.mxu0 0.0
    %1838 = vmatprep.subr.mxu0 0.0
    %1839 = vmatpush1.msra.mxu0 0.0
    %1840 = vmatprep.subr.mxu0 0.0
    %1841 = vmatpush1.msra.mxu0 0.0
    %1842 = vmatprep.subr.mxu0 0.0
    %1843 = vmatpush1.msra.mxu0 0.0
    %1844 = vmatprep.subr.mxu0 0.0
    %1845 = vmatpush1.msra.mxu0 0.0
    %1846 = vmatprep.subr.mxu0 0.0
    %1847 = vmatpush1.msra.mxu0 0.0
    %1848 = vmatprep.subr.mxu0 0.0
    %1849 = vmatpush1.msra.mxu0 0.0
    %1850 = vmatprep.subr.mxu0 0.0
    %1851 = vmatpush1.msra.mxu0 0.0
    %1852 = vmatprep.subr.mxu0 0.0
    %1853 = vmatpush1.msra.mxu0 0.0
    %1854 = vmatprep.subr.mxu0 0.0
    %1855 = vmatpush1.msra.mxu0 0.0
    %1856 = vmatprep.subr.mxu0 0.0
    %1857 = vmatpush1.msra.mxu0 0.0
    %1858 = vmatprep.subr.mxu0 0.0
    %1859 = vmatpush1.msra.mxu0 0.0
    %1860 = vmatprep.subr.mxu0 0.0
    %1861 = vmatpush1.msra.mxu0 0.0
    %1862 = vmatprep.subr.mxu0 0.0
    %1863 = vmatpush1.msra.mxu0 0.0
    %1864 = vmatprep.subr.mxu0 0.0
    %1865 = vmatpush1.msra.mxu0 0.0
    %1866 = vmatprep.subr.mxu0 0.0
    %1867 = vmatpush1.msra.mxu0 0.0
    %1868 = vmatprep.subr.mxu0 0.0
    %1869 = vmatpush1.msra.mxu0 0.0
    %1870 = vmatprep.subr.mxu0 0.0
    %1871 = vmatpush1.msra.mxu0 0.0
    %1872 = vmatprep.subr.mxu0 0.0
    %1873 = vmatpush1.msra.mxu0 0.0
    %1874 = vmatprep.subr.mxu0 0.0
    %1875 = vmatpush1.msra.mxu0 0.0
    %1876 = vmatprep.subr.mxu0 0.0
    %1877 = vmatpush1.msra.mxu0 0.0
    %1878 = vmatprep.subr.mxu0 0.0
    %1879 = vmatpush1.msra.mxu0 0.0
    %1880 = vmatprep.subr.mxu0 0.0
    %1881 = vmatpush1.msra.mxu0 0.0
    %1882 = vmatprep.subr.mxu0 0.0
    %1883 = vmatpush1.msra.mxu0 0.0
    %1884 = vmatprep.subr.mxu0 0.0
    %1885 = vmatpush1.msra.mxu0 0.0
    %1886 = vmatprep.subr.mxu0 0.0
    %1887 = vmatpush1.msra.mxu0 0.0
    %1888 = vmatprep.subr.mxu0 0.0
    %1889 = vmatpush1.msra.mxu0 0.0
    %1890 = vmatprep.mubr.f32.mxu0 0.0
    %1891 = vmatmul.mubr.f32.gmra.mrb[0].mxu0 %v1824
    %v1892 = vpop.f32.mrb[0].mxu0
    %v1893 = vadd.f32 1e-06, %v1892
    %v1894 = vpop.f32.mrb[0].mxu0
    %1895 = vdwg.mxu0
    %v1896 = vrcp.pop %v1893
    %v1897 = vmul.f32 %v1812, %v1896
    %1898 = vst.msk [vmem:[#allocation2] sm:$0xff] %vm73, %v1897
    %1899 = vxpose.xlu0.b32.start [1/16] %v1608, 128
    %1900 = vxpose.xlu0.b32.cont [2/16] 0.0, 128
    %1901 = vxpose.xlu0.b32.cont [3/16] 0.0, 128
    %1902 = vxpose.xlu0.b32.cont [4/16] 0.0, 128
    %1903 = vxpose.xlu0.b32.cont [5/16] 0.0, 128
    %1904 = vxpose.xlu0.b32.cont [6/16] 0.0, 128
    %1905 = vxpose.xlu0.b32.cont [7/16] 0.0, 128
    %1906 = vxpose.xlu0.b32.cont [8/16] 0.0, 128
    %1907 = vxpose.xlu0.b32.cont [9/16] 0.0, 128
    %1908 = vxpose.xlu0.b32.cont [10/16] 0.0, 128
    %1909 = vxpose.xlu0.b32.cont [11/16] 0.0, 128
    %1910 = vxpose.xlu0.b32.cont [12/16] 0.0, 128
    %1911 = vxpose.xlu0.b32.cont [13/16] 0.0, 128
    %1912 = vxpose.xlu0.b32.cont [14/16] 0.0, 128
    %1913 = vxpose.xlu0.b32.cont [15/16] 0.0, 128
    %1914 = vxpose.xlu0.b32.end [16/16] 0.0, 128
    %v1915 = vpop.trf.xlu0
    %v1916 = vpop.trf.xlu0
    %v1917 = vpop.trf.xlu0
    %v1918 = vpop.trf.xlu0
    %v1919 = vpop.trf.xlu0
    %v1920 = vpop.trf.xlu0
    %v1921 = vpop.trf.xlu0
    %v1922 = vpop.trf.xlu0
    %v1923 = vpop.trf.xlu0
    %v1924 = vpop.trf.xlu0
    %v1925 = vpop.trf.xlu0
    %v1926 = vpop.trf.xlu0
    %v1927 = vpop.trf.xlu0
    %v1928 = vpop.trf.xlu0
    %v1929 = vpop.trf.xlu0
    %v1930 = vpop.trf.xlu0
    %v1932 = vsel %vm412, %v1915, 0
    %v1935 = vsel %vm412, %v1916, 0
    %v1938 = vsel %vm412, %v1917, 0
    %v1941 = vsel %vm412, %v1918, 0
    %1943 = vmatprep.subr.mxu0 0.0
    %1944 = vmatpush1.msra.mxu0 %v1582
    %1945 = vmatprep.subr.mxu0 0.0
    %1946 = vmatpush1.msra.mxu0 0.0
    %1947 = vmatprep.subr.mxu0 0.0
    %1948 = vmatpush1.msra.mxu0 0.0
    %1949 = vmatprep.subr.mxu0 0.0
    %1950 = vmatpush1.msra.mxu0 0.0
    %1951 = vmatprep.subr.mxu0 0.0
    %1952 = vmatpush1.msra.mxu0 0.0
    %1953 = vmatprep.subr.mxu0 0.0
    %1954 = vmatpush1.msra.mxu0 0.0
    %1955 = vmatprep.subr.mxu0 0.0
    %1956 = vmatpush1.msra.mxu0 0.0
    %1957 = vmatprep.subr.mxu0 0.0
    %1958 = vmatpush1.msra.mxu0 0.0
    %1959 = vmatprep.subr.mxu0 0.0
    %1960 = vmatpush1.msra.mxu0 0.0
    %1961 = vmatprep.subr.mxu0 0.0
    %1962 = vmatpush1.msra.mxu0 0.0
    %1963 = vmatprep.subr.mxu0 0.0
    %1964 = vmatpush1.msra.mxu0 0.0
    %1965 = vmatprep.subr.mxu0 0.0
    %1966 = vmatpush1.msra.mxu0 0.0
    %1967 = vmatprep.subr.mxu0 0.0
    %1968 = vmatpush1.msra.mxu0 0.0
    %1969 = vmatprep.subr.mxu0 0.0
    %1970 = vmatpush1.msra.mxu0 0.0
    %1971 = vmatprep.subr.mxu0 0.0
    %1972 = vmatpush1.msra.mxu0 0.0
    %1973 = vmatprep.subr.mxu0 0.0
    %1974 = vmatpush1.msra.mxu0 0.0
    %1975 = vmatprep.subr.mxu0 0.0
    %1976 = vmatpush1.msra.mxu0 0.0
    %1977 = vmatprep.subr.mxu0 0.0
    %1978 = vmatpush1.msra.mxu0 0.0
    %1979 = vmatprep.subr.mxu0 0.0
    %1980 = vmatpush1.msra.mxu0 0.0
    %1981 = vmatprep.subr.mxu0 0.0
    %1982 = vmatpush1.msra.mxu0 0.0
    %1983 = vmatprep.subr.mxu0 0.0
    %1984 = vmatpush1.msra.mxu0 0.0
    %1985 = vmatprep.subr.mxu0 0.0
    %1986 = vmatpush1.msra.mxu0 0.0
    %1987 = vmatprep.subr.mxu0 0.0
    %1988 = vmatpush1.msra.mxu0 0.0
    %1989 = vmatprep.subr.mxu0 0.0
    %1990 = vmatpush1.msra.mxu0 0.0
    %1991 = vmatprep.subr.mxu0 0.0
    %1992 = vmatpush1.msra.mxu0 0.0
    %1993 = vmatprep.subr.mxu0 0.0
    %1994 = vmatpush1.msra.mxu0 0.0
    %1995 = vmatprep.subr.mxu0 0.0
    %1996 = vmatpush1.msra.mxu0 0.0
    %1997 = vmatprep.subr.mxu0 0.0
    %1998 = vmatpush1.msra.mxu0 0.0
    %1999 = vmatprep.subr.mxu0 0.0
    %2000 = vmatpush1.msra.mxu0 0.0
    %2001 = vmatprep.subr.mxu0 0.0
    %2002 = vmatpush1.msra.mxu0 0.0
    %2003 = vmatprep.subr.mxu0 0.0
    %2004 = vmatpush1.msra.mxu0 0.0
    %2005 = vmatprep.subr.mxu0 0.0
    %2006 = vmatpush1.msra.mxu0 0.0
    %2007 = vmatprep.mubr.f32.mxu0 0.0
    %2008 = vmatmul.mubr.f32.gmra.mrb[0].mxu0 %v1932
    %v2009 = vpop.f32.mrb[0].mxu0
    %v2010 = vadd.f32 0.0, %v2009
    %v2011 = vpop.f32.mrb[0].mxu0
    %2012 = vmatprep.mubr.f32.mxu0 0.0
    %2013 = vmatmul.mubr.f32.gmra.mrb[0].mxu0 %v1935
    %v2014 = vpop.f32.mrb[0].mxu0
    %v2015 = vadd.f32 0.0, %v2014
    %v2016 = vpop.f32.mrb[0].mxu0
    %2017 = vmatprep.mubr.f32.mxu0 0.0
    %2018 = vmatmul.mubr.f32.gmra.mrb[0].mxu0 %v1938
    %v2019 = vpop.f32.mrb[0].mxu0
    %v2020 = vadd.f32 0.0, %v2019
    %v2021 = vpop.f32.mrb[0].mxu0
    %2022 = vmatprep.mubr.f32.mxu0 0.0
    %2023 = vmatmul.mubr.f32.gmra.mrb[0].mxu0 %v1941
    %v2024 = vpop.f32.mrb[0].mxu0
    %v2025 = vadd.f32 0.0, %v2024
    %v2026 = vpop.f32.mrb[0].mxu0
    %2027 = vdwg.mxu0
    %v2028 = vmul.f32 %v2010, %v17
    %v2029 = vmul.f32 %v2015, %v18
    %v2030 = vmul.f32 %v2020, %v19
    %v2031 = vmul.f32 %v2025, %v20
    %v2033 = vsel %vm73, %v1596, 0
    %2035 = vmatprep.subr.mxu0 0.0
    %2036 = vmatpush1.msra.mxu0 %v2028
    %2037 = vmatprep.subr.mxu0 0.0
    %2038 = vmatpush1.msra.mxu0 %v2029
    %2039 = vmatprep.subr.mxu0 0.0
    %2040 = vmatpush1.msra.mxu0 %v2030
    %2041 = vmatprep.subr.mxu0 0.0
    %2042 = vmatpush1.msra.mxu0 %v2031
    %2043 = vmatprep.subr.mxu0 0.0
    %2044 = vmatpush1.msra.mxu0 0.0
    %2045 = vmatprep.subr.mxu0 0.0
    %2046 = vmatpush1.msra.mxu0 0.0
    %2047 = vmatprep.subr.mxu0 0.0
    %2048 = vmatpush1.msra.mxu0 0.0
    %2049 = vmatprep.subr.mxu0 0.0
    %2050 = vmatpush1.msra.mxu0 0.0
    %2051 = vmatprep.subr.mxu0 0.0
    %2052 = vmatpush1.msra.mxu0 0.0
    %2053 = vmatprep.subr.mxu0 0.0
    %2054 = vmatpush1.msra.mxu0 0.0
    %2055 = vmatprep.subr.mxu0 0.0
    %2056 = vmatpush1.msra.mxu0 0.0
    %2057 = vmatprep.subr.mxu0 0.0
    %2058 = vmatpush1.msra.mxu0 0.0
    %2059 = vmatprep.subr.mxu0 0.0
    %2060 = vmatpush1.msra.mxu0 0.0
    %2061 = vmatprep.subr.mxu0 0.0
    %2062 = vmatpush1.msra.mxu0 0.0
    %2063 = vmatprep.subr.mxu0 0.0
    %2064 = vmatpush1.msra.mxu0 0.0
    %2065 = vmatprep.subr.mxu0 0.0
    %2066 = vmatpush1.msra.mxu0 0.0
    %2067 = vmatprep.subr.mxu0 0.0
    %2068 = vmatpush1.msra.mxu0 0.0
    %2069 = vmatprep.subr.mxu0 0.0
    %2070 = vmatpush1.msra.mxu0 0.0
    %2071 = vmatprep.subr.mxu0 0.0
    %2072 = vmatpush1.msra.mxu0 0.0
    %2073 = vmatprep.subr.mxu0 0.0
    %2074 = vmatpush1.msra.mxu0 0.0
    %2075 = vmatprep.subr.mxu0 0.0
    %2076 = vmatpush1.msra.mxu0 0.0
    %2077 = vmatprep.subr.mxu0 0.0
    %2078 = vmatpush1.msra.mxu0 0.0
    %2079 = vmatprep.subr.mxu0 0.0
    %2080 = vmatpush1.msra.mxu0 0.0
    %2081 = vmatprep.subr.mxu0 0.0
    %2082 = vmatpush1.msra.mxu0 0.0
    %2083 = vmatprep.subr.mxu0 0.0
    %2084 = vmatpush1.msra.mxu0 0.0
    %2085 = vmatprep.subr.mxu0 0.0
    %2086 = vmatpush1.msra.mxu0 0.0
    %2087 = vmatprep.subr.mxu0 0.0
    %2088 = vmatpush1.msra.mxu0 0.0
    %2089 = vmatprep.subr.mxu0 0.0
    %2090 = vmatpush1.msra.mxu0 0.0
    %2091 = vmatprep.subr.mxu0 0.0
    %2092 = vmatpush1.msra.mxu0 0.0
    %2093 = vmatprep.subr.mxu0 0.0
    %2094 = vmatpush1.msra.mxu0 0.0
    %2095 = vmatprep.subr.mxu0 0.0
    %2096 = vmatpush1.msra.mxu0 0.0
    %2097 = vmatprep.subr.mxu0 0.0
    %2098 = vmatpush1.msra.mxu0 0.0
    %2099 = vmatprep.mubr.f32.mxu0 0.0
    %2100 = vmatmul.mubr.f32.gmra.mrb[0].mxu0 %v2033
    %v2101 = vpop.f32.mrb[0].mxu0
    %v2102 = vadd.f32 0.0, %v2101
    %v2103 = vpop.f32.mrb[0].mxu0
    %2104 = vdwg.mxu0
    %v2105 = vsel %vm73, %v1608, 0.0
    %v2106 = vrot.slane %v2105, 4
    %v2107 = vadd.f32 %v2105, %v2106
    %v2108 = vrot.slane %v2107, 2
    %v2109 = vadd.f32 %v2107, %v2108
    %v2110 = vrot.slane %v2109, 1
    %v2111 = vadd.f32 %v2109, %v2110
    %v2112 = vmul.f32 %v1596, %v2111
    %v2114 = vsel %vm73, %v2112, 0
    %2116 = vmatprep.subr.mxu0 0.0
    %2117 = vmatpush1.msra.mxu0 %v17
    %2118 = vmatprep.subr.mxu0 0.0
    %2119 = vmatpush1.msra.mxu0 %v18
    %2120 = vmatprep.subr.mxu0 0.0
    %2121 = vmatpush1.msra.mxu0 %v19
    %2122 = vmatprep.subr.mxu0 0.0
    %2123 = vmatpush1.msra.mxu0 %v20
    %2124 = vmatprep.subr.mxu0 0.0
    %2125 = vmatpush1.msra.mxu0 0.0
    %2126 = vmatprep.subr.mxu0 0.0
    %2127 = vmatpush1.msra.mxu0 0.0
    %2128 = vmatprep.subr.mxu0 0.0
    %2129 = vmatpush1.msra.mxu0 0.0
    %2130 = vmatprep.subr.mxu0 0.0
    %2131 = vmatpush1.msra.mxu0 0.0
    %2132 = vmatprep.subr.mxu0 0.0
    %2133 = vmatpush1.msra.mxu0 0.0
    %2134 = vmatprep.subr.mxu0 0.0
    %2135 = vmatpush1.msra.mxu0 0.0
    %2136 = vmatprep.subr.mxu0 0.0
    %2137 = vmatpush1.msra.mxu0 0.0
    %2138 = vmatprep.subr.mxu0 0.0
    %2139 = vmatpush1.msra.mxu0 0.0
    %2140 = vmatprep.subr.mxu0 0.0
    %2141 = vmatpush1.msra.mxu0 0.0
    %2142 = vmatprep.subr.mxu0 0.0
    %2143 = vmatpush1.msra.mxu0 0.0
    %2144 = vmatprep.subr.mxu0 0.0
    %2145 = vmatpush1.msra.mxu0 0.0
    %2146 = vmatprep.subr.mxu0 0.0
    %2147 = vmatpush1.msra.mxu0 0.0
    %2148 = vmatprep.subr.mxu0 0.0
    %2149 = vmatpush1.msra.mxu0 0.0
    %2150 = vmatprep.subr.mxu0 0.0
    %2151 = vmatpush1.msra.mxu0 0.0
    %2152 = vmatprep.subr.mxu0 0.0
    %2153 = vmatpush1.msra.mxu0 0.0
    %2154 = vmatprep.subr.mxu0 0.0
    %2155 = vmatpush1.msra.mxu0 0.0
    %2156 = vmatprep.subr.mxu0 0.0
    %2157 = vmatpush1.msra.mxu0 0.0
    %2158 = vmatprep.subr.mxu0 0.0
    %2159 = vmatpush1.msra.mxu0 0.0
    %2160 = vmatprep.subr.mxu0 0.0
    %2161 = vmatpush1.msra.mxu0 0.0
    %2162 = vmatprep.subr.mxu0 0.0
    %2163 = vmatpush1.msra.mxu0 0.0
    %2164 = vmatprep.subr.mxu0 0.0
    %2165 = vmatpush1.msra.mxu0 0.0
    %2166 = vmatprep.subr.mxu0 0.0
    %2167 = vmatpush1.msra.mxu0 0.0
    %2168 = vmatprep.subr.mxu0 0.0
    %2169 = vmatpush1.msra.mxu0 0.0
    %2170 = vmatprep.subr.mxu0 0.0
    %2171 = vmatpush1.msra.mxu0 0.0
    %2172 = vmatprep.subr.mxu0 0.0
    %2173 = vmatpush1.msra.mxu0 0.0
    %2174 = vmatprep.subr.mxu0 0.0
    %2175 = vmatpush1.msra.mxu0 0.0
    %2176 = vmatprep.subr.mxu0 0.0
    %2177 = vmatpush1.msra.mxu0 0.0
    %2178 = vmatprep.subr.mxu0 0.0
    %2179 = vmatpush1.msra.mxu0 0.0
    %2180 = vmatprep.mubr.f32.mxu0 0.0
    %2181 = vmatmul.mubr.f32.gmra.mrb[0].mxu0 %v2114
    %v2182 = vpop.f32.mrb[0].mxu0
    %v2183 = vadd.f32 1e-06, %v2182
    %v2184 = vpop.f32.mrb[0].mxu0
    %2185 = vdwg.mxu0
    %v2186 = vrcp.pop %v2183
    %v2187 = vmul.f32 %v2102, %v2186
    %2188 = vst.msk [vmem:[#allocation2 + $0x8] sm:$0xff] %vm73, %v2187
    %v2189 = vld [vmem:[#allocation2] sm:$0xff]
    %v2190 = vld [vmem:[#allocation2 + $0x8] sm:$0xff]
    %v2191 = vlaneseq
    %v2192 = vshrl.u32 %v2191, 7
    %v2193 = vsub.s32 0, %v2192
    %v2194 = vrot.slane %v1297, %v2193
    %v2196 = vsel %vm73, %v2189, 0
    %v2199 = vsel %vm73, %v2190, 0
    %2201 = vmatprep.subr.mxu0 0.0
    %2202 = vmatpush1.msra.mxu0 %v1270
    %2203 = vmatprep.subr.mxu0 0.0
    %2204 = vmatpush1.msra.mxu0 %v1271
    %2205 = vmatprep.subr.mxu0 0.0
    %2206 = vmatpush1.msra.mxu0 %v1272
    %2207 = vmatprep.subr.mxu0 0.0
    %2208 = vmatpush1.msra.mxu0 %v1273
    %2209 = vmatprep.subr.mxu0 0.0
    %2210 = vmatpush1.msra.mxu0 0.0
    %2211 = vmatprep.subr.mxu0 0.0
    %2212 = vmatpush1.msra.mxu0 0.0
    %2213 = vmatprep.subr.mxu0 0.0
    %2214 = vmatpush1.msra.mxu0 0.0
    %2215 = vmatprep.subr.mxu0 0.0
    %2216 = vmatpush1.msra.mxu0 0.0
    %2217 = vmatprep.subr.mxu0 0.0
    %2218 = vmatpush1.msra.mxu0 0.0
    %2219 = vmatprep.subr.mxu0 0.0
    %2220 = vmatpush1.msra.mxu0 0.0
    %2221 = vmatprep.subr.mxu0 0.0
    %2222 = vmatpush1.msra.mxu0 0.0
    %2223 = vmatprep.subr.mxu0 0.0
    %2224 = vmatpush1.msra.mxu0 0.0
    %2225 = vmatprep.subr.mxu0 0.0
    %2226 = vmatpush1.msra.mxu0 0.0
    %2227 = vmatprep.subr.mxu0 0.0
    %2228 = vmatpush1.msra.mxu0 0.0
    %2229 = vmatprep.subr.mxu0 0.0
    %2230 = vmatpush1.msra.mxu0 0.0
    %2231 = vmatprep.subr.mxu0 0.0
    %2232 = vmatpush1.msra.mxu0 0.0
    %2233 = vmatprep.subr.mxu0 0.0
    %2234 = vmatpush1.msra.mxu0 0.0
    %2235 = vmatprep.subr.mxu0 0.0
    %2236 = vmatpush1.msra.mxu0 0.0
    %2237 = vmatprep.subr.mxu0 0.0
    %2238 = vmatpush1.msra.mxu0 0.0
    %2239 = vmatprep.subr.mxu0 0.0
    %2240 = vmatpush1.msra.mxu0 0.0
    %2241 = vmatprep.subr.mxu0 0.0
    %2242 = vmatpush1.msra.mxu0 0.0
    %2243 = vmatprep.subr.mxu0 0.0
    %2244 = vmatpush1.msra.mxu0 0.0
    %2245 = vmatprep.subr.mxu0 0.0
    %2246 = vmatpush1.msra.mxu0 0.0
    %2247 = vmatprep.subr.mxu0 0.0
    %2248 = vmatpush1.msra.mxu0 0.0
    %2249 = vmatprep.subr.mxu0 0.0
    %2250 = vmatpush1.msra.mxu0 0.0
    %2251 = vmatprep.subr.mxu0 0.0
    %2252 = vmatpush1.msra.mxu0 0.0
    %2253 = vmatprep.subr.mxu0 0.0
    %2254 = vmatpush1.msra.mxu0 0.0
    %2255 = vmatprep.subr.mxu0 0.0
    %2256 = vmatpush1.msra.mxu0 0.0
    %2257 = vmatprep.subr.mxu0 0.0
    %2258 = vmatpush1.msra.mxu0 0.0
    %2259 = vmatprep.subr.mxu0 0.0
    %2260 = vmatpush1.msra.mxu0 0.0
    %2261 = vmatprep.subr.mxu0 0.0
    %2262 = vmatpush1.msra.mxu0 0.0
    %2263 = vmatprep.subr.mxu0 0.0
    %2264 = vmatpush1.msra.mxu0 0.0
    %2265 = vmatprep.mubr.f32.mxu0 0.0
    %2266 = vmatmul.mubr.f32.gmra.mrb[0].mxu0 %v2196
    %v2267 = vpop.f32.mrb[0].mxu0
    %v2268 = vadd.f32 %v2194, %v2267
    %v2269 = vpop.f32.mrb[0].mxu0
    %2270 = vmatprep.mubr.f32.mxu0 0.0
    %2271 = vmatmul.mubr.f32.gmra.mrb[0].mxu0 %v2199
    %v2272 = vpop.f32.mrb[0].mxu0
    %v2273 = vadd.f32 %v2194, %v2272
    %v2274 = vpop.f32.mrb[0].mxu0
    %2275 = vdwg.mxu0
    %v2276 = vadd.f32 %v1256, %v2268
    %v2277 = vadd.f32 %v1257, %v2273
    %v2278 = vsel %vm73, %v2276, 0.0
    %2279 = vadd.xlane.f32.xlu0 %v2278
    %v2280 = vpop.xlane.xlu0 %2279
    %v2281 = vsel %vm73, %v2277, 0.0
    %2282 = vadd.xlane.f32.xlu0 %v2281
    %v2283 = vpop.xlane.xlu0 %2282
    %v2284 = vmul.f32 %v2280, %v80
    %v2285 = vmul.f32 %v2283, %v80
    %v2286 = vsub.f32 %v2276, %v2284
    %v2287 = vsub.f32 %v2277, %v2285
    %v2288 = vmul.f32 %v2286, %v2286
    %v2289 = vmul.f32 %v2287, %v2287
    %v2290 = vsel %vm73, %v2288, 0.0
    %2291 = vadd.xlane.f32.xlu0 %v2290
    %v2292 = vpop.xlane.xlu0 %2291
    %v2293 = vsel %vm73, %v2289, 0.0
    %2294 = vadd.xlane.f32.xlu0 %v2293
    %v2295 = vpop.xlane.xlu0 %2294
    %v2296 = vmul.f32 %v2292, %v80
    %v2297 = vmul.f32 %v2295, %v80
    %v2298 = vadd.f32 %v2296, 1e-05
    %v2299 = vadd.f32 %v2297, 1e-05
    %v2300 = vrsqrt.pop %v2298
    %v2301 = vrsqrt.pop %v2299
    %v2302 = vmul.f32 %v2286, %v2300
    %v2303 = vmul.f32 %v2287, %v2301
    %v2304 = vlaneseq
    %v2305 = vshrl.u32 %v2304, 7
    %v2306 = vsub.s32 0, %v2305
    %v2307 = vrot.slane %v1292, %v2306
    %v2308 = vmul.f32 %v2302, %v2307
    %v2309 = vmul.f32 %v2303, %v2307
    %v2310 = vlaneseq
    %v2311 = vshrl.u32 %v2310, 7
    %v2312 = vsub.s32 0, %v2311
    %v2313 = vrot.slane %v1293, %v2312
    %v2314 = vadd.f32 %v2308, %v2313
    %v2315 = vadd.f32 %v2309, %v2313
    %v2316 = vlaneseq
    %v2317 = vshrl.u32 %v2316, 7
    %v2318 = vsub.s32 0, %v2317
    %v2319 = vrot.slane %v1303, %v2318
    %v2321 = vsel %vm73, %v2314, 0
    %v2324 = vsel %vm73, %v2315, 0
    %2326 = vmatprep.subr.mxu0 0.0
    %2327 = vmatpush1.msra.mxu0 %v1299
    %2328 = vmatprep.subr.mxu0 0.0
    %2329 = vmatpush1.msra.mxu0 %v1300
    %2330 = vmatprep.subr.mxu0 0.0
    %2331 = vmatpush1.msra.mxu0 %v1301
    %2332 = vmatprep.subr.mxu0 0.0
    %2333 = vmatpush1.msra.mxu0 %v1302
    %2334 = vmatprep.subr.mxu0 0.0
    %2335 = vmatpush1.msra.mxu0 0.0
    %2336 = vmatprep.subr.mxu0 0.0
    %2337 = vmatpush1.msra.mxu0 0.0
    %2338 = vmatprep.subr.mxu0 0.0
    %2339 = vmatpush1.msra.mxu0 0.0
    %2340 = vmatprep.subr.mxu0 0.0
    %2341 = vmatpush1.msra.mxu0 0.0
    %2342 = vmatprep.subr.mxu0 0.0
    %2343 = vmatpush1.msra.mxu0 0.0
    %2344 = vmatprep.subr.mxu0 0.0
    %2345 = vmatpush1.msra.mxu0 0.0
    %2346 = vmatprep.subr.mxu0 0.0
    %2347 = vmatpush1.msra.mxu0 0.0
    %2348 = vmatprep.subr.mxu0 0.0
    %2349 = vmatpush1.msra.mxu0 0.0
    %2350 = vmatprep.subr.mxu0 0.0
    %2351 = vmatpush1.msra.mxu0 0.0
    %2352 = vmatprep.subr.mxu0 0.0
    %2353 = vmatpush1.msra.mxu0 0.0
    %2354 = vmatprep.subr.mxu0 0.0
    %2355 = vmatpush1.msra.mxu0 0.0
    %2356 = vmatprep.subr.mxu0 0.0
    %2357 = vmatpush1.msra.mxu0 0.0
    %2358 = vmatprep.subr.mxu0 0.0
    %2359 = vmatpush1.msra.mxu0 0.0
    %2360 = vmatprep.subr.mxu0 0.0
    %2361 = vmatpush1.msra.mxu0 0.0
    %2362 = vmatprep.subr.mxu0 0.0
    %2363 = vmatpush1.msra.mxu0 0.0
    %2364 = vmatprep.subr.mxu0 0.0
    %2365 = vmatpush1.msra.mxu0 0.0
    %2366 = vmatprep.subr.mxu0 0.0
    %2367 = vmatpush1.msra.mxu0 0.0
    %2368 = vmatprep.subr.mxu0 0.0
    %2369 = vmatpush1.msra.mxu0 0.0
    %2370 = vmatprep.subr.mxu0 0.0
    %2371 = vmatpush1.msra.mxu0 0.0
    %2372 = vmatprep.subr.mxu0 0.0
    %2373 = vmatpush1.msra.mxu0 0.0
    %2374 = vmatprep.subr.mxu0 0.0
    %2375 = vmatpush1.msra.mxu0 0.0
    %2376 = vmatprep.subr.mxu0 0.0
    %2377 = vmatpush1.msra.mxu0 0.0
    %2378 = vmatprep.subr.mxu0 0.0
    %2379 = vmatpush1.msra.mxu0 0.0
    %2380 = vmatprep.subr.mxu0 0.0
    %2381 = vmatpush1.msra.mxu0 0.0
    %2382 = vmatprep.subr.mxu0 0.0
    %2383 = vmatpush1.msra.mxu0 0.0
    %2384 = vmatprep.subr.mxu0 0.0
    %2385 = vmatpush1.msra.mxu0 0.0
    %2386 = vmatprep.subr.mxu0 0.0
    %2387 = vmatpush1.msra.mxu0 0.0
    %2388 = vmatprep.subr.mxu0 0.0
    %2389 = vmatpush1.msra.mxu0 0.0
    %2390 = vmatprep.mubr.f32.mxu0 0.0
    %2391 = vmatmul.mubr.f32.gmra.mrb[0].mxu0 %v2321
    %v2392 = vpop.f32.mrb[0].mxu0
    %v2393 = vadd.f32 %v2319, %v2392
    %v2394 = vpop.f32.mrb[0].mxu0
    %2395 = vmatprep.mubr.f32.mxu0 0.0
    %2396 = vmatmul.mubr.f32.gmra.mrb[0].mxu0 %v2324
    %v2397 = vpop.f32.mrb[0].mxu0
    %v2398 = vadd.f32 %v2319, %v2397
    %v2399 = vpop.f32.mrb[0].mxu0
    %2400 = vdwg.mxu0
    %v2401 = vmax.f32 %v2393, 0.0
    %v2402 = vmax.f32 %v2398, 0.0
    %2403 = vmatprep.subr.mxu0 0.0
    %2404 = vmatpush1.msra.mxu0 %v1274
    %2405 = vmatprep.subr.mxu0 0.0
    %2406 = vmatpush1.msra.mxu0 %v1275
    %2407 = vmatprep.subr.mxu0 0.0
    %2408 = vmatpush1.msra.mxu0 %v1276
    %2409 = vmatprep.subr.mxu0 0.0
    %2410 = vmatpush1.msra.mxu0 %v1277
    %2411 = vmatprep.subr.mxu0 0.0
    %2412 = vmatpush1.msra.mxu0 %v1278
    %2413 = vmatprep.subr.mxu0 0.0
    %2414 = vmatpush1.msra.mxu0 %v1279
    %2415 = vmatprep.subr.mxu0 0.0
    %2416 = vmatpush1.msra.mxu0 %v1280
    %2417 = vmatprep.subr.mxu0 0.0
    %2418 = vmatpush1.msra.mxu0 %v1281
    %2419 = vmatprep.subr.mxu0 0.0
    %2420 = vmatpush1.msra.mxu0 %v1282
    %2421 = vmatprep.subr.mxu0 0.0
    %2422 = vmatpush1.msra.mxu0 %v1283
    %2423 = vmatprep.subr.mxu0 0.0
    %2424 = vmatpush1.msra.mxu0 %v1284
    %2425 = vmatprep.subr.mxu0 0.0
    %2426 = vmatpush1.msra.mxu0 %v1285
    %2427 = vmatprep.subr.mxu0 0.0
    %2428 = vmatpush1.msra.mxu0 %v1286
    %2429 = vmatprep.subr.mxu0 0.0
    %2430 = vmatpush1.msra.mxu0 %v1287
    %2431 = vmatprep.subr.mxu0 0.0
    %2432 = vmatpush1.msra.mxu0 %v1288
    %2433 = vmatprep.subr.mxu0 0.0
    %2434 = vmatpush1.msra.mxu0 %v1289
    %2435 = vmatprep.subr.mxu0 0.0
    %2436 = vmatpush1.msra.mxu0 0.0
    %2437 = vmatprep.subr.mxu0 0.0
    %2438 = vmatpush1.msra.mxu0 0.0
    %2439 = vmatprep.subr.mxu0 0.0
    %2440 = vmatpush1.msra.mxu0 0.0
    %2441 = vmatprep.subr.mxu0 0.0
    %2442 = vmatpush1.msra.mxu0 0.0
    %2443 = vmatprep.subr.mxu0 0.0
    %2444 = vmatpush1.msra.mxu0 0.0
    %2445 = vmatprep.subr.mxu0 0.0
    %2446 = vmatpush1.msra.mxu0 0.0
    %2447 = vmatprep.subr.mxu0 0.0
    %2448 = vmatpush1.msra.mxu0 0.0
    %2449 = vmatprep.subr.mxu0 0.0
    %2450 = vmatpush1.msra.mxu0 0.0
    %2451 = vmatprep.subr.mxu0 0.0
    %2452 = vmatpush1.msra.mxu0 0.0
    %2453 = vmatprep.subr.mxu0 0.0
    %2454 = vmatpush1.msra.mxu0 0.0
    %2455 = vmatprep.subr.mxu0 0.0
    %2456 = vmatpush1.msra.mxu0 0.0
    %2457 = vmatprep.subr.mxu0 0.0
    %2458 = vmatpush1.msra.mxu0 0.0
    %2459 = vmatprep.subr.mxu0 0.0
    %2460 = vmatpush1.msra.mxu0 0.0
    %2461 = vmatprep.subr.mxu0 0.0
    %2462 = vmatpush1.msra.mxu0 0.0
    %2463 = vmatprep.subr.mxu0 0.0
    %2464 = vmatpush1.msra.mxu0 0.0
    %2465 = vmatprep.subr.mxu0 0.0
    %2466 = vmatpush1.msra.mxu0 0.0
    %2467 = vmatprep.mubr.f32.mxu0 0.0
    %2468 = vmatmul.mubr.f32.gmra.mrb[0].mxu0 %v2401
    %v2469 = vpop.f32.mrb[0].mxu0
    %v2470 = vadd.f32 0.0, %v2469
    %v2471 = vpop.f32.mrb[0].mxu0
    %2472 = vmatprep.mubr.f32.mxu0 0.0
    %2473 = vmatmul.mubr.f32.gmra.mrb[0].mxu0 %v2402
    %v2474 = vpop.f32.mrb[0].mxu0
    %v2475 = vadd.f32 0.0, %v2474
    %v2476 = vpop.f32.mrb[0].mxu0
    %2477 = vdwg.mxu0
    %v2478 = vadd.f32 %v2276, %v2470
    %v2479 = vadd.f32 %v2277, %v2475
    %v2480 = vlaneseq
    %v2481 = vshrl.u32 %v2480, 7
    %v2482 = vsub.s32 0, %v2481
    %v2483 = vrot.slane %v1298, %v2482
    %v2484 = vadd.f32 %v2478, %v2483
    %v2485 = vadd.f32 %v2479, %v2483
    %v2486 = vld [vmem:[%s1 + $0x230] sm:$0x1]
    %v2487 = vld [vmem:[%s1 + $0x231] sm:$0x1]
    %v2488 = vsel %vm73, %v2484, 0.0
    %2489 = vadd.xlane.f32.xlu0 %v2488
    %v2490 = vpop.xlane.xlu0 %2489
    %v2491 = vsel %vm73, %v2485, 0.0
    %2492 = vadd.xlane.f32.xlu0 %v2491
    %v2493 = vpop.xlane.xlu0 %2492
    %v2494 = vmul.f32 %v2490, %v80
    %v2495 = vmul.f32 %v2493, %v80
    %v2496 = vsub.f32 %v2484, %v2494
    %v2497 = vsub.f32 %v2485, %v2495
    %v2498 = vmul.f32 %v2496, %v2496
    %v2499 = vmul.f32 %v2497, %v2497
    %v2500 = vsel %vm73, %v2498, 0.0
    %2501 = vadd.xlane.f32.xlu0 %v2500
    %v2502 = vpop.xlane.xlu0 %2501
    %v2503 = vsel %vm73, %v2499, 0.0
    %2504 = vadd.xlane.f32.xlu0 %v2503
    %v2505 = vpop.xlane.xlu0 %2504
    %v2506 = vmul.f32 %v2502, %v80
    %v2507 = vmul.f32 %v2505, %v80
    %v2508 = vadd.f32 %v2506, 1e-05
    %v2509 = vadd.f32 %v2507, 1e-05
    %v2510 = vrsqrt.pop %v2508
    %v2511 = vrsqrt.pop %v2509
    %v2512 = vmul.f32 %v2496, %v2510
    %v2513 = vmul.f32 %v2497, %v2511
    %v2514 = vlaneseq
    %v2515 = vshrl.u32 %v2514, 7
    %v2516 = vsub.s32 0, %v2515
    %v2517 = vrot.slane %v2486, %v2516
    %v2518 = vmul.f32 %v2512, %v2517
    %v2519 = vmul.f32 %v2513, %v2517
    %v2520 = vlaneseq
    %v2521 = vshrl.u32 %v2520, 7
    %v2522 = vsub.s32 0, %v2521
    %v2523 = vrot.slane %v2487, %v2522
    %v2524 = vadd.f32 %v2518, %v2523
    %v2525 = vadd.f32 %v2519, %v2523
    %2526 = vst.msk [vmem:[#allocation3] sm:$0xff] %vm73, %v2524
    %2527 = vst.msk [vmem:[#allocation3 + $0x8] sm:$0xff] %vm73, %v2525
    // Predicated region
    $region14: #{tpu_custom_call.1} parent=1 // pred_check
      _
    $region15: #{tpu_custom_call.1} parent=1 // pred_check_branch
      %2529 = sbr.rel (0) target = $region17
    $region16: #{tpu_custom_call.1} parent=1 // pred_region
      %s2531 = ssub.s32 256, 256
      %2532 = vsyncadd [#allocation4], %s2531
      %s2533 = sshll.u32 [#allocation3], 4
      %s2534 = int_to_ptr.vmem [resolvable:$true] %s2533
      %2539 = dma.vmem_to_hbm [thread:$0]  %s2534, 256, %s3, [#allocation4], 128, 128, 8
    $region17: #{tpu_custom_call.1} parent=1 // pred_fallthru
      _
    // Predicated region
    $region18: #{tpu_custom_call.1} parent=1 // pred_check
      _
    $region19: #{tpu_custom_call.1} parent=1 // pred_check_branch
      %2541 = sbr.rel (0) target = $region21
    $region20: #{tpu_custom_call.1} parent=1 // pred_region
      %2542 = dma.done [#allocation4], 256
    $region21: #{tpu_custom_call.1} parent=1 // pred_fallthru
      _
    %2543 = vsyncpa [#allocation4], 1

</llo_original>
